<compile_context>
chip_gen: v6e
topology: v6e:2x2x1
jax: 0.10.0
libtpu: 0.0.40
codegen_flags: <defaults>
</compile_context>

<pallas_src>
import functools

import jax
import jax.numpy as jnp
import numpy as np
from jax import lax
from jax.experimental import pallas as pl
from jax.experimental.pallas import tpu as pltpu

_BN_EPS = 1e-5


# ----------------------------------------------------------------------------
# In-kernel helpers
# ----------------------------------------------------------------------------
def _dw3x3(src_ref, w_ref, *, d, ho, wo):
    """3x3 depthwise conv (stride 1, dilation d) read from a zero-padded
    VMEM scratch ref.  src_ref: (Hp, Wp, C), w_ref: (9, C)."""
    c = src_ref.shape[-1]
    acc = jnp.zeros((ho, wo, c), jnp.float32)
    for k in range(9):
        kh, kw = divmod(k, 3)
        tap = src_ref[kh * d:kh * d + ho, kw * d:kw * d + wo, :]
        acc = acc + tap * w_ref[k, :]
    return acc


def _subsample_hw(x, stride):
    """x[::stride, ::stride, :] built only from unit-stride static slices and
    concatenates (robust Mosaic lowering; stays entirely in VMEM/vregs)."""
    if stride == 1:
        return x
    h, w, _ = x.shape
    ho = (h - 1) // stride + 1
    wo = (w - 1) // stride + 1
    x = jnp.concatenate([x[i * stride:i * stride + 1] for i in range(ho)], axis=0)
    x = jnp.concatenate([x[:, j * stride:j * stride + 1, :] for j in range(wo)],
                        axis=1)
    return x


# ----------------------------------------------------------------------------
# Fused Block3 kernel (one batch image per grid step)
# ----------------------------------------------------------------------------
def _block3_kernel(x_ref, dw1_ref, w1_ref, c1_ref, dw2_ref, w2_ref, c2_ref,
                   dw3_ref, w3_ref, wsk_ref, co_ref,
                   o_ref, pad_in_ref, pad_mid_ref,
                   *, d, stride, H, W, Ho, Wo, Cin, Cp):
    # Zero the padded scratch buffers; the zero border implements fixed_padding.
    pad_in_ref[...] = jnp.zeros_like(pad_in_ref)
    pad_mid_ref[...] = jnp.zeros_like(pad_mid_ref)

    # relu(inp) written into the interior of the padded buffer
    # (relu(pad(x)) == pad(relu(x)) since relu(0) == 0).
    x = x_ref[...].astype(jnp.float32)                              # (H, W, Cin)
    pad_in_ref[d:d + H, d:d + W, :] = jnp.maximum(x, 0.0)

    # --- SeparableConv2d1 (bn_sep1, bn1 folded into weights/bias) + relu ---
    a1 = _dw3x3(pad_in_ref, dw1_ref, d=d, ho=H, wo=W)               # (H, W, Cin)
    z1 = jnp.dot(a1.reshape(H * W, Cin), w1_ref[...],
                 preferred_element_type=jnp.float32) + c1_ref[0, :]
    z1 = jnp.maximum(z1, 0.0)                                       # (H*W, Cp)

    # --- SeparableConv2d2 (bn_sep2, bn2 folded) + relu ---
    pad_mid_ref[d:d + H, d:d + W, :] = z1.reshape(H, W, Cp)
    a2 = _dw3x3(pad_mid_ref, dw2_ref, d=d, ho=H, wo=W)              # (H, W, Cp)
    z2 = jnp.dot(a2.reshape(H * W, Cp), w2_ref[...],
                 preferred_element_type=jnp.float32) + c2_ref[0, :]
    z2 = jnp.maximum(z2, 0.0)

    # --- SeparableConv2d3 (bn_sep3, bn3 folded), stride `stride` ---
    pad_mid_ref[d:d + H, d:d + W, :] = z2.reshape(H, W, Cp)
    a3 = _dw3x3(pad_mid_ref, dw3_ref, d=d, ho=H, wo=W)              # stride-1
    a3 = _subsample_hw(a3, stride)                                  # (Ho, Wo, Cp)
    z3 = jnp.dot(a3.reshape(Ho * Wo, Cp), w3_ref[...],
                 preferred_element_type=jnp.float32)

    # --- skip: 1x1 stride-`stride` conv on the RAW input (skipbn folded) ---
    xs = _subsample_hw(x, stride)                                   # (Ho, Wo, Cin)
    sk = jnp.dot(xs.reshape(Ho * Wo, Cin), wsk_ref[...],
                 preferred_element_type=jnp.float32)

    out = z3 + sk + co_ref[0, :]                                    # bn3+skipbn bias
    o_ref[...] = out.reshape(Ho, Wo, Cp).astype(o_ref.dtype)


# ----------------------------------------------------------------------------
# Parameter helpers
# ----------------------------------------------------------------------------
def init_params(key, inplanes, planes):
    ks = jax.random.split(key, 16)

    def conv_w(k, shape, fan_in):
        return jax.random.normal(k, shape, jnp.float32) * (1.0 / np.sqrt(fan_in))

    def bn_p(k, c):
        k1, k2, k3, k4 = jax.random.split(k, 4)
        return dict(
            gamma=1.0 + 0.1 * jax.random.normal(k1, (c,), jnp.float32),
            beta=0.1 * jax.random.normal(k2, (c,), jnp.float32),
            mean=0.1 * jax.random.normal(k3, (c,), jnp.float32),
            var=jax.random.uniform(k4, (c,), jnp.float32, minval=0.5, maxval=1.5),
        )

    p = {}
    p["dw1"] = conv_w(ks[0], (3, 3, inplanes), 9)            # depthwise (HWC)
    p["bn_sep1"] = bn_p(ks[1], inplanes)
    p["pw1"] = conv_w(ks[2], (inplanes, planes), inplanes)   # pointwise (Cin, Cout)
    p["bn1"] = bn_p(ks[3], planes)
    p["dw2"] = conv_w(ks[4], (3, 3, planes), 9)
    p["bn_sep2"] = bn_p(ks[5], planes)
    p["pw2"] = conv_w(ks[6], (planes, planes), planes)
    p["bn2"] = bn_p(ks[7], planes)
    p["dw3"] = conv_w(ks[8], (3, 3, planes), 9)
    p["bn_sep3"] = bn_p(ks[9], planes)
    p["pw3"] = conv_w(ks[10], (planes, planes), planes)
    p["bn3"] = bn_p(ks[11], planes)
    p["skip"] = conv_w(ks[12], (inplanes, planes), inplanes)
    p["bn_skip"] = bn_p(ks[13], planes)
    return p


def _fold_bn(bn):
    scale = bn["gamma"] / jnp.sqrt(bn["var"] + _BN_EPS)
    bias = bn["beta"] - bn["mean"] * scale
    return scale, bias


# ----------------------------------------------------------------------------
# Forward (NHWC core + NCHW wrapper matching the PyTorch module)
# ----------------------------------------------------------------------------
def block3_forward_nhwc(x_nhwc, params, *, stride=2, dilation=1):
    B, H, W, Cin = x_nhwc.shape
    d = dilation
    Cp = params["pw1"].shape[1]
    Ho = (H - 1) // stride + 1
    Wo = (W - 1) // stride + 1
    Hp, Wp = H + 2 * d, W + 2 * d

    s_sep1, b_sep1 = _fold_bn(params["bn_sep1"])
    s_bn1, b_bn1 = _fold_bn(params["bn1"])
    s_sep2, b_sep2 = _fold_bn(params["bn_sep2"])
    s_bn2, b_bn2 = _fold_bn(params["bn2"])
    s_sep3, b_sep3 = _fold_bn(params["bn_sep3"])
    s_bn3, b_bn3 = _fold_bn(params["bn3"])
    s_skip, b_skip = _fold_bn(params["bn_skip"])

    # Fold BN scales into the conv weights, and fold the depthwise-BN bias
    # through the pointwise weight into a single per-stage bias.
    dw1 = params["dw1"].reshape(9, Cin) * s_sep1
    w1 = params["pw1"] * s_bn1[None, :]
    c1 = (b_sep1 @ w1 + b_bn1).reshape(1, Cp)

    dw2 = params["dw2"].reshape(9, Cp) * s_sep2
    w2 = params["pw2"] * s_bn2[None, :]
    c2 = (b_sep2 @ w2 + b_bn2).reshape(1, Cp)

    dw3 = params["dw3"].reshape(9, Cp) * s_sep3
    w3 = params["pw3"] * s_bn3[None, :]
    wsk = params["skip"] * s_skip[None, :]
    cout = (b_sep3 @ w3 + b_bn3 + b_skip).reshape(1, Cp)   # bn3 + skipbn biases

    kernel = functools.partial(
        _block3_kernel, d=d, stride=stride,
        H=H, W=W, Ho=Ho, Wo=Wo, Cin=Cin, Cp=Cp)

    bcast = lambda r, c: pl.BlockSpec((r, c), lambda b: (0, 0))
    return pl.pallas_call(
        kernel,
        out_shape=jax.ShapeDtypeStruct((B, Ho, Wo, Cp), x_nhwc.dtype),
        grid=(B,),
        in_specs=[
            pl.BlockSpec((None, H, W, Cin), lambda b: (b, 0, 0, 0)),
            bcast(9, Cin), bcast(Cin, Cp), bcast(1, Cp),     # stage 1
            bcast(9, Cp), bcast(Cp, Cp), bcast(1, Cp),       # stage 2
            bcast(9, Cp), bcast(Cp, Cp),                     # stage 3
            bcast(Cin, Cp), bcast(1, Cp),                    # skip + merged bias
        ],
        out_specs=pl.BlockSpec((None, Ho, Wo, Cp), lambda b: (b, 0, 0, 0)),
        scratch_shapes=[
            pltpu.VMEM((Hp, Wp, Cin), jnp.float32),          # padded relu(inp)
            pltpu.VMEM((Hp, Wp, Cp), jnp.float32),           # padded mid activation
        ],
        compiler_params=pltpu.CompilerParams(dimension_semantics=("parallel",)),
    )(x_nhwc, dw1, w1, c1, dw2, w2, c2, dw3, w3, wsk, cout)


@functools.partial(jax.jit, static_argnames=("stride", "dilation"))
def block3_forward(x_nchw, params, *, stride=2, dilation=1):
    # NCHW interface to match the PyTorch module; the NHWC core above can be
    # called directly to avoid the boundary transposes.
    x = jnp.transpose(x_nchw, (0, 2, 3, 1))
    y = block3_forward_nhwc(x, params, stride=stride, dilation=dilation)
    return jnp.transpose(y, (0, 3, 1, 2))


# ----------------------------------------------------------------------------
# Pure-JAX reference (mirrors the PyTorch forward, eval-mode BN)
# ----------------------------------------------------------------------------
@functools.partial(jax.jit, static_argnames=("stride", "dilation"))
def block3_reference(inp_nchw, params, *, stride=2, dilation=1):
    d = dilation
    x_in = jnp.transpose(inp_nchw, (0, 2, 3, 1))

    def bn(x, p):
        return (x - p["mean"]) / jnp.sqrt(p["var"] + _BN_EPS) * p["gamma"] + p["beta"]

    def dwconv(x, w, s):
        xp = jnp.pad(x, ((0, 0), (d, d), (d, d), (0, 0)))
        return lax.conv_general_dilated(
            xp, w[:, :, None, :], (s, s), "VALID",
            rhs_dilation=(d, d),
            dimension_numbers=("NHWC", "HWIO", "NHWC"),
            feature_group_count=x.shape[-1])

    def sep(x, dw_w, bn_sep, pw_w, s):
        x = dwconv(x, dw_w, s)
        x = bn(x, bn_sep)
        return jnp.einsum("bhwc,cd->bhwd", x, pw_w)

    x = jax.nn.relu(x_in)
    x = sep(x, params["dw1"], params["bn_sep1"], params["pw1"], 1)
    x = jax.nn.relu(bn(x, params["bn1"]))
    x = sep(x, params["dw2"], params["bn_sep2"], params["pw2"], 1)
    x = jax.nn.relu(bn(x, params["bn2"]))
    x = sep(x, params["dw3"], params["bn_sep3"], params["pw3"], stride)
    x = bn(x, params["bn3"])
    skip = lax.conv_general_dilated(
        x_in, params["skip"][None, None, :, :], (stride, stride), "VALID",
        dimension_numbers=("NHWC", "HWIO", "NHWC"))
    skip = bn(skip, params["bn_skip"])
    out = x + skip
    return jnp.transpose(out, (0, 3, 1, 2))


if __name__ == "__main__":
    key = jax.random.PRNGKey(0)
    k_x, k_p = jax.random.split(key)

    B, inplanes, planes, H, W = 2, 8, 16, 16, 16
    dilation = 1

    x = jax.random.normal(k_x, (B, inplanes, H, W), jnp.float32)   # NCHW like PyTorch
    params = init_params(k_p, inplanes, planes)

    # stride=2 (downsampling block)
    out = jax.block_until_ready(block3_forward(x, params, stride=2, dilation=dilation))
    ref = jax.block_until_ready(block3_reference(x, params, stride=2, dilation=dilation))
    assert out.shape == (B, planes, H // 2, W // 2), out.shape
    np.testing.assert_allclose(np.asarray(out), np.asarray(ref), rtol=5e-3, atol=5e-3)

    # stride=1 path (no spatial subsample) also exercised
    out1 = jax.block_until_ready(block3_forward(x, params, stride=1, dilation=dilation))
    ref1 = jax.block_until_ready(block3_reference(x, params, stride=1, dilation=dilation))
    assert out1.shape == (B, planes, H, W), out1.shape
    np.testing.assert_allclose(np.asarray(out1), np.asarray(ref1), rtol=5e-3, atol=5e-3)

    print("KERNEL_OK")
</pallas_src>

<mosaic_0001>
module attributes {stable_mosaic.version = 11 : i64} {
  func.func @_block3_kernel(%arg0: i32, %arg1: memref<1x16x16x8xf32, #tpu.memory_space<vmem>>, %arg2: memref<9x8xf32, #tpu.memory_space<vmem>>, %arg3: memref<8x16xf32, #tpu.memory_space<vmem>>, %arg4: memref<1x16xf32, #tpu.memory_space<vmem>>, %arg5: memref<9x16xf32, #tpu.memory_space<vmem>>, %arg6: memref<16x16xf32, #tpu.memory_space<vmem>>, %arg7: memref<1x16xf32, #tpu.memory_space<vmem>>, %arg8: memref<9x16xf32, #tpu.memory_space<vmem>>, %arg9: memref<16x16xf32, #tpu.memory_space<vmem>>, %arg10: memref<8x16xf32, #tpu.memory_space<vmem>>, %arg11: memref<1x16xf32, #tpu.memory_space<vmem>>, %arg12: memref<1x8x8x16xf32, #tpu.memory_space<vmem>>, %arg13: memref<18x18x8xf32, #tpu.memory_space<vmem>>, %arg14: memref<18x18x16xf32, #tpu.memory_space<vmem>>) attributes {dimension_semantics = [#tpu.dimension_semantics<parallel>], iteration_bounds = array<i64: 2>, scalar_prefetch = 0 : i64, scratch_operands = 2 : i64, tpu.core_type = #tpu.core_type<tc>, window_params = [{transform_indices = @transform_0, window_bounds = array<i64: 1, 16, 16, 8>}, {pipeline_mode = #tpu.pipeline_mode<synchronous>, transform_indices = @transform_1, window_bounds = array<i64: 9, 8>}, {pipeline_mode = #tpu.pipeline_mode<synchronous>, transform_indices = @transform_2, window_bounds = array<i64: 8, 16>}, {pipeline_mode = #tpu.pipeline_mode<synchronous>, transform_indices = @transform_3, window_bounds = array<i64: 1, 16>}, {pipeline_mode = #tpu.pipeline_mode<synchronous>, transform_indices = @transform_4, window_bounds = array<i64: 9, 16>}, {pipeline_mode = #tpu.pipeline_mode<synchronous>, transform_indices = @transform_5, window_bounds = array<i64: 16, 16>}, {pipeline_mode = #tpu.pipeline_mode<synchronous>, transform_indices = @transform_6, window_bounds = array<i64: 1, 16>}, {pipeline_mode = #tpu.pipeline_mode<synchronous>, transform_indices = @transform_7, window_bounds = array<i64: 9, 16>}, {pipeline_mode = #tpu.pipeline_mode<synchronous>, transform_indices = @transform_8, window_bounds = array<i64: 16, 16>}, {pipeline_mode = #tpu.pipeline_mode<synchronous>, transform_indices = @transform_9, window_bounds = array<i64: 8, 16>}, {pipeline_mode = #tpu.pipeline_mode<synchronous>, transform_indices = @transform_10, window_bounds = array<i64: 1, 16>}, {transform_indices = @transform_11, window_bounds = array<i64: 1, 8, 8, 16>}]} {
    %cst = arith.constant 0.000000e+00 : f32
    %0 = vector.broadcast %cst : f32 to vector<18x18x8xf32>
    %c0 = arith.constant 0 : index
    %c0_0 = arith.constant 0 : index
    %c0_1 = arith.constant 0 : index
    %1 = vector.load %arg13[%c0, %c0_0, %c0_1] : memref<18x18x8xf32, #tpu.memory_space<vmem>>, vector<18x18x8xf32>
    tpu.vector_store %arg13[%c0, %c0_0, %c0_1], %0 {strides = array<i32>} : memref<18x18x8xf32, #tpu.memory_space<vmem>>, vector<18x18x8xf32>,
    %cst_2 = arith.constant 0.000000e+00 : f32
    %2 = vector.broadcast %cst_2 : f32 to vector<18x18x16xf32>
    %c0_3 = arith.constant 0 : index
    %c0_4 = arith.constant 0 : index
    %c0_5 = arith.constant 0 : index
    %3 = vector.load %arg14[%c0_3, %c0_4, %c0_5] : memref<18x18x16xf32, #tpu.memory_space<vmem>>, vector<18x18x16xf32>
    tpu.vector_store %arg14[%c0_3, %c0_4, %c0_5], %2 {strides = array<i32>} : memref<18x18x16xf32, #tpu.memory_space<vmem>>, vector<18x18x16xf32>,
    %c0_6 = arith.constant 0 : index
    %c0_7 = arith.constant 0 : index
    %c0_8 = arith.constant 0 : index
    %c0_9 = arith.constant 0 : index
    %4 = vector.load %arg1[%c0_6, %c0_7, %c0_8, %c0_9] : memref<1x16x16x8xf32, #tpu.memory_space<vmem>>, vector<1x16x16x8xf32>
    %5 = vector.shape_cast %4 : vector<1x16x16x8xf32> to vector<16x16x8xf32>
    %cst_10 = arith.constant 0.000000e+00 : f32
    %6 = vector.broadcast %cst_10 : f32 to vector<16x16x8xf32>
    %7 = arith.maximumf %5, %6 : vector<16x16x8xf32>
    %c1 = arith.constant 1 : index
    %c1_11 = arith.constant 1 : index
    %c0_12 = arith.constant 0 : index
    %8 = vector.load %arg13[%c1, %c1_11, %c0_12] : memref<18x18x8xf32, #tpu.memory_space<vmem>>, vector<16x16x8xf32>
    tpu.vector_store %arg13[%c1, %c1_11, %c0_12], %7 {strides = array<i32>} : memref<18x18x8xf32, #tpu.memory_space<vmem>>, vector<16x16x8xf32>,
    %cst_13 = arith.constant 0.000000e+00 : f32
    %9 = vector.broadcast %cst_13 : f32 to vector<16x16x8xf32>
    %c0_14 = arith.constant 0 : index
    %c0_15 = arith.constant 0 : index
    %c0_16 = arith.constant 0 : index
    %10 = vector.load %arg13[%c0_14, %c0_15, %c0_16] : memref<18x18x8xf32, #tpu.memory_space<vmem>>, vector<16x16x8xf32>
    %c0_17 = arith.constant 0 : index
    %c0_18 = arith.constant 0 : index
    %11 = vector.load %arg2[%c0_17, %c0_18] : memref<9x8xf32, #tpu.memory_space<vmem>>, vector<1x8xf32>
    %12 = vector.shape_cast %11 : vector<1x8xf32> to vector<8xf32>
    %13 = vector.shape_cast %12 : vector<8xf32> to vector<1x1x8xf32>
    %14 = vector.broadcast %13 : vector<1x1x8xf32> to vector<16x16x8xf32>
    %15 = arith.mulf %10, %14 : vector<16x16x8xf32>
    %16 = arith.addf %9, %15 : vector<16x16x8xf32>
    %c0_19 = arith.constant 0 : index
    %c1_20 = arith.constant 1 : index
    %c0_21 = arith.constant 0 : index
    %17 = vector.load %arg13[%c0_19, %c1_20, %c0_21] : memref<18x18x8xf32, #tpu.memory_space<vmem>>, vector<16x16x8xf32>
    %c1_22 = arith.constant 1 : index
    %c0_23 = arith.constant 0 : index
    %18 = vector.load %arg2[%c1_22, %c0_23] : memref<9x8xf32, #tpu.memory_space<vmem>>, vector<1x8xf32>
    %19 = vector.shape_cast %18 : vector<1x8xf32> to vector<8xf32>
    %20 = vector.shape_cast %19 : vector<8xf32> to vector<1x1x8xf32>
    %21 = vector.broadcast %20 : vector<1x1x8xf32> to vector<16x16x8xf32>
    %22 = arith.mulf %17, %21 : vector<16x16x8xf32>
    %23 = arith.addf %16, %22 : vector<16x16x8xf32>
    %c0_24 = arith.constant 0 : index
    %c2 = arith.constant 2 : index
    %c0_25 = arith.constant 0 : index
    %24 = vector.load %arg13[%c0_24, %c2, %c0_25] : memref<18x18x8xf32, #tpu.memory_space<vmem>>, vector<16x16x8xf32>
    %c2_26 = arith.constant 2 : index
    %c0_27 = arith.constant 0 : index
    %25 = vector.load %arg2[%c2_26, %c0_27] : memref<9x8xf32, #tpu.memory_space<vmem>>, vector<1x8xf32>
    %26 = vector.shape_cast %25 : vector<1x8xf32> to vector<8xf32>
    %27 = vector.shape_cast %26 : vector<8xf32> to vector<1x1x8xf32>
    %28 = vector.broadcast %27 : vector<1x1x8xf32> to vector<16x16x8xf32>
    %29 = arith.mulf %24, %28 : vector<16x16x8xf32>
    %30 = arith.addf %23, %29 : vector<16x16x8xf32>
    %c1_28 = arith.constant 1 : index
    %c0_29 = arith.constant 0 : index
    %c0_30 = arith.constant 0 : index
    %31 = vector.load %arg13[%c1_28, %c0_29, %c0_30] : memref<18x18x8xf32, #tpu.memory_space<vmem>>, vector<16x16x8xf32>
    %c3 = arith.constant 3 : index
    %c0_31 = arith.constant 0 : index
    %32 = vector.load %arg2[%c3, %c0_31] : memref<9x8xf32, #tpu.memory_space<vmem>>, vector<1x8xf32>
    %33 = vector.shape_cast %32 : vector<1x8xf32> to vector<8xf32>
    %34 = vector.shape_cast %33 : vector<8xf32> to vector<1x1x8xf32>
    %35 = vector.broadcast %34 : vector<1x1x8xf32> to vector<16x16x8xf32>
    %36 = arith.mulf %31, %35 : vector<16x16x8xf32>
    %37 = arith.addf %30, %36 : vector<16x16x8xf32>
    %c1_32 = arith.constant 1 : index
    %c1_33 = arith.constant 1 : index
    %c0_34 = arith.constant 0 : index
    %38 = vector.load %arg13[%c1_32, %c1_33, %c0_34] : memref<18x18x8xf32, #tpu.memory_space<vmem>>, vector<16x16x8xf32>
    %c4 = arith.constant 4 : index
    %c0_35 = arith.constant 0 : index
    %39 = vector.load %arg2[%c4, %c0_35] : memref<9x8xf32, #tpu.memory_space<vmem>>, vector<1x8xf32>
    %40 = vector.shape_cast %39 : vector<1x8xf32> to vector<8xf32>
    %41 = vector.shape_cast %40 : vector<8xf32> to vector<1x1x8xf32>
    %42 = vector.broadcast %41 : vector<1x1x8xf32> to vector<16x16x8xf32>
    %43 = arith.mulf %38, %42 : vector<16x16x8xf32>
    %44 = arith.addf %37, %43 : vector<16x16x8xf32>
    %c1_36 = arith.constant 1 : index
    %c2_37 = arith.constant 2 : index
    %c0_38 = arith.constant 0 : index
    %45 = vector.load %arg13[%c1_36, %c2_37, %c0_38] : memref<18x18x8xf32, #tpu.memory_space<vmem>>, vector<16x16x8xf32>
    %c5 = arith.constant 5 : index
    %c0_39 = arith.constant 0 : index
    %46 = vector.load %arg2[%c5, %c0_39] : memref<9x8xf32, #tpu.memory_space<vmem>>, vector<1x8xf32>
    %47 = vector.shape_cast %46 : vector<1x8xf32> to vector<8xf32>
    %48 = vector.shape_cast %47 : vector<8xf32> to vector<1x1x8xf32>
    %49 = vector.broadcast %48 : vector<1x1x8xf32> to vector<16x16x8xf32>
    %50 = arith.mulf %45, %49 : vector<16x16x8xf32>
    %51 = arith.addf %44, %50 : vector<16x16x8xf32>
    %c2_40 = arith.constant 2 : index
    %c0_41 = arith.constant 0 : index
    %c0_42 = arith.constant 0 : index
    %52 = vector.load %arg13[%c2_40, %c0_41, %c0_42] : memref<18x18x8xf32, #tpu.memory_space<vmem>>, vector<16x16x8xf32>
    %c6 = arith.constant 6 : index
    %c0_43 = arith.constant 0 : index
    %53 = vector.load %arg2[%c6, %c0_43] : memref<9x8xf32, #tpu.memory_space<vmem>>, vector<1x8xf32>
    %54 = vector.shape_cast %53 : vector<1x8xf32> to vector<8xf32>
    %55 = vector.shape_cast %54 : vector<8xf32> to vector<1x1x8xf32>
    %56 = vector.broadcast %55 : vector<1x1x8xf32> to vector<16x16x8xf32>
    %57 = arith.mulf %52, %56 : vector<16x16x8xf32>
    %58 = arith.addf %51, %57 : vector<16x16x8xf32>
    %c2_44 = arith.constant 2 : index
    %c1_45 = arith.constant 1 : index
    %c0_46 = arith.constant 0 : index
    %59 = vector.load %arg13[%c2_44, %c1_45, %c0_46] : memref<18x18x8xf32, #tpu.memory_space<vmem>>, vector<16x16x8xf32>
    %c7 = arith.constant 7 : index
    %c0_47 = arith.constant 0 : index
    %60 = vector.load %arg2[%c7, %c0_47] : memref<9x8xf32, #tpu.memory_space<vmem>>, vector<1x8xf32>
    %61 = vector.shape_cast %60 : vector<1x8xf32> to vector<8xf32>
    %62 = vector.shape_cast %61 : vector<8xf32> to vector<1x1x8xf32>
    %63 = vector.broadcast %62 : vector<1x1x8xf32> to vector<16x16x8xf32>
    %64 = arith.mulf %59, %63 : vector<16x16x8xf32>
    %65 = arith.addf %58, %64 : vector<16x16x8xf32>
    %c2_48 = arith.constant 2 : index
    %c2_49 = arith.constant 2 : index
    %c0_50 = arith.constant 0 : index
    %66 = vector.load %arg13[%c2_48, %c2_49, %c0_50] : memref<18x18x8xf32, #tpu.memory_space<vmem>>, vector<16x16x8xf32>
    %c8 = arith.constant 8 : index
    %c0_51 = arith.constant 0 : index
    %67 = vector.load %arg2[%c8, %c0_51] : memref<9x8xf32, #tpu.memory_space<vmem>>, vector<1x8xf32>
    %68 = vector.shape_cast %67 : vector<1x8xf32> to vector<8xf32>
    %69 = vector.shape_cast %68 : vector<8xf32> to vector<1x1x8xf32>
    %70 = vector.broadcast %69 : vector<1x1x8xf32> to vector<16x16x8xf32>
    %71 = arith.mulf %66, %70 : vector<16x16x8xf32>
    %72 = arith.addf %65, %71 : vector<16x16x8xf32>
    %73 = vector.shape_cast %72 : vector<16x16x8xf32> to vector<256x8xf32>
    %c0_52 = arith.constant 0 : index
    %c0_53 = arith.constant 0 : index
    %74 = vector.load %arg3[%c0_52, %c0_53] : memref<8x16xf32, #tpu.memory_space<vmem>>, vector<8x16xf32>
    %cst_54 = arith.constant dense<0.000000e+00> : vector<256x16xf32>
    %75 = tpu.matmul %73, %74, %cst_54 {dimension_numbers = #tpu.dot_dimension_numbers<[1], [0], [0], [1], [0, 0, 1, 1], [], []>} : vector<256x8xf32>, vector<8x16xf32>, vector<256x16xf32> -> vector<256x16xf32>
    %c0_55 = arith.constant 0 : index
    %c0_56 = arith.constant 0 : index
    %76 = vector.load %arg4[%c0_55, %c0_56] : memref<1x16xf32, #tpu.memory_space<vmem>>, vector<1x16xf32>
    %77 = vector.shape_cast %76 : vector<1x16xf32> to vector<16xf32>
    %78 = vector.shape_cast %77 : vector<16xf32> to vector<1x16xf32>
    %79 = vector.broadcast %78 : vector<1x16xf32> to vector<256x16xf32>
    %80 = arith.addf %75, %79 : vector<256x16xf32>
    %cst_57 = arith.constant 0.000000e+00 : f32
    %81 = vector.broadcast %cst_57 : f32 to vector<256x16xf32>
    %82 = arith.maximumf %80, %81 : vector<256x16xf32>
    %83 = vector.shape_cast %82 : vector<256x16xf32> to vector<16x16x16xf32>
    %c1_58 = arith.constant 1 : index
    %c1_59 = arith.constant 1 : index
    %c0_60 = arith.constant 0 : index
    %84 = vector.load %arg14[%c1_58, %c1_59, %c0_60] : memref<18x18x16xf32, #tpu.memory_space<vmem>>, vector<16x16x16xf32>
    tpu.vector_store %arg14[%c1_58, %c1_59, %c0_60], %83 {strides = array<i32>} : memref<18x18x16xf32, #tpu.memory_space<vmem>>, vector<16x16x16xf32>,
    %cst_61 = arith.constant 0.000000e+00 : f32
    %85 = vector.broadcast %cst_61 : f32 to vector<16x16x16xf32>
    %c0_62 = arith.constant 0 : index
    %c0_63 = arith.constant 0 : index
    %c0_64 = arith.constant 0 : index
    %86 = vector.load %arg14[%c0_62, %c0_63, %c0_64] : memref<18x18x16xf32, #tpu.memory_space<vmem>>, vector<16x16x16xf32>
    %c0_65 = arith.constant 0 : index
    %c0_66 = arith.constant 0 : index
    %87 = vector.load %arg5[%c0_65, %c0_66] : memref<9x16xf32, #tpu.memory_space<vmem>>, vector<1x16xf32>
    %88 = vector.shape_cast %87 : vector<1x16xf32> to vector<16xf32>
    %89 = vector.shape_cast %88 : vector<16xf32> to vector<1x1x16xf32>
    %90 = vector.broadcast %89 : vector<1x1x16xf32> to vector<16x16x16xf32>
    %91 = arith.mulf %86, %90 : vector<16x16x16xf32>
    %92 = arith.addf %85, %91 : vector<16x16x16xf32>
    %c0_67 = arith.constant 0 : index
    %c1_68 = arith.constant 1 : index
    %c0_69 = arith.constant 0 : index
    %93 = vector.load %arg14[%c0_67, %c1_68, %c0_69] : memref<18x18x16xf32, #tpu.memory_space<vmem>>, vector<16x16x16xf32>
    %c1_70 = arith.constant 1 : index
    %c0_71 = arith.constant 0 : index
    %94 = vector.load %arg5[%c1_70, %c0_71] : memref<9x16xf32, #tpu.memory_space<vmem>>, vector<1x16xf32>
    %95 = vector.shape_cast %94 : vector<1x16xf32> to vector<16xf32>
    %96 = vector.shape_cast %95 : vector<16xf32> to vector<1x1x16xf32>
    %97 = vector.broadcast %96 : vector<1x1x16xf32> to vector<16x16x16xf32>
    %98 = arith.mulf %93, %97 : vector<16x16x16xf32>
    %99 = arith.addf %92, %98 : vector<16x16x16xf32>
    %c0_72 = arith.constant 0 : index
    %c2_73 = arith.constant 2 : index
    %c0_74 = arith.constant 0 : index
    %100 = vector.load %arg14[%c0_72, %c2_73, %c0_74] : memref<18x18x16xf32, #tpu.memory_space<vmem>>, vector<16x16x16xf32>
    %c2_75 = arith.constant 2 : index
    %c0_76 = arith.constant 0 : index
    %101 = vector.load %arg5[%c2_75, %c0_76] : memref<9x16xf32, #tpu.memory_space<vmem>>, vector<1x16xf32>
    %102 = vector.shape_cast %101 : vector<1x16xf32> to vector<16xf32>
    %103 = vector.shape_cast %102 : vector<16xf32> to vector<1x1x16xf32>
    %104 = vector.broadcast %103 : vector<1x1x16xf32> to vector<16x16x16xf32>
    %105 = arith.mulf %100, %104 : vector<16x16x16xf32>
    %106 = arith.addf %99, %105 : vector<16x16x16xf32>
    %c1_77 = arith.constant 1 : index
    %c0_78 = arith.constant 0 : index
    %c0_79 = arith.constant 0 : index
    %107 = vector.load %arg14[%c1_77, %c0_78, %c0_79] : memref<18x18x16xf32, #tpu.memory_space<vmem>>, vector<16x16x16xf32>
    %c3_80 = arith.constant 3 : index
    %c0_81 = arith.constant 0 : index
    %108 = vector.load %arg5[%c3_80, %c0_81] : memref<9x16xf32, #tpu.memory_space<vmem>>, vector<1x16xf32>
    %109 = vector.shape_cast %108 : vector<1x16xf32> to vector<16xf32>
    %110 = vector.shape_cast %109 : vector<16xf32> to vector<1x1x16xf32>
    %111 = vector.broadcast %110 : vector<1x1x16xf32> to vector<16x16x16xf32>
    %112 = arith.mulf %107, %111 : vector<16x16x16xf32>
    %113 = arith.addf %106, %112 : vector<16x16x16xf32>
    %c1_82 = arith.constant 1 : index
    %c1_83 = arith.constant 1 : index
    %c0_84 = arith.constant 0 : index
    %114 = vector.load %arg14[%c1_82, %c1_83, %c0_84] : memref<18x18x16xf32, #tpu.memory_space<vmem>>, vector<16x16x16xf32>
    %c4_85 = arith.constant 4 : index
    %c0_86 = arith.constant 0 : index
    %115 = vector.load %arg5[%c4_85, %c0_86] : memref<9x16xf32, #tpu.memory_space<vmem>>, vector<1x16xf32>
    %116 = vector.shape_cast %115 : vector<1x16xf32> to vector<16xf32>
    %117 = vector.shape_cast %116 : vector<16xf32> to vector<1x1x16xf32>
    %118 = vector.broadcast %117 : vector<1x1x16xf32> to vector<16x16x16xf32>
    %119 = arith.mulf %114, %118 : vector<16x16x16xf32>
    %120 = arith.addf %113, %119 : vector<16x16x16xf32>
    %c1_87 = arith.constant 1 : index
    %c2_88 = arith.constant 2 : index
    %c0_89 = arith.constant 0 : index
    %121 = vector.load %arg14[%c1_87, %c2_88, %c0_89] : memref<18x18x16xf32, #tpu.memory_space<vmem>>, vector<16x16x16xf32>
    %c5_90 = arith.constant 5 : index
    %c0_91 = arith.constant 0 : index
    %122 = vector.load %arg5[%c5_90, %c0_91] : memref<9x16xf32, #tpu.memory_space<vmem>>, vector<1x16xf32>
    %123 = vector.shape_cast %122 : vector<1x16xf32> to vector<16xf32>
    %124 = vector.shape_cast %123 : vector<16xf32> to vector<1x1x16xf32>
    %125 = vector.broadcast %124 : vector<1x1x16xf32> to vector<16x16x16xf32>
    %126 = arith.mulf %121, %125 : vector<16x16x16xf32>
    %127 = arith.addf %120, %126 : vector<16x16x16xf32>
    %c2_92 = arith.constant 2 : index
    %c0_93 = arith.constant 0 : index
    %c0_94 = arith.constant 0 : index
    %128 = vector.load %arg14[%c2_92, %c0_93, %c0_94] : memref<18x18x16xf32, #tpu.memory_space<vmem>>, vector<16x16x16xf32>
    %c6_95 = arith.constant 6 : index
    %c0_96 = arith.constant 0 : index
    %129 = vector.load %arg5[%c6_95, %c0_96] : memref<9x16xf32, #tpu.memory_space<vmem>>, vector<1x16xf32>
    %130 = vector.shape_cast %129 : vector<1x16xf32> to vector<16xf32>
    %131 = vector.shape_cast %130 : vector<16xf32> to vector<1x1x16xf32>
    %132 = vector.broadcast %131 : vector<1x1x16xf32> to vector<16x16x16xf32>
    %133 = arith.mulf %128, %132 : vector<16x16x16xf32>
    %134 = arith.addf %127, %133 : vector<16x16x16xf32>
    %c2_97 = arith.constant 2 : index
    %c1_98 = arith.constant 1 : index
    %c0_99 = arith.constant 0 : index
    %135 = vector.load %arg14[%c2_97, %c1_98, %c0_99] : memref<18x18x16xf32, #tpu.memory_space<vmem>>, vector<16x16x16xf32>
    %c7_100 = arith.constant 7 : index
    %c0_101 = arith.constant 0 : index
    %136 = vector.load %arg5[%c7_100, %c0_101] : memref<9x16xf32, #tpu.memory_space<vmem>>, vector<1x16xf32>
    %137 = vector.shape_cast %136 : vector<1x16xf32> to vector<16xf32>
    %138 = vector.shape_cast %137 : vector<16xf32> to vector<1x1x16xf32>
    %139 = vector.broadcast %138 : vector<1x1x16xf32> to vector<16x16x16xf32>
    %140 = arith.mulf %135, %139 : vector<16x16x16xf32>
    %141 = arith.addf %134, %140 : vector<16x16x16xf32>
    %c2_102 = arith.constant 2 : index
    %c2_103 = arith.constant 2 : index
    %c0_104 = arith.constant 0 : index
    %142 = vector.load %arg14[%c2_102, %c2_103, %c0_104] : memref<18x18x16xf32, #tpu.memory_space<vmem>>, vector<16x16x16xf32>
    %c8_105 = arith.constant 8 : index
    %c0_106 = arith.constant 0 : index
    %143 = vector.load %arg5[%c8_105, %c0_106] : memref<9x16xf32, #tpu.memory_space<vmem>>, vector<1x16xf32>
    %144 = vector.shape_cast %143 : vector<1x16xf32> to vector<16xf32>
    %145 = vector.shape_cast %144 : vector<16xf32> to vector<1x1x16xf32>
    %146 = vector.broadcast %145 : vector<1x1x16xf32> to vector<16x16x16xf32>
    %147 = arith.mulf %142, %146 : vector<16x16x16xf32>
    %148 = arith.addf %141, %147 : vector<16x16x16xf32>
    %149 = vector.shape_cast %148 : vector<16x16x16xf32> to vector<256x16xf32>
    %c0_107 = arith.constant 0 : index
    %c0_108 = arith.constant 0 : index
    %150 = vector.load %arg6[%c0_107, %c0_108] : memref<16x16xf32, #tpu.memory_space<vmem>>, vector<16x16xf32>
    %cst_109 = arith.constant dense<0.000000e+00> : vector<256x16xf32>
    %151 = tpu.matmul %149, %150, %cst_109 {dimension_numbers = #tpu.dot_dimension_numbers<[1], [0], [0], [1], [0, 0, 1, 1], [], []>} : vector<256x16xf32>, vector<16x16xf32>, vector<256x16xf32> -> vector<256x16xf32>
    %c0_110 = arith.constant 0 : index
    %c0_111 = arith.constant 0 : index
    %152 = vector.load %arg7[%c0_110, %c0_111] : memref<1x16xf32, #tpu.memory_space<vmem>>, vector<1x16xf32>
    %153 = vector.shape_cast %152 : vector<1x16xf32> to vector<16xf32>
    %154 = vector.shape_cast %153 : vector<16xf32> to vector<1x16xf32>
    %155 = vector.broadcast %154 : vector<1x16xf32> to vector<256x16xf32>
    %156 = arith.addf %151, %155 : vector<256x16xf32>
    %cst_112 = arith.constant 0.000000e+00 : f32
    %157 = vector.broadcast %cst_112 : f32 to vector<256x16xf32>
    %158 = arith.maximumf %156, %157 : vector<256x16xf32>
    %159 = vector.shape_cast %158 : vector<256x16xf32> to vector<16x16x16xf32>
    %c1_113 = arith.constant 1 : index
    %c1_114 = arith.constant 1 : index
    %c0_115 = arith.constant 0 : index
    %160 = vector.load %arg14[%c1_113, %c1_114, %c0_115] : memref<18x18x16xf32, #tpu.memory_space<vmem>>, vector<16x16x16xf32>
    tpu.vector_store %arg14[%c1_113, %c1_114, %c0_115], %159 {strides = array<i32>} : memref<18x18x16xf32, #tpu.memory_space<vmem>>, vector<16x16x16xf32>,
    %cst_116 = arith.constant 0.000000e+00 : f32
    %161 = vector.broadcast %cst_116 : f32 to vector<16x16x16xf32>
    %c0_117 = arith.constant 0 : index
    %c0_118 = arith.constant 0 : index
    %c0_119 = arith.constant 0 : index
    %162 = vector.load %arg14[%c0_117, %c0_118, %c0_119] : memref<18x18x16xf32, #tpu.memory_space<vmem>>, vector<16x16x16xf32>
    %c0_120 = arith.constant 0 : index
    %c0_121 = arith.constant 0 : index
    %163 = vector.load %arg8[%c0_120, %c0_121] : memref<9x16xf32, #tpu.memory_space<vmem>>, vector<1x16xf32>
    %164 = vector.shape_cast %163 : vector<1x16xf32> to vector<16xf32>
    %165 = vector.shape_cast %164 : vector<16xf32> to vector<1x1x16xf32>
    %166 = vector.broadcast %165 : vector<1x1x16xf32> to vector<16x16x16xf32>
    %167 = arith.mulf %162, %166 : vector<16x16x16xf32>
    %168 = arith.addf %161, %167 : vector<16x16x16xf32>
    %c0_122 = arith.constant 0 : index
    %c1_123 = arith.constant 1 : index
    %c0_124 = arith.constant 0 : index
    %169 = vector.load %arg14[%c0_122, %c1_123, %c0_124] : memref<18x18x16xf32, #tpu.memory_space<vmem>>, vector<16x16x16xf32>
    %c1_125 = arith.constant 1 : index
    %c0_126 = arith.constant 0 : index
    %170 = vector.load %arg8[%c1_125, %c0_126] : memref<9x16xf32, #tpu.memory_space<vmem>>, vector<1x16xf32>
    %171 = vector.shape_cast %170 : vector<1x16xf32> to vector<16xf32>
    %172 = vector.shape_cast %171 : vector<16xf32> to vector<1x1x16xf32>
    %173 = vector.broadcast %172 : vector<1x1x16xf32> to vector<16x16x16xf32>
    %174 = arith.mulf %169, %173 : vector<16x16x16xf32>
    %175 = arith.addf %168, %174 : vector<16x16x16xf32>
    %c0_127 = arith.constant 0 : index
    %c2_128 = arith.constant 2 : index
    %c0_129 = arith.constant 0 : index
    %176 = vector.load %arg14[%c0_127, %c2_128, %c0_129] : memref<18x18x16xf32, #tpu.memory_space<vmem>>, vector<16x16x16xf32>
    %c2_130 = arith.constant 2 : index
    %c0_131 = arith.constant 0 : index
    %177 = vector.load %arg8[%c2_130, %c0_131] : memref<9x16xf32, #tpu.memory_space<vmem>>, vector<1x16xf32>
    %178 = vector.shape_cast %177 : vector<1x16xf32> to vector<16xf32>
    %179 = vector.shape_cast %178 : vector<16xf32> to vector<1x1x16xf32>
    %180 = vector.broadcast %179 : vector<1x1x16xf32> to vector<16x16x16xf32>
    %181 = arith.mulf %176, %180 : vector<16x16x16xf32>
    %182 = arith.addf %175, %181 : vector<16x16x16xf32>
    %c1_132 = arith.constant 1 : index
    %c0_133 = arith.constant 0 : index
    %c0_134 = arith.constant 0 : index
    %183 = vector.load %arg14[%c1_132, %c0_133, %c0_134] : memref<18x18x16xf32, #tpu.memory_space<vmem>>, vector<16x16x16xf32>
    %c3_135 = arith.constant 3 : index
    %c0_136 = arith.constant 0 : index
    %184 = vector.load %arg8[%c3_135, %c0_136] : memref<9x16xf32, #tpu.memory_space<vmem>>, vector<1x16xf32>
    %185 = vector.shape_cast %184 : vector<1x16xf32> to vector<16xf32>
    %186 = vector.shape_cast %185 : vector<16xf32> to vector<1x1x16xf32>
    %187 = vector.broadcast %186 : vector<1x1x16xf32> to vector<16x16x16xf32>
    %188 = arith.mulf %183, %187 : vector<16x16x16xf32>
    %189 = arith.addf %182, %188 : vector<16x16x16xf32>
    %c1_137 = arith.constant 1 : index
    %c1_138 = arith.constant 1 : index
    %c0_139 = arith.constant 0 : index
    %190 = vector.load %arg14[%c1_137, %c1_138, %c0_139] : memref<18x18x16xf32, #tpu.memory_space<vmem>>, vector<16x16x16xf32>
    %c4_140 = arith.constant 4 : index
    %c0_141 = arith.constant 0 : index
    %191 = vector.load %arg8[%c4_140, %c0_141] : memref<9x16xf32, #tpu.memory_space<vmem>>, vector<1x16xf32>
    %192 = vector.shape_cast %191 : vector<1x16xf32> to vector<16xf32>
    %193 = vector.shape_cast %192 : vector<16xf32> to vector<1x1x16xf32>
    %194 = vector.broadcast %193 : vector<1x1x16xf32> to vector<16x16x16xf32>
    %195 = arith.mulf %190, %194 : vector<16x16x16xf32>
    %196 = arith.addf %189, %195 : vector<16x16x16xf32>
    %c1_142 = arith.constant 1 : index
    %c2_143 = arith.constant 2 : index
    %c0_144 = arith.constant 0 : index
    %197 = vector.load %arg14[%c1_142, %c2_143, %c0_144] : memref<18x18x16xf32, #tpu.memory_space<vmem>>, vector<16x16x16xf32>
    %c5_145 = arith.constant 5 : index
    %c0_146 = arith.constant 0 : index
    %198 = vector.load %arg8[%c5_145, %c0_146] : memref<9x16xf32, #tpu.memory_space<vmem>>, vector<1x16xf32>
    %199 = vector.shape_cast %198 : vector<1x16xf32> to vector<16xf32>
    %200 = vector.shape_cast %199 : vector<16xf32> to vector<1x1x16xf32>
    %201 = vector.broadcast %200 : vector<1x1x16xf32> to vector<16x16x16xf32>
    %202 = arith.mulf %197, %201 : vector<16x16x16xf32>
    %203 = arith.addf %196, %202 : vector<16x16x16xf32>
    %c2_147 = arith.constant 2 : index
    %c0_148 = arith.constant 0 : index
    %c0_149 = arith.constant 0 : index
    %204 = vector.load %arg14[%c2_147, %c0_148, %c0_149] : memref<18x18x16xf32, #tpu.memory_space<vmem>>, vector<16x16x16xf32>
    %c6_150 = arith.constant 6 : index
    %c0_151 = arith.constant 0 : index
    %205 = vector.load %arg8[%c6_150, %c0_151] : memref<9x16xf32, #tpu.memory_space<vmem>>, vector<1x16xf32>
    %206 = vector.shape_cast %205 : vector<1x16xf32> to vector<16xf32>
    %207 = vector.shape_cast %206 : vector<16xf32> to vector<1x1x16xf32>
    %208 = vector.broadcast %207 : vector<1x1x16xf32> to vector<16x16x16xf32>
    %209 = arith.mulf %204, %208 : vector<16x16x16xf32>
    %210 = arith.addf %203, %209 : vector<16x16x16xf32>
    %c2_152 = arith.constant 2 : index
    %c1_153 = arith.constant 1 : index
    %c0_154 = arith.constant 0 : index
    %211 = vector.load %arg14[%c2_152, %c1_153, %c0_154] : memref<18x18x16xf32, #tpu.memory_space<vmem>>, vector<16x16x16xf32>
    %c7_155 = arith.constant 7 : index
    %c0_156 = arith.constant 0 : index
    %212 = vector.load %arg8[%c7_155, %c0_156] : memref<9x16xf32, #tpu.memory_space<vmem>>, vector<1x16xf32>
    %213 = vector.shape_cast %212 : vector<1x16xf32> to vector<16xf32>
    %214 = vector.shape_cast %213 : vector<16xf32> to vector<1x1x16xf32>
    %215 = vector.broadcast %214 : vector<1x1x16xf32> to vector<16x16x16xf32>
    %216 = arith.mulf %211, %215 : vector<16x16x16xf32>
    %217 = arith.addf %210, %216 : vector<16x16x16xf32>
    %c2_157 = arith.constant 2 : index
    %c2_158 = arith.constant 2 : index
    %c0_159 = arith.constant 0 : index
    %218 = vector.load %arg14[%c2_157, %c2_158, %c0_159] : memref<18x18x16xf32, #tpu.memory_space<vmem>>, vector<16x16x16xf32>
    %c8_160 = arith.constant 8 : index
    %c0_161 = arith.constant 0 : index
    %219 = vector.load %arg8[%c8_160, %c0_161] : memref<9x16xf32, #tpu.memory_space<vmem>>, vector<1x16xf32>
    %220 = vector.shape_cast %219 : vector<1x16xf32> to vector<16xf32>
    %221 = vector.shape_cast %220 : vector<16xf32> to vector<1x1x16xf32>
    %222 = vector.broadcast %221 : vector<1x1x16xf32> to vector<16x16x16xf32>
    %223 = arith.mulf %218, %222 : vector<16x16x16xf32>
    %224 = arith.addf %217, %223 : vector<16x16x16xf32>
    %225 = vector.extract_strided_slice %224 {offsets = [0, 0, 0], sizes = [1, 16, 16], strides = [1, 1, 1]} : vector<16x16x16xf32> to vector<1x16x16xf32>
    %226 = vector.extract_strided_slice %224 {offsets = [2, 0, 0], sizes = [1, 16, 16], strides = [1, 1, 1]} : vector<16x16x16xf32> to vector<1x16x16xf32>
    %227 = vector.extract_strided_slice %224 {offsets = [4, 0, 0], sizes = [1, 16, 16], strides = [1, 1, 1]} : vector<16x16x16xf32> to vector<1x16x16xf32>
    %228 = vector.extract_strided_slice %224 {offsets = [6, 0, 0], sizes = [1, 16, 16], strides = [1, 1, 1]} : vector<16x16x16xf32> to vector<1x16x16xf32>
    %229 = vector.extract_strided_slice %224 {offsets = [8, 0, 0], sizes = [1, 16, 16], strides = [1, 1, 1]} : vector<16x16x16xf32> to vector<1x16x16xf32>
    %230 = vector.extract_strided_slice %224 {offsets = [10, 0, 0], sizes = [1, 16, 16], strides = [1, 1, 1]} : vector<16x16x16xf32> to vector<1x16x16xf32>
    %231 = vector.extract_strided_slice %224 {offsets = [12, 0, 0], sizes = [1, 16, 16], strides = [1, 1, 1]} : vector<16x16x16xf32> to vector<1x16x16xf32>
    %232 = vector.extract_strided_slice %224 {offsets = [14, 0, 0], sizes = [1, 16, 16], strides = [1, 1, 1]} : vector<16x16x16xf32> to vector<1x16x16xf32>
    %233 = tpu.concatenate %225, %226, %227, %228, %229, %230, %231, %232 in 0 : vector<1x16x16xf32>, vector<1x16x16xf32>, vector<1x16x16xf32>, vector<1x16x16xf32>, vector<1x16x16xf32>, vector<1x16x16xf32>, vector<1x16x16xf32>, vector<1x16x16xf32> -> vector<8x16x16xf32>
    %234 = vector.extract_strided_slice %233 {offsets = [0, 0, 0], sizes = [8, 1, 16], strides = [1, 1, 1]} : vector<8x16x16xf32> to vector<8x1x16xf32>
    %235 = vector.extract_strided_slice %233 {offsets = [0, 2, 0], sizes = [8, 1, 16], strides = [1, 1, 1]} : vector<8x16x16xf32> to vector<8x1x16xf32>
    %236 = vector.extract_strided_slice %233 {offsets = [0, 4, 0], sizes = [8, 1, 16], strides = [1, 1, 1]} : vector<8x16x16xf32> to vector<8x1x16xf32>
    %237 = vector.extract_strided_slice %233 {offsets = [0, 6, 0], sizes = [8, 1, 16], strides = [1, 1, 1]} : vector<8x16x16xf32> to vector<8x1x16xf32>
    %238 = vector.extract_strided_slice %233 {offsets = [0, 8, 0], sizes = [8, 1, 16], strides = [1, 1, 1]} : vector<8x16x16xf32> to vector<8x1x16xf32>
    %239 = vector.extract_strided_slice %233 {offsets = [0, 10, 0], sizes = [8, 1, 16], strides = [1, 1, 1]} : vector<8x16x16xf32> to vector<8x1x16xf32>
    %240 = vector.extract_strided_slice %233 {offsets = [0, 12, 0], sizes = [8, 1, 16], strides = [1, 1, 1]} : vector<8x16x16xf32> to vector<8x1x16xf32>
    %241 = vector.extract_strided_slice %233 {offsets = [0, 14, 0], sizes = [8, 1, 16], strides = [1, 1, 1]} : vector<8x16x16xf32> to vector<8x1x16xf32>
    %242 = tpu.concatenate %234, %235, %236, %237, %238, %239, %240, %241 in 1 : vector<8x1x16xf32>, vector<8x1x16xf32>, vector<8x1x16xf32>, vector<8x1x16xf32>, vector<8x1x16xf32>, vector<8x1x16xf32>, vector<8x1x16xf32>, vector<8x1x16xf32> -> vector<8x8x16xf32>
    %243 = vector.shape_cast %242 : vector<8x8x16xf32> to vector<64x16xf32>
    %c0_162 = arith.constant 0 : index
    %c0_163 = arith.constant 0 : index
    %244 = vector.load %arg9[%c0_162, %c0_163] : memref<16x16xf32, #tpu.memory_space<vmem>>, vector<16x16xf32>
    %cst_164 = arith.constant dense<0.000000e+00> : vector<64x16xf32>
    %245 = tpu.matmul %243, %244, %cst_164 {dimension_numbers = #tpu.dot_dimension_numbers<[1], [0], [0], [1], [0, 0, 1, 1], [], []>} : vector<64x16xf32>, vector<16x16xf32>, vector<64x16xf32> -> vector<64x16xf32>
    %246 = vector.extract_strided_slice %5 {offsets = [0, 0, 0], sizes = [1, 16, 8], strides = [1, 1, 1]} : vector<16x16x8xf32> to vector<1x16x8xf32>
    %247 = vector.extract_strided_slice %5 {offsets = [2, 0, 0], sizes = [1, 16, 8], strides = [1, 1, 1]} : vector<16x16x8xf32> to vector<1x16x8xf32>
    %248 = vector.extract_strided_slice %5 {offsets = [4, 0, 0], sizes = [1, 16, 8], strides = [1, 1, 1]} : vector<16x16x8xf32> to vector<1x16x8xf32>
    %249 = vector.extract_strided_slice %5 {offsets = [6, 0, 0], sizes = [1, 16, 8], strides = [1, 1, 1]} : vector<16x16x8xf32> to vector<1x16x8xf32>
    %250 = vector.extract_strided_slice %5 {offsets = [8, 0, 0], sizes = [1, 16, 8], strides = [1, 1, 1]} : vector<16x16x8xf32> to vector<1x16x8xf32>
    %251 = vector.extract_strided_slice %5 {offsets = [10, 0, 0], sizes = [1, 16, 8], strides = [1, 1, 1]} : vector<16x16x8xf32> to vector<1x16x8xf32>
    %252 = vector.extract_strided_slice %5 {offsets = [12, 0, 0], sizes = [1, 16, 8], strides = [1, 1, 1]} : vector<16x16x8xf32> to vector<1x16x8xf32>
    %253 = vector.extract_strided_slice %5 {offsets = [14, 0, 0], sizes = [1, 16, 8], strides = [1, 1, 1]} : vector<16x16x8xf32> to vector<1x16x8xf32>
    %254 = tpu.concatenate %246, %247, %248, %249, %250, %251, %252, %253 in 0 : vector<1x16x8xf32>, vector<1x16x8xf32>, vector<1x16x8xf32>, vector<1x16x8xf32>, vector<1x16x8xf32>, vector<1x16x8xf32>, vector<1x16x8xf32>, vector<1x16x8xf32> -> vector<8x16x8xf32>
    %255 = vector.extract_strided_slice %254 {offsets = [0, 0, 0], sizes = [8, 1, 8], strides = [1, 1, 1]} : vector<8x16x8xf32> to vector<8x1x8xf32>
    %256 = vector.extract_strided_slice %254 {offsets = [0, 2, 0], sizes = [8, 1, 8], strides = [1, 1, 1]} : vector<8x16x8xf32> to vector<8x1x8xf32>
    %257 = vector.extract_strided_slice %254 {offsets = [0, 4, 0], sizes = [8, 1, 8], strides = [1, 1, 1]} : vector<8x16x8xf32> to vector<8x1x8xf32>
    %258 = vector.extract_strided_slice %254 {offsets = [0, 6, 0], sizes = [8, 1, 8], strides = [1, 1, 1]} : vector<8x16x8xf32> to vector<8x1x8xf32>
    %259 = vector.extract_strided_slice %254 {offsets = [0, 8, 0], sizes = [8, 1, 8], strides = [1, 1, 1]} : vector<8x16x8xf32> to vector<8x1x8xf32>
    %260 = vector.extract_strided_slice %254 {offsets = [0, 10, 0], sizes = [8, 1, 8], strides = [1, 1, 1]} : vector<8x16x8xf32> to vector<8x1x8xf32>
    %261 = vector.extract_strided_slice %254 {offsets = [0, 12, 0], sizes = [8, 1, 8], strides = [1, 1, 1]} : vector<8x16x8xf32> to vector<8x1x8xf32>
    %262 = vector.extract_strided_slice %254 {offsets = [0, 14, 0], sizes = [8, 1, 8], strides = [1, 1, 1]} : vector<8x16x8xf32> to vector<8x1x8xf32>
    %263 = tpu.concatenate %255, %256, %257, %258, %259, %260, %261, %262 in 1 : vector<8x1x8xf32>, vector<8x1x8xf32>, vector<8x1x8xf32>, vector<8x1x8xf32>, vector<8x1x8xf32>, vector<8x1x8xf32>, vector<8x1x8xf32>, vector<8x1x8xf32> -> vector<8x8x8xf32>
    %264 = vector.shape_cast %263 : vector<8x8x8xf32> to vector<64x8xf32>
    %c0_165 = arith.constant 0 : index
    %c0_166 = arith.constant 0 : index
    %265 = vector.load %arg10[%c0_165, %c0_166] : memref<8x16xf32, #tpu.memory_space<vmem>>, vector<8x16xf32>
    %cst_167 = arith.constant dense<0.000000e+00> : vector<64x16xf32>
    %266 = tpu.matmul %264, %265, %cst_167 {dimension_numbers = #tpu.dot_dimension_numbers<[1], [0], [0], [1], [0, 0, 1, 1], [], []>} : vector<64x8xf32>, vector<8x16xf32>, vector<64x16xf32> -> vector<64x16xf32>
    %267 = arith.addf %245, %266 : vector<64x16xf32>
    %c0_168 = arith.constant 0 : index
    %c0_169 = arith.constant 0 : index
    %268 = vector.load %arg11[%c0_168, %c0_169] : memref<1x16xf32, #tpu.memory_space<vmem>>, vector<1x16xf32>
    %269 = vector.shape_cast %268 : vector<1x16xf32> to vector<16xf32>
    %270 = vector.shape_cast %269 : vector<16xf32> to vector<1x16xf32>
    %271 = vector.broadcast %270 : vector<1x16xf32> to vector<64x16xf32>
    %272 = arith.addf %267, %271 : vector<64x16xf32>
    %273 = vector.shape_cast %272 : vector<64x16xf32> to vector<8x8x16xf32>
    %c0_170 = arith.constant 0 : index
    %c0_171 = arith.constant 0 : index
    %c0_172 = arith.constant 0 : index
    %c0_173 = arith.constant 0 : index
    %274 = vector.load %arg12[%c0_170, %c0_171, %c0_172, %c0_173] : memref<1x8x8x16xf32, #tpu.memory_space<vmem>>, vector<1x8x8x16xf32>
    %275 = vector.shape_cast %274 : vector<1x8x8x16xf32> to vector<8x8x16xf32>
    %276 = vector.shape_cast %273 : vector<8x8x16xf32> to vector<1x8x8x16xf32>
    tpu.vector_store %arg12[%c0_170, %c0_171, %c0_172, %c0_173], %276 {strides = array<i32>} : memref<1x8x8x16xf32, #tpu.memory_space<vmem>>, vector<1x8x8x16xf32>,
    return
  }
  func.func @transform_0(%arg0: i32) -> (i32, i32, i32, i32) {
    %c0_i32 = arith.constant 0 : i32
    %c0_i32_0 = arith.constant 0 : i32
    %c0_i32_1 = arith.constant 0 : i32
    %c0_i32_2 = arith.constant 0 : i32
    return %arg0, %c0_i32, %c0_i32_0, %c0_i32_1 : i32, i32, i32, i32
  }
  func.func @transform_1(%arg0: i32) -> (i32, i32) {
    %c0_i32 = arith.constant 0 : i32
    %c0_i32_0 = arith.constant 0 : i32
    %c0_i32_1 = arith.constant 0 : i32
    return %c0_i32, %c0_i32_0 : i32, i32
  }
  func.func @transform_2(%arg0: i32) -> (i32, i32) {
    %c0_i32 = arith.constant 0 : i32
    %c0_i32_0 = arith.constant 0 : i32
    %c0_i32_1 = arith.constant 0 : i32
    return %c0_i32, %c0_i32_0 : i32, i32
  }
  func.func @transform_3(%arg0: i32) -> (i32, i32) {
    %c0_i32 = arith.constant 0 : i32
    %c0_i32_0 = arith.constant 0 : i32
    %c0_i32_1 = arith.constant 0 : i32
    return %c0_i32, %c0_i32_0 : i32, i32
  }
  func.func @transform_4(%arg0: i32) -> (i32, i32) {
    %c0_i32 = arith.constant 0 : i32
    %c0_i32_0 = arith.constant 0 : i32
    %c0_i32_1 = arith.constant 0 : i32
    return %c0_i32, %c0_i32_0 : i32, i32
  }
  func.func @transform_5(%arg0: i32) -> (i32, i32) {
    %c0_i32 = arith.constant 0 : i32
    %c0_i32_0 = arith.constant 0 : i32
    %c0_i32_1 = arith.constant 0 : i32
    return %c0_i32, %c0_i32_0 : i32, i32
  }
  func.func @transform_6(%arg0: i32) -> (i32, i32) {
    %c0_i32 = arith.constant 0 : i32
    %c0_i32_0 = arith.constant 0 : i32
    %c0_i32_1 = arith.constant 0 : i32
    return %c0_i32, %c0_i32_0 : i32, i32
  }
  func.func @transform_7(%arg0: i32) -> (i32, i32) {
    %c0_i32 = arith.constant 0 : i32
    %c0_i32_0 = arith.constant 0 : i32
    %c0_i32_1 = arith.constant 0 : i32
    return %c0_i32, %c0_i32_0 : i32, i32
  }
  func.func @transform_8(%arg0: i32) -> (i32, i32) {
    %c0_i32 = arith.constant 0 : i32
    %c0_i32_0 = arith.constant 0 : i32
    %c0_i32_1 = arith.constant 0 : i32
    return %c0_i32, %c0_i32_0 : i32, i32
  }
  func.func @transform_9(%arg0: i32) -> (i32, i32) {
    %c0_i32 = arith.constant 0 : i32
    %c0_i32_0 = arith.constant 0 : i32
    %c0_i32_1 = arith.constant 0 : i32
    return %c0_i32, %c0_i32_0 : i32, i32
  }
  func.func @transform_10(%arg0: i32) -> (i32, i32) {
    %c0_i32 = arith.constant 0 : i32
    %c0_i32_0 = arith.constant 0 : i32
    %c0_i32_1 = arith.constant 0 : i32
    return %c0_i32, %c0_i32_0 : i32, i32
  }
  func.func @transform_11(%arg0: i32) -> (i32, i32, i32, i32) {
    %c0_i32 = arith.constant 0 : i32
    %c0_i32_0 = arith.constant 0 : i32
    %c0_i32_1 = arith.constant 0 : i32
    %c0_i32_2 = arith.constant 0 : i32
    return %arg0, %c0_i32, %c0_i32_0, %c0_i32_1 : i32, i32, i32, i32
  }
}

</mosaic_0001>

<llo_original>
// kernel: block3_forward.1
$region0: #{block3_forward.1}
  #allocation0 [shape = 'u32[]', space=smem, size = 0x4, offset = 0x4, fixed_abs, tag = 'smem constant byte address 0x4 - core index']
  #allocation1 [shape = 'u32[144,128]{1,0:T(1,128)}', space=vmem, size = 0x12000, scoped, tag = 'internal scratch']
  #allocation2 [shape = 'f32[18,18,8]{2,1,0:T(8,128)}', space=vmem, size = 0x36000, scoped, tag = 'scratch operand']
  #allocation3 [shape = 'f32[18,18,16]{2,1,0:T(8,128)}', space=vmem, size = 0x36000, scoped, tag = 'scratch operand']
  %s0 = inlined_call_operand.vmem [shape: f32[2,16,16,8], index: 0, kind: input, shape index: {}]
  %s1 = inlined_call_operand.vmem [shape: f32[9,8], index: 1, kind: input, shape index: {}]
  %s2 = inlined_call_operand.vmem [shape: f32[8,16], index: 2, kind: input, shape index: {}]
  %s3 = inlined_call_operand.vmem [shape: f32[1,16], index: 3, kind: input, shape index: {}]
  %s4 = inlined_call_operand.vmem [shape: f32[9,16], index: 4, kind: input, shape index: {}]
  %s5 = inlined_call_operand.vmem [shape: f32[16,16], index: 5, kind: input, shape index: {}]
  %s6 = inlined_call_operand.vmem [shape: f32[1,16], index: 6, kind: input, shape index: {}]
  %s7 = inlined_call_operand.vmem [shape: f32[9,16], index: 7, kind: input, shape index: {}]
  %s8 = inlined_call_operand.vmem [shape: f32[16,16], index: 8, kind: input, shape index: {}]
  %s9 = inlined_call_operand.vmem [shape: f32[8,16], index: 9, kind: input, shape index: {}]
  %s10 = inlined_call_operand.vmem [shape: f32[1,16], index: 10, kind: input, shape index: {}]
  %s11 = inlined_call_operand.hbm [shape: f32[2,8,8,16], index: 11, kind: output, shape index: {}]
  %s12 = sld [smem:[#allocation0]]
  $region77: #{block3_forward.1} parent=0
    _
  %s14 = ssub.s32 1, %s12
  %s15 = scalar_select 0, %s14, %s12
  $region1: #{block3_forward.1} parent=0
    #allocation4 [shape = 'u8[65536]{0}', space=vmem, size = 0x10000, scoped, tag = 'output window, operand 0']
    #allocation5 [shape = 's32[2]{0}', space=sflag, size = 0x8, scoped, tag = 'scoped memory for block3_forward.1']
    %16 = vsyncpa [#allocation5], 0
    %s17 = scalar_lea.sflag [#allocation5], 1
    %18 = vsyncpa %s17, 0
    loop: start=0, step=1, limit=4
    $region2: #{block3_forward.1} parent=1 // loop_pre_header
      _
    $region3: #{block3_forward.1} parent=1 // loop_header
      %s20 = sphi 0, %s24
      %p21 = scmp.ge.s32.totalorder %s20, 4
      %s30 = sphi 0, %s32
      %s33 = sphi 0, %s30
      %s34 = sphi 0, %s33
      %s50 = sphi 0, %s34
      %s54 = sphi 0, %s54
      %s56 = sphi 0, %s54
      %s57 = sphi 0, %s56
      %s71 = sphi 0, %s57
      %s75 = sphi 0, %s75
      %s77 = sphi 0, %s75
      %s78 = sphi 0, %s77
      %s92 = sphi 0, %s78
      %s96 = sphi 0, %s96
      %s98 = sphi 0, %s96
      %s99 = sphi 0, %s98
      %s113 = sphi 0, %s99
      %s117 = sphi 0, %s117
      %s119 = sphi 0, %s117
      %s120 = sphi 0, %s119
      %s134 = sphi 0, %s120
      %s138 = sphi 0, %s138
      %s140 = sphi 0, %s138
      %s141 = sphi 0, %s140
      %s155 = sphi 0, %s141
      %s159 = sphi 0, %s159
      %s161 = sphi 0, %s159
      %s162 = sphi 0, %s161
      %s176 = sphi 0, %s162
      %s180 = sphi 0, %s180
      %s182 = sphi 0, %s180
      %s183 = sphi 0, %s182
      %s197 = sphi 0, %s183
      %s201 = sphi 0, %s201
      %s203 = sphi 0, %s201
      %s204 = sphi 0, %s203
      %s218 = sphi 0, %s204
      %s222 = sphi 0, %s222
      %s224 = sphi 0, %s222
      %s225 = sphi 0, %s224
      %s239 = sphi 0, %s225
      %s243 = sphi 0, %s243
      %s245 = sphi 0, %s243
      %s246 = sphi 0, %s245
      %s260 = sphi 0, %s246
      %s266 = sphi 0, %s268
      %s269 = sphi 0, %s266
      %s270 = sphi 0, %s269
      %s286 = sphi 0, %s270
    $region4: #{block3_forward.1} parent=1 // loop_header_branch
      %23 = sbr.rel (%p21) target = $region8
    $region5: #{block3_forward.1} parent=1 // loop_body
      %s25 = ssub.s32 %s20, 1
      %s26 = ssub.s32 %s20, 2
      %s27 = sadd.s32 %s20, 1
      %s28 = ssub.s32 %s20, %s27
      %p29 = scmp.eq.s32.totalorder %s28, 0
      %s31 = sadd.s32 %s30, 1
      %s32 = scalar_select %p29, %s30, %s31
      %p35 = pneg %p29
      %p36 = scmp.eq.s32.totalorder %s20, 1
      %p37 = por %p35, %p36
      %p38 = scmp.ne.s32.totalorder %s30, %s33
      %p39 = scmp.eq.s32.totalorder %s20, 0
      %p40 = por %p38, %p39
      %p41 = scmp.ne.s32.totalorder %s30, %s33
      %p42 = scmp.eq.s32.totalorder %s25, 1
      %p43 = por %p41, %p42
      %p44 = scmp.ne.s32.totalorder %s33, %s34
      %p45 = scmp.eq.s32.totalorder %s25, 0
      %p46 = por %p44, %p45
      %p47 = scmp.ne.s32.totalorder %s33, %s34
      %p48 = scmp.eq.s32.totalorder %s26, 1
      %p49 = por %p47, %p48
      %p51 = scmp.ne.s32.totalorder %s34, %s50
      %p52 = scmp.eq.s32.totalorder %s26, 0
      %p53 = por %p51, %p52
      %s55 = sadd.s32 %s54, 1
      %p58 = scmp.eq.s32.totalorder %s20, 1
      %p59 = scmp.ne.s32.totalorder %s54, %s56
      %p60 = scmp.eq.s32.totalorder %s20, 0
      %p61 = por %p59, %p60
      %p62 = scmp.ne.s32.totalorder %s54, %s56
      %p63 = scmp.eq.s32.totalorder %s25, 1
      %p64 = por %p62, %p63
      %p65 = scmp.ne.s32.totalorder %s56, %s57
      %p66 = scmp.eq.s32.totalorder %s25, 0
      %p67 = por %p65, %p66
      %p68 = scmp.ne.s32.totalorder %s56, %s57
      %p69 = scmp.eq.s32.totalorder %s26, 1
      %p70 = por %p68, %p69
      %p72 = scmp.ne.s32.totalorder %s57, %s71
      %p73 = scmp.eq.s32.totalorder %s26, 0
      %p74 = por %p72, %p73
      %s76 = sadd.s32 %s75, 1
      %p79 = scmp.eq.s32.totalorder %s20, 1
      %p80 = scmp.ne.s32.totalorder %s75, %s77
      %p81 = scmp.eq.s32.totalorder %s20, 0
      %p82 = por %p80, %p81
      %p83 = scmp.ne.s32.totalorder %s75, %s77
      %p84 = scmp.eq.s32.totalorder %s25, 1
      %p85 = por %p83, %p84
      %p86 = scmp.ne.s32.totalorder %s77, %s78
      %p87 = scmp.eq.s32.totalorder %s25, 0
      %p88 = por %p86, %p87
      %p89 = scmp.ne.s32.totalorder %s77, %s78
      %p90 = scmp.eq.s32.totalorder %s26, 1
      %p91 = por %p89, %p90
      %p93 = scmp.ne.s32.totalorder %s78, %s92
      %p94 = scmp.eq.s32.totalorder %s26, 0
      %p95 = por %p93, %p94
      %s97 = sadd.s32 %s96, 1
      %p100 = scmp.eq.s32.totalorder %s20, 1
      %p101 = scmp.ne.s32.totalorder %s96, %s98
      %p102 = scmp.eq.s32.totalorder %s20, 0
      %p103 = por %p101, %p102
      %p104 = scmp.ne.s32.totalorder %s96, %s98
      %p105 = scmp.eq.s32.totalorder %s25, 1
      %p106 = por %p104, %p105
      %p107 = scmp.ne.s32.totalorder %s98, %s99
      %p108 = scmp.eq.s32.totalorder %s25, 0
      %p109 = por %p107, %p108
      %p110 = scmp.ne.s32.totalorder %s98, %s99
      %p111 = scmp.eq.s32.totalorder %s26, 1
      %p112 = por %p110, %p111
      %p114 = scmp.ne.s32.totalorder %s99, %s113
      %p115 = scmp.eq.s32.totalorder %s26, 0
      %p116 = por %p114, %p115
      %s118 = sadd.s32 %s117, 1
      %p121 = scmp.eq.s32.totalorder %s20, 1
      %p122 = scmp.ne.s32.totalorder %s117, %s119
      %p123 = scmp.eq.s32.totalorder %s20, 0
      %p124 = por %p122, %p123
      %p125 = scmp.ne.s32.totalorder %s117, %s119
      %p126 = scmp.eq.s32.totalorder %s25, 1
      %p127 = por %p125, %p126
      %p128 = scmp.ne.s32.totalorder %s119, %s120
      %p129 = scmp.eq.s32.totalorder %s25, 0
      %p130 = por %p128, %p129
      %p131 = scmp.ne.s32.totalorder %s119, %s120
      %p132 = scmp.eq.s32.totalorder %s26, 1
      %p133 = por %p131, %p132
      %p135 = scmp.ne.s32.totalorder %s120, %s134
      %p136 = scmp.eq.s32.totalorder %s26, 0
      %p137 = por %p135, %p136
      %s139 = sadd.s32 %s138, 1
      %p142 = scmp.eq.s32.totalorder %s20, 1
      %p143 = scmp.ne.s32.totalorder %s138, %s140
      %p144 = scmp.eq.s32.totalorder %s20, 0
      %p145 = por %p143, %p144
      %p146 = scmp.ne.s32.totalorder %s138, %s140
      %p147 = scmp.eq.s32.totalorder %s25, 1
      %p148 = por %p146, %p147
      %p149 = scmp.ne.s32.totalorder %s140, %s141
      %p150 = scmp.eq.s32.totalorder %s25, 0
      %p151 = por %p149, %p150
      %p152 = scmp.ne.s32.totalorder %s140, %s141
      %p153 = scmp.eq.s32.totalorder %s26, 1
      %p154 = por %p152, %p153
      %p156 = scmp.ne.s32.totalorder %s141, %s155
      %p157 = scmp.eq.s32.totalorder %s26, 0
      %p158 = por %p156, %p157
      %s160 = sadd.s32 %s159, 1
      %p163 = scmp.eq.s32.totalorder %s20, 1
      %p164 = scmp.ne.s32.totalorder %s159, %s161
      %p165 = scmp.eq.s32.totalorder %s20, 0
      %p166 = por %p164, %p165
      %p167 = scmp.ne.s32.totalorder %s159, %s161
      %p168 = scmp.eq.s32.totalorder %s25, 1
      %p169 = por %p167, %p168
      %p170 = scmp.ne.s32.totalorder %s161, %s162
      %p171 = scmp.eq.s32.totalorder %s25, 0
      %p172 = por %p170, %p171
      %p173 = scmp.ne.s32.totalorder %s161, %s162
      %p174 = scmp.eq.s32.totalorder %s26, 1
      %p175 = por %p173, %p174
      %p177 = scmp.ne.s32.totalorder %s162, %s176
      %p178 = scmp.eq.s32.totalorder %s26, 0
      %p179 = por %p177, %p178
      %s181 = sadd.s32 %s180, 1
      %p184 = scmp.eq.s32.totalorder %s20, 1
      %p185 = scmp.ne.s32.totalorder %s180, %s182
      %p186 = scmp.eq.s32.totalorder %s20, 0
      %p187 = por %p185, %p186
      %p188 = scmp.ne.s32.totalorder %s180, %s182
      %p189 = scmp.eq.s32.totalorder %s25, 1
      %p190 = por %p188, %p189
      %p191 = scmp.ne.s32.totalorder %s182, %s183
      %p192 = scmp.eq.s32.totalorder %s25, 0
      %p193 = por %p191, %p192
      %p194 = scmp.ne.s32.totalorder %s182, %s183
      %p195 = scmp.eq.s32.totalorder %s26, 1
      %p196 = por %p194, %p195
      %p198 = scmp.ne.s32.totalorder %s183, %s197
      %p199 = scmp.eq.s32.totalorder %s26, 0
      %p200 = por %p198, %p199
      %s202 = sadd.s32 %s201, 1
      %p205 = scmp.eq.s32.totalorder %s20, 1
      %p206 = scmp.ne.s32.totalorder %s201, %s203
      %p207 = scmp.eq.s32.totalorder %s20, 0
      %p208 = por %p206, %p207
      %p209 = scmp.ne.s32.totalorder %s201, %s203
      %p210 = scmp.eq.s32.totalorder %s25, 1
      %p211 = por %p209, %p210
      %p212 = scmp.ne.s32.totalorder %s203, %s204
      %p213 = scmp.eq.s32.totalorder %s25, 0
      %p214 = por %p212, %p213
      %p215 = scmp.ne.s32.totalorder %s203, %s204
      %p216 = scmp.eq.s32.totalorder %s26, 1
      %p217 = por %p215, %p216
      %p219 = scmp.ne.s32.totalorder %s204, %s218
      %p220 = scmp.eq.s32.totalorder %s26, 0
      %p221 = por %p219, %p220
      %s223 = sadd.s32 %s222, 1
      %p226 = scmp.eq.s32.totalorder %s20, 1
      %p227 = scmp.ne.s32.totalorder %s222, %s224
      %p228 = scmp.eq.s32.totalorder %s20, 0
      %p229 = por %p227, %p228
      %p230 = scmp.ne.s32.totalorder %s222, %s224
      %p231 = scmp.eq.s32.totalorder %s25, 1
      %p232 = por %p230, %p231
      %p233 = scmp.ne.s32.totalorder %s224, %s225
      %p234 = scmp.eq.s32.totalorder %s25, 0
      %p235 = por %p233, %p234
      %p236 = scmp.ne.s32.totalorder %s224, %s225
      %p237 = scmp.eq.s32.totalorder %s26, 1
      %p238 = por %p236, %p237
      %p240 = scmp.ne.s32.totalorder %s225, %s239
      %p241 = scmp.eq.s32.totalorder %s26, 0
      %p242 = por %p240, %p241
      %s244 = sadd.s32 %s243, 1
      %p247 = scmp.eq.s32.totalorder %s20, 1
      %p248 = scmp.ne.s32.totalorder %s243, %s245
      %p249 = scmp.eq.s32.totalorder %s20, 0
      %p250 = por %p248, %p249
      %p251 = scmp.ne.s32.totalorder %s243, %s245
      %p252 = scmp.eq.s32.totalorder %s25, 1
      %p253 = por %p251, %p252
      %p254 = scmp.ne.s32.totalorder %s245, %s246
      %p255 = scmp.eq.s32.totalorder %s25, 0
      %p256 = por %p254, %p255
      %p257 = scmp.ne.s32.totalorder %s245, %s246
      %p258 = scmp.eq.s32.totalorder %s26, 1
      %p259 = por %p257, %p258
      %p261 = scmp.ne.s32.totalorder %s246, %s260
      %p262 = scmp.eq.s32.totalorder %s26, 0
      %p263 = por %p261, %p262
      %s264 = ssub.s32 %s20, %s27
      %p265 = scmp.eq.s32.totalorder %s264, 0
      %s267 = sadd.s32 %s266, 1
      %s268 = scalar_select %p265, %s266, %s267
      %p271 = pneg %p265
      %p272 = scmp.eq.s32.totalorder %s20, 1
      %p273 = por %p271, %p272
      %p274 = scmp.ne.s32.totalorder %s266, %s269
      %p275 = scmp.eq.s32.totalorder %s20, 0
      %p276 = por %p274, %p275
      %p277 = scmp.ne.s32.totalorder %s266, %s269
      %p278 = scmp.eq.s32.totalorder %s25, 1
      %p279 = por %p277, %p278
      %p280 = scmp.ne.s32.totalorder %s269, %s270
      %p281 = scmp.eq.s32.totalorder %s25, 0
      %p282 = por %p280, %p281
      %p283 = scmp.ne.s32.totalorder %s269, %s270
      %p284 = scmp.eq.s32.totalorder %s26, 1
      %p285 = por %p283, %p284
      %p287 = scmp.ne.s32.totalorder %s270, %s286
      %p288 = scmp.eq.s32.totalorder %s26, 0
      %p289 = por %p287, %p288
      %p290 = scmp.le.s32.totalorder 1, %s20
      %p291 = scmp.lt.s32.totalorder %s20, 3
      %p292 = pnand %p290, %p291
      %p293 = pneg %p292
      // Predicated region
      $region9: #{block3_forward.1} parent=5 // pred_check
        _
      $region10: #{block3_forward.1} parent=5 // pred_check_branch
        %295 = sbr.rel (%p292) target = $region12
      $region11: #{block3_forward.1} parent=5 // pred_region
        %s296 = ssub.s32 %s20, 1
        // Predicated region
        $region13: #{block3_forward.1} parent=11 // pred_check
          %p297 = pneg %p67
        $region14: #{block3_forward.1} parent=11 // pred_check_branch
          %299 = sbr.rel (%p297) target = $region16
        $region15: #{block3_forward.1} parent=11 // pred_region
          _
        $region16: #{block3_forward.1} parent=11 // pred_fallthru
          _
        // Predicated region
        $region17: #{block3_forward.1} parent=11 // pred_check
          %p300 = pneg %p88
        $region18: #{block3_forward.1} parent=11 // pred_check_branch
          %302 = sbr.rel (%p300) target = $region20
        $region19: #{block3_forward.1} parent=11 // pred_region
          _
        $region20: #{block3_forward.1} parent=11 // pred_fallthru
          _
        // Predicated region
        $region21: #{block3_forward.1} parent=11 // pred_check
          %p303 = pneg %p109
        $region22: #{block3_forward.1} parent=11 // pred_check_branch
          %305 = sbr.rel (%p303) target = $region24
        $region23: #{block3_forward.1} parent=11 // pred_region
          _
        $region24: #{block3_forward.1} parent=11 // pred_fallthru
          _
        // Predicated region
        $region25: #{block3_forward.1} parent=11 // pred_check
          %p306 = pneg %p130
        $region26: #{block3_forward.1} parent=11 // pred_check_branch
          %308 = sbr.rel (%p306) target = $region28
        $region27: #{block3_forward.1} parent=11 // pred_region
          _
        $region28: #{block3_forward.1} parent=11 // pred_fallthru
          _
        // Predicated region
        $region29: #{block3_forward.1} parent=11 // pred_check
          %p309 = pneg %p151
        $region30: #{block3_forward.1} parent=11 // pred_check_branch
          %311 = sbr.rel (%p309) target = $region32
        $region31: #{block3_forward.1} parent=11 // pred_region
          _
        $region32: #{block3_forward.1} parent=11 // pred_fallthru
          _
        // Predicated region
        $region33: #{block3_forward.1} parent=11 // pred_check
          %p312 = pneg %p172
        $region34: #{block3_forward.1} parent=11 // pred_check_branch
          %314 = sbr.rel (%p312) target = $region36
        $region35: #{block3_forward.1} parent=11 // pred_region
          _
        $region36: #{block3_forward.1} parent=11 // pred_fallthru
          _
        // Predicated region
        $region37: #{block3_forward.1} parent=11 // pred_check
          %p315 = pneg %p193
        $region38: #{block3_forward.1} parent=11 // pred_check_branch
          %317 = sbr.rel (%p315) target = $region40
        $region39: #{block3_forward.1} parent=11 // pred_region
          _
        $region40: #{block3_forward.1} parent=11 // pred_fallthru
          _
        // Predicated region
        $region41: #{block3_forward.1} parent=11 // pred_check
          %p318 = pneg %p214
        $region42: #{block3_forward.1} parent=11 // pred_check_branch
          %320 = sbr.rel (%p318) target = $region44
        $region43: #{block3_forward.1} parent=11 // pred_region
          _
        $region44: #{block3_forward.1} parent=11 // pred_fallthru
          _
        // Predicated region
        $region45: #{block3_forward.1} parent=11 // pred_check
          %p321 = pneg %p235
        $region46: #{block3_forward.1} parent=11 // pred_check_branch
          %323 = sbr.rel (%p321) target = $region48
        $region47: #{block3_forward.1} parent=11 // pred_region
          _
        $region48: #{block3_forward.1} parent=11 // pred_fallthru
          _
        // Predicated region
        $region49: #{block3_forward.1} parent=11 // pred_check
          %p324 = pneg %p256
        $region50: #{block3_forward.1} parent=11 // pred_check_branch
          %326 = sbr.rel (%p324) target = $region52
        $region51: #{block3_forward.1} parent=11 // pred_region
          _
        $region52: #{block3_forward.1} parent=11 // pred_fallthru
          _
      $region12: #{block3_forward.1} parent=5 // pred_fallthru
        _
      %p327 = scmp.lt.s32.totalorder %s20, 2
      // Predicated region
      $region53: #{block3_forward.1} parent=5 // pred_check
        %p328 = pneg %p327
      $region54: #{block3_forward.1} parent=5 // pred_check_branch
        %330 = sbr.rel (%p328) target = $region56
      $region55: #{block3_forward.1} parent=5 // pred_region
        // Predicated region
        $region57: #{block3_forward.1} parent=55 // pred_check
          %p331 = pneg %p40
        $region58: #{block3_forward.1} parent=55 // pred_check_branch
          %333 = sbr.rel (%p331) target = $region60
        $region59: #{block3_forward.1} parent=55 // pred_region
          %p334 = scmp.lt.s32.totalorder %s20, 1
          %s335 = scalar_select %p334, %s20, 1
          %s336 = smul.addr %s335, 32
          %s337 = smul.addr %s336, 8
          %s338 = scalar_lea.vmem %s0, %s337
        $region60: #{block3_forward.1} parent=55 // pred_fallthru
          _
      $region56: #{block3_forward.1} parent=5 // pred_fallthru
        _
      %p339 = scmp.le.s32.totalorder 1, %s20
      %p340 = scmp.lt.s32.totalorder %s20, 3
      %p341 = pnand %p339, %p340
      %p342 = pneg %p341
      // Predicated region
      $region61: #{block3_forward.1} parent=5 // pred_check
        _
      $region62: #{block3_forward.1} parent=5 // pred_check_branch
        %344 = sbr.rel (%p341) target = $region64
      $region63: #{block3_forward.1} parent=5 // pred_region
        %s345 = ssub.s32 %s20, 1
        %p346 = scmp.lt.s32.totalorder %s25, 1
        %s347 = scalar_select %p346, %s25, 1
        %s348 = smul.addr %s347, 32
        %s349 = smul.addr %s348, 8
        %s350 = scalar_lea.vmem %s0, %s349
        %p351 = pneg %p46
        %p352 = pneg %p43
        %p353 = pneg %p67
        %p354 = pneg %p64
        %p355 = pneg %p88
        %p356 = pneg %p85
        %p357 = pneg %p109
        %p358 = pneg %p106
        %p359 = pneg %p130
        %p360 = pneg %p127
        %p361 = pneg %p151
        %p362 = pneg %p148
        %p363 = pneg %p172
        %p364 = pneg %p169
        %p365 = pneg %p193
        %p366 = pneg %p190
        %p367 = pneg %p214
        %p368 = pneg %p211
        %p369 = pneg %p235
        %p370 = pneg %p232
        %p371 = pneg %p256
        %p372 = pneg %p253
        %p373 = pneg %p282
        %p374 = pneg %p279
        %s375 = sand.u32 %s269, 1
        %s376 = scalar_lea.sflag [#allocation5], %s375
        %s377 = sand.u32 %s269, 1
        %s378 = smul.addr %s377, 64
        %s379 = scalar_lea.vmem [#allocation4], %s378
        %p380 = scmp.lt.s32.totalorder %s25, 1
        %s381 = scalar_select %p380, %s25, 1
        %s382 = smul.addr %s381, 32
        %s383 = smul.addr %s382, 8
        %s384 = scalar_lea.vmem %s0, %s383
        %vm385 = vcmask 64512
        %386 = vst.msk [vmem:[#allocation2] sm:$0xff] %vm385, 0.0
        %387 = vst.msk [vmem:[#allocation2 + $0x8] sm:$0xff] %vm385, 0.0
        %vm388 = vcmask 58368
        %389 = vst.msk [vmem:[#allocation2 + $0x10] sm:$0x3] %vm388, 0.0
        %390 = vst.msk [vmem:[#allocation2 + $0x18] sm:$0xff] %vm385, 0.0
        %391 = vst.msk [vmem:[#allocation2 + $0x20] sm:$0xff] %vm385, 0.0
        %392 = vst.msk [vmem:[#allocation2 + $0x28] sm:$0x3] %vm388, 0.0
        %393 = vst.msk [vmem:[#allocation2 + $0x30] sm:$0xff] %vm385, 0.0
        %394 = vst.msk [vmem:[#allocation2 + $0x38] sm:$0xff] %vm385, 0.0
        %395 = vst.msk [vmem:[#allocation2 + $0x40] sm:$0x3] %vm388, 0.0
        %396 = vst.msk [vmem:[#allocation2 + $0x48] sm:$0xff] %vm385, 0.0
        %397 = vst.msk [vmem:[#allocation2 + $0x50] sm:$0xff] %vm385, 0.0
        %398 = vst.msk [vmem:[#allocation2 + $0x58] sm:$0x3] %vm388, 0.0
        %399 = vst.msk [vmem:[#allocation2 + $0x60] sm:$0xff] %vm385, 0.0
        %400 = vst.msk [vmem:[#allocation2 + $0x68] sm:$0xff] %vm385, 0.0
        %401 = vst.msk [vmem:[#allocation2 + $0x70] sm:$0x3] %vm388, 0.0
        %402 = vst.msk [vmem:[#allocation2 + $0x78] sm:$0xff] %vm385, 0.0
        %403 = vst.msk [vmem:[#allocation2 + $0x80] sm:$0xff] %vm385, 0.0
        %404 = vst.msk [vmem:[#allocation2 + $0x88] sm:$0x3] %vm388, 0.0
        %405 = vst.msk [vmem:[#allocation2 + $0x90] sm:$0xff] %vm385, 0.0
        %406 = vst.msk [vmem:[#allocation2 + $0x98] sm:$0xff] %vm385, 0.0
        %407 = vst.msk [vmem:[#allocation2 + $0xa0] sm:$0x3] %vm388, 0.0
        %408 = vst.msk [vmem:[#allocation2 + $0xa8] sm:$0xff] %vm385, 0.0
        %409 = vst.msk [vmem:[#allocation2 + $0xb0] sm:$0xff] %vm385, 0.0
        %410 = vst.msk [vmem:[#allocation2 + $0xb8] sm:$0x3] %vm388, 0.0
        %411 = vst.msk [vmem:[#allocation2 + $0xc0] sm:$0xff] %vm385, 0.0
        %412 = vst.msk [vmem:[#allocation2 + $0xc8] sm:$0xff] %vm385, 0.0
        %413 = vst.msk [vmem:[#allocation2 + $0xd0] sm:$0x3] %vm388, 0.0
        %414 = vst.msk [vmem:[#allocation2 + $0xd8] sm:$0xff] %vm385, 0.0
        %415 = vst.msk [vmem:[#allocation2 + $0xe0] sm:$0xff] %vm385, 0.0
        %416 = vst.msk [vmem:[#allocation2 + $0xe8] sm:$0x3] %vm388, 0.0
        %417 = vst.msk [vmem:[#allocation2 + $0xf0] sm:$0xff] %vm385, 0.0
        %418 = vst.msk [vmem:[#allocation2 + $0xf8] sm:$0xff] %vm385, 0.0
        %419 = vst.msk [vmem:[#allocation2 + $0x100] sm:$0x3] %vm388, 0.0
        %420 = vst.msk [vmem:[#allocation2 + $0x108] sm:$0xff] %vm385, 0.0
        %421 = vst.msk [vmem:[#allocation2 + $0x110] sm:$0xff] %vm385, 0.0
        %422 = vst.msk [vmem:[#allocation2 + $0x118] sm:$0x3] %vm388, 0.0
        %423 = vst.msk [vmem:[#allocation2 + $0x120] sm:$0xff] %vm385, 0.0
        %424 = vst.msk [vmem:[#allocation2 + $0x128] sm:$0xff] %vm385, 0.0
        %425 = vst.msk [vmem:[#allocation2 + $0x130] sm:$0x3] %vm388, 0.0
        %426 = vst.msk [vmem:[#allocation2 + $0x138] sm:$0xff] %vm385, 0.0
        %427 = vst.msk [vmem:[#allocation2 + $0x140] sm:$0xff] %vm385, 0.0
        %428 = vst.msk [vmem:[#allocation2 + $0x148] sm:$0x3] %vm388, 0.0
        %429 = vst.msk [vmem:[#allocation2 + $0x150] sm:$0xff] %vm385, 0.0
        %430 = vst.msk [vmem:[#allocation2 + $0x158] sm:$0xff] %vm385, 0.0
        %431 = vst.msk [vmem:[#allocation2 + $0x160] sm:$0x3] %vm388, 0.0
        %432 = vst.msk [vmem:[#allocation2 + $0x168] sm:$0xff] %vm385, 0.0
        %433 = vst.msk [vmem:[#allocation2 + $0x170] sm:$0xff] %vm385, 0.0
        %434 = vst.msk [vmem:[#allocation2 + $0x178] sm:$0x3] %vm388, 0.0
        %435 = vst.msk [vmem:[#allocation2 + $0x180] sm:$0xff] %vm385, 0.0
        %436 = vst.msk [vmem:[#allocation2 + $0x188] sm:$0xff] %vm385, 0.0
        %437 = vst.msk [vmem:[#allocation2 + $0x190] sm:$0x3] %vm388, 0.0
        %438 = vst.msk [vmem:[#allocation2 + $0x198] sm:$0xff] %vm385, 0.0
        %439 = vst.msk [vmem:[#allocation2 + $0x1a0] sm:$0xff] %vm385, 0.0
        %440 = vst.msk [vmem:[#allocation2 + $0x1a8] sm:$0x3] %vm388, 0.0
        %vm441 = vcmask 130048
        %442 = vst.msk [vmem:[#allocation3] sm:$0xff] %vm441, 0.0
        %443 = vst.msk [vmem:[#allocation3 + $0x8] sm:$0xff] %vm441, 0.0
        %vm444 = vcmask 123904
        %445 = vst.msk [vmem:[#allocation3 + $0x10] sm:$0x3] %vm444, 0.0
        %446 = vst.msk [vmem:[#allocation3 + $0x18] sm:$0xff] %vm441, 0.0
        %447 = vst.msk [vmem:[#allocation3 + $0x20] sm:$0xff] %vm441, 0.0
        %448 = vst.msk [vmem:[#allocation3 + $0x28] sm:$0x3] %vm444, 0.0
        %449 = vst.msk [vmem:[#allocation3 + $0x30] sm:$0xff] %vm441, 0.0
        %450 = vst.msk [vmem:[#allocation3 + $0x38] sm:$0xff] %vm441, 0.0
        %451 = vst.msk [vmem:[#allocation3 + $0x40] sm:$0x3] %vm444, 0.0
        %452 = vst.msk [vmem:[#allocation3 + $0x48] sm:$0xff] %vm441, 0.0
        %453 = vst.msk [vmem:[#allocation3 + $0x50] sm:$0xff] %vm441, 0.0
        %454 = vst.msk [vmem:[#allocation3 + $0x58] sm:$0x3] %vm444, 0.0
        %455 = vst.msk [vmem:[#allocation3 + $0x60] sm:$0xff] %vm441, 0.0
        %456 = vst.msk [vmem:[#allocation3 + $0x68] sm:$0xff] %vm441, 0.0
        %457 = vst.msk [vmem:[#allocation3 + $0x70] sm:$0x3] %vm444, 0.0
        %458 = vst.msk [vmem:[#allocation3 + $0x78] sm:$0xff] %vm441, 0.0
        %459 = vst.msk [vmem:[#allocation3 + $0x80] sm:$0xff] %vm441, 0.0
        %460 = vst.msk [vmem:[#allocation3 + $0x88] sm:$0x3] %vm444, 0.0
        %461 = vst.msk [vmem:[#allocation3 + $0x90] sm:$0xff] %vm441, 0.0
        %462 = vst.msk [vmem:[#allocation3 + $0x98] sm:$0xff] %vm441, 0.0
        %463 = vst.msk [vmem:[#allocation3 + $0xa0] sm:$0x3] %vm444, 0.0
        %464 = vst.msk [vmem:[#allocation3 + $0xa8] sm:$0xff] %vm441, 0.0
        %465 = vst.msk [vmem:[#allocation3 + $0xb0] sm:$0xff] %vm441, 0.0
        %466 = vst.msk [vmem:[#allocation3 + $0xb8] sm:$0x3] %vm444, 0.0
        %467 = vst.msk [vmem:[#allocation3 + $0xc0] sm:$0xff] %vm441, 0.0
        %468 = vst.msk [vmem:[#allocation3 + $0xc8] sm:$0xff] %vm441, 0.0
        %469 = vst.msk [vmem:[#allocation3 + $0xd0] sm:$0x3] %vm444, 0.0
        %470 = vst.msk [vmem:[#allocation3 + $0xd8] sm:$0xff] %vm441, 0.0
        %471 = vst.msk [vmem:[#allocation3 + $0xe0] sm:$0xff] %vm441, 0.0
        %472 = vst.msk [vmem:[#allocation3 + $0xe8] sm:$0x3] %vm444, 0.0
        %473 = vst.msk [vmem:[#allocation3 + $0xf0] sm:$0xff] %vm441, 0.0
        %474 = vst.msk [vmem:[#allocation3 + $0xf8] sm:$0xff] %vm441, 0.0
        %475 = vst.msk [vmem:[#allocation3 + $0x100] sm:$0x3] %vm444, 0.0
        %476 = vst.msk [vmem:[#allocation3 + $0x108] sm:$0xff] %vm441, 0.0
        %477 = vst.msk [vmem:[#allocation3 + $0x110] sm:$0xff] %vm441, 0.0
        %478 = vst.msk [vmem:[#allocation3 + $0x118] sm:$0x3] %vm444, 0.0
        %479 = vst.msk [vmem:[#allocation3 + $0x120] sm:$0xff] %vm441, 0.0
        %480 = vst.msk [vmem:[#allocation3 + $0x128] sm:$0xff] %vm441, 0.0
        %481 = vst.msk [vmem:[#allocation3 + $0x130] sm:$0x3] %vm444, 0.0
        %482 = vst.msk [vmem:[#allocation3 + $0x138] sm:$0xff] %vm441, 0.0
        %483 = vst.msk [vmem:[#allocation3 + $0x140] sm:$0xff] %vm441, 0.0
        %484 = vst.msk [vmem:[#allocation3 + $0x148] sm:$0x3] %vm444, 0.0
        %485 = vst.msk [vmem:[#allocation3 + $0x150] sm:$0xff] %vm441, 0.0
        %486 = vst.msk [vmem:[#allocation3 + $0x158] sm:$0xff] %vm441, 0.0
        %487 = vst.msk [vmem:[#allocation3 + $0x160] sm:$0x3] %vm444, 0.0
        %488 = vst.msk [vmem:[#allocation3 + $0x168] sm:$0xff] %vm441, 0.0
        %489 = vst.msk [vmem:[#allocation3 + $0x170] sm:$0xff] %vm441, 0.0
        %490 = vst.msk [vmem:[#allocation3 + $0x178] sm:$0x3] %vm444, 0.0
        %491 = vst.msk [vmem:[#allocation3 + $0x180] sm:$0xff] %vm441, 0.0
        %492 = vst.msk [vmem:[#allocation3 + $0x188] sm:$0xff] %vm441, 0.0
        %493 = vst.msk [vmem:[#allocation3 + $0x190] sm:$0x3] %vm444, 0.0
        %494 = vst.msk [vmem:[#allocation3 + $0x198] sm:$0xff] %vm441, 0.0
        %495 = vst.msk [vmem:[#allocation3 + $0x1a0] sm:$0xff] %vm441, 0.0
        %496 = vst.msk [vmem:[#allocation3 + $0x1a8] sm:$0x3] %vm444, 0.0
        %v497 = vld [vmem:[%s384] sm:$0xff]
        %v498 = vld [vmem:[%s384 + $0x8] sm:$0xff]
        %v499 = vld [vmem:[%s384 + $0x10] sm:$0xff]
        %v500 = vld [vmem:[%s384 + $0x18] sm:$0xff]
        %v501 = vld [vmem:[%s384 + $0x20] sm:$0xff]
        %v502 = vld [vmem:[%s384 + $0x28] sm:$0xff]
        %v503 = vld [vmem:[%s384 + $0x30] sm:$0xff]
        %v504 = vld [vmem:[%s384 + $0x38] sm:$0xff]
        %v505 = vld [vmem:[%s384 + $0x40] sm:$0xff]
        %v506 = vld [vmem:[%s384 + $0x48] sm:$0xff]
        %v507 = vld [vmem:[%s384 + $0x50] sm:$0xff]
        %v508 = vld [vmem:[%s384 + $0x58] sm:$0xff]
        %v509 = vld [vmem:[%s384 + $0x60] sm:$0xff]
        %v510 = vld [vmem:[%s384 + $0x68] sm:$0xff]
        %v511 = vld [vmem:[%s384 + $0x70] sm:$0xff]
        %v512 = vld [vmem:[%s384 + $0x78] sm:$0xff]
        %v513 = vld [vmem:[%s384 + $0x80] sm:$0xff]
        %v514 = vld [vmem:[%s384 + $0x88] sm:$0xff]
        %v515 = vld [vmem:[%s384 + $0x90] sm:$0xff]
        %v516 = vld [vmem:[%s384 + $0x98] sm:$0xff]
        %v517 = vld [vmem:[%s384 + $0xa0] sm:$0xff]
        %v518 = vld [vmem:[%s384 + $0xa8] sm:$0xff]
        %v519 = vld [vmem:[%s384 + $0xb0] sm:$0xff]
        %v520 = vld [vmem:[%s384 + $0xb8] sm:$0xff]
        %v521 = vld [vmem:[%s384 + $0xc0] sm:$0xff]
        %v522 = vld [vmem:[%s384 + $0xc8] sm:$0xff]
        %v523 = vld [vmem:[%s384 + $0xd0] sm:$0xff]
        %v524 = vld [vmem:[%s384 + $0xd8] sm:$0xff]
        %v525 = vld [vmem:[%s384 + $0xe0] sm:$0xff]
        %v526 = vld [vmem:[%s384 + $0xe8] sm:$0xff]
        %v527 = vld [vmem:[%s384 + $0xf0] sm:$0xff]
        %v528 = vld [vmem:[%s384 + $0xf8] sm:$0xff]
        %v529 = vmax.f32 %v497, 0.0
        %v530 = vmax.f32 %v498, 0.0
        %v531 = vmax.f32 %v499, 0.0
        %v532 = vmax.f32 %v500, 0.0
        %v533 = vmax.f32 %v501, 0.0
        %v534 = vmax.f32 %v502, 0.0
        %v535 = vmax.f32 %v503, 0.0
        %v536 = vmax.f32 %v504, 0.0
        %v537 = vmax.f32 %v505, 0.0
        %v538 = vmax.f32 %v506, 0.0
        %v539 = vmax.f32 %v507, 0.0
        %v540 = vmax.f32 %v508, 0.0
        %v541 = vmax.f32 %v509, 0.0
        %v542 = vmax.f32 %v510, 0.0
        %v543 = vmax.f32 %v511, 0.0
        %v544 = vmax.f32 %v512, 0.0
        %v545 = vmax.f32 %v513, 0.0
        %v546 = vmax.f32 %v514, 0.0
        %v547 = vmax.f32 %v515, 0.0
        %v548 = vmax.f32 %v516, 0.0
        %v549 = vmax.f32 %v517, 0.0
        %v550 = vmax.f32 %v518, 0.0
        %v551 = vmax.f32 %v519, 0.0
        %v552 = vmax.f32 %v520, 0.0
        %v553 = vmax.f32 %v521, 0.0
        %v554 = vmax.f32 %v522, 0.0
        %v555 = vmax.f32 %v523, 0.0
        %v556 = vmax.f32 %v524, 0.0
        %v557 = vmax.f32 %v525, 0.0
        %v558 = vmax.f32 %v526, 0.0
        %v559 = vmax.f32 %v527, 0.0
        %v560 = vmax.f32 %v528, 0.0
        %s561 = scalar_lea.vmem [#allocation2], 24
        %562 = vst.msk [vmem:[%s561 + $0x1] sm:$0xff] %vm385, %v529
        %563 = vst.msk [vmem:[%s561 + $0x9] sm:$0xff] %vm385, %v530
        %564 = vst.msk [vmem:[%s561 + $0x19] sm:$0xff] %vm385, %v531
        %565 = vst.msk [vmem:[%s561 + $0x21] sm:$0xff] %vm385, %v532
        %566 = vst.msk [vmem:[%s561 + $0x31] sm:$0xff] %vm385, %v533
        %567 = vst.msk [vmem:[%s561 + $0x39] sm:$0xff] %vm385, %v534
        %568 = vst.msk [vmem:[%s561 + $0x49] sm:$0xff] %vm385, %v535
        %569 = vst.msk [vmem:[%s561 + $0x51] sm:$0xff] %vm385, %v536
        %570 = vst.msk [vmem:[%s561 + $0x61] sm:$0xff] %vm385, %v537
        %571 = vst.msk [vmem:[%s561 + $0x69] sm:$0xff] %vm385, %v538
        %572 = vst.msk [vmem:[%s561 + $0x79] sm:$0xff] %vm385, %v539
        %573 = vst.msk [vmem:[%s561 + $0x81] sm:$0xff] %vm385, %v540
        %574 = vst.msk [vmem:[%s561 + $0x91] sm:$0xff] %vm385, %v541
        %575 = vst.msk [vmem:[%s561 + $0x99] sm:$0xff] %vm385, %v542
        %576 = vst.msk [vmem:[%s561 + $0xa9] sm:$0xff] %vm385, %v543
        %577 = vst.msk [vmem:[%s561 + $0xb1] sm:$0xff] %vm385, %v544
        %578 = vst.msk [vmem:[%s561 + $0xc1] sm:$0xff] %vm385, %v545
        %579 = vst.msk [vmem:[%s561 + $0xc9] sm:$0xff] %vm385, %v546
        %580 = vst.msk [vmem:[%s561 + $0xd9] sm:$0xff] %vm385, %v547
        %581 = vst.msk [vmem:[%s561 + $0xe1] sm:$0xff] %vm385, %v548
        %582 = vst.msk [vmem:[%s561 + $0xf1] sm:$0xff] %vm385, %v549
        %583 = vst.msk [vmem:[%s561 + $0xf9] sm:$0xff] %vm385, %v550
        %584 = vst.msk [vmem:[%s561 + $0x109] sm:$0xff] %vm385, %v551
        %585 = vst.msk [vmem:[%s561 + $0x111] sm:$0xff] %vm385, %v552
        %586 = vst.msk [vmem:[%s561 + $0x121] sm:$0xff] %vm385, %v553
        %587 = vst.msk [vmem:[%s561 + $0x129] sm:$0xff] %vm385, %v554
        %588 = vst.msk [vmem:[%s561 + $0x139] sm:$0xff] %vm385, %v555
        %589 = vst.msk [vmem:[%s561 + $0x141] sm:$0xff] %vm385, %v556
        %590 = vst.msk [vmem:[%s561 + $0x151] sm:$0xff] %vm385, %v557
        %591 = vst.msk [vmem:[%s561 + $0x159] sm:$0xff] %vm385, %v558
        %592 = vst.msk [vmem:[%s561 + $0x169] sm:$0xff] %vm385, %v559
        %593 = vst.msk [vmem:[%s561 + $0x171] sm:$0xff] %vm385, %v560
        %v594 = vld [vmem:[#allocation2] sm:$0xff]
        %v595 = vld [vmem:[#allocation2 + $0x8] sm:$0xff]
        %v596 = vld [vmem:[#allocation2 + $0x18] sm:$0xff]
        %v597 = vld [vmem:[#allocation2 + $0x20] sm:$0xff]
        %v598 = vld [vmem:[#allocation2 + $0x30] sm:$0xff]
        %v599 = vld [vmem:[#allocation2 + $0x38] sm:$0xff]
        %v600 = vld [vmem:[#allocation2 + $0x48] sm:$0xff]
        %v601 = vld [vmem:[#allocation2 + $0x50] sm:$0xff]
        %v602 = vld [vmem:[#allocation2 + $0x60] sm:$0xff]
        %v603 = vld [vmem:[#allocation2 + $0x68] sm:$0xff]
        %v604 = vld [vmem:[#allocation2 + $0x78] sm:$0xff]
        %v605 = vld [vmem:[#allocation2 + $0x80] sm:$0xff]
        %v606 = vld [vmem:[#allocation2 + $0x90] sm:$0xff]
        %v607 = vld [vmem:[#allocation2 + $0x98] sm:$0xff]
        %v608 = vld [vmem:[#allocation2 + $0xa8] sm:$0xff]
        %v609 = vld [vmem:[#allocation2 + $0xb0] sm:$0xff]
        %v610 = vld [vmem:[#allocation2 + $0xc0] sm:$0xff]
        %v611 = vld [vmem:[#allocation2 + $0xc8] sm:$0xff]
        %v612 = vld [vmem:[#allocation2 + $0xd8] sm:$0xff]
        %v613 = vld [vmem:[#allocation2 + $0xe0] sm:$0xff]
        %v614 = vld [vmem:[#allocation2 + $0xf0] sm:$0xff]
        %v615 = vld [vmem:[#allocation2 + $0xf8] sm:$0xff]
        %v616 = vld [vmem:[#allocation2 + $0x108] sm:$0xff]
        %v617 = vld [vmem:[#allocation2 + $0x110] sm:$0xff]
        %v618 = vld [vmem:[#allocation2 + $0x120] sm:$0xff]
        %v619 = vld [vmem:[#allocation2 + $0x128] sm:$0xff]
        %v620 = vld [vmem:[#allocation2 + $0x138] sm:$0xff]
        %v621 = vld [vmem:[#allocation2 + $0x140] sm:$0xff]
        %v622 = vld [vmem:[#allocation2 + $0x150] sm:$0xff]
        %v623 = vld [vmem:[#allocation2 + $0x158] sm:$0xff]
        %v624 = vld [vmem:[#allocation2 + $0x168] sm:$0xff]
        %v625 = vld [vmem:[#allocation2 + $0x170] sm:$0xff]
        %v626 = vld [vmem:[%s1] sm:$0x1]
        %v627 = vlaneseq
        %v628 = vshrl.u32 %v627, 7
        %v629 = vsub.s32 0, %v628
        %v630 = vrot.slane %v626, %v629
        %v631 = vmul.f32 %v594, %v630
        %v632 = vmul.f32 %v595, %v630
        %v633 = vmul.f32 %v596, %v630
        %v634 = vmul.f32 %v597, %v630
        %v635 = vmul.f32 %v598, %v630
        %v636 = vmul.f32 %v599, %v630
        %v637 = vmul.f32 %v600, %v630
        %v638 = vmul.f32 %v601, %v630
        %v639 = vmul.f32 %v602, %v630
        %v640 = vmul.f32 %v603, %v630
        %v641 = vmul.f32 %v604, %v630
        %v642 = vmul.f32 %v605, %v630
        %v643 = vmul.f32 %v606, %v630
        %v644 = vmul.f32 %v607, %v630
        %v645 = vmul.f32 %v608, %v630
        %v646 = vmul.f32 %v609, %v630
        %v647 = vmul.f32 %v610, %v630
        %v648 = vmul.f32 %v611, %v630
        %v649 = vmul.f32 %v612, %v630
        %v650 = vmul.f32 %v613, %v630
        %v651 = vmul.f32 %v614, %v630
        %v652 = vmul.f32 %v615, %v630
        %v653 = vmul.f32 %v616, %v630
        %v654 = vmul.f32 %v617, %v630
        %v655 = vmul.f32 %v618, %v630
        %v656 = vmul.f32 %v619, %v630
        %v657 = vmul.f32 %v620, %v630
        %v658 = vmul.f32 %v621, %v630
        %v659 = vmul.f32 %v622, %v630
        %v660 = vmul.f32 %v623, %v630
        %v661 = vmul.f32 %v624, %v630
        %v662 = vmul.f32 %v625, %v630
        %v663 = vadd.f32 %v631, 0.0
        %v664 = vadd.f32 %v632, 0.0
        %v665 = vadd.f32 %v633, 0.0
        %v666 = vadd.f32 %v634, 0.0
        %v667 = vadd.f32 %v635, 0.0
        %v668 = vadd.f32 %v636, 0.0
        %v669 = vadd.f32 %v637, 0.0
        %v670 = vadd.f32 %v638, 0.0
        %v671 = vadd.f32 %v639, 0.0
        %v672 = vadd.f32 %v640, 0.0
        %v673 = vadd.f32 %v641, 0.0
        %v674 = vadd.f32 %v642, 0.0
        %v675 = vadd.f32 %v643, 0.0
        %v676 = vadd.f32 %v644, 0.0
        %v677 = vadd.f32 %v645, 0.0
        %v678 = vadd.f32 %v646, 0.0
        %v679 = vadd.f32 %v647, 0.0
        %v680 = vadd.f32 %v648, 0.0
        %v681 = vadd.f32 %v649, 0.0
        %v682 = vadd.f32 %v650, 0.0
        %v683 = vadd.f32 %v651, 0.0
        %v684 = vadd.f32 %v652, 0.0
        %v685 = vadd.f32 %v653, 0.0
        %v686 = vadd.f32 %v654, 0.0
        %v687 = vadd.f32 %v655, 0.0
        %v688 = vadd.f32 %v656, 0.0
        %v689 = vadd.f32 %v657, 0.0
        %v690 = vadd.f32 %v658, 0.0
        %v691 = vadd.f32 %v659, 0.0
        %v692 = vadd.f32 %v660, 0.0
        %v693 = vadd.f32 %v661, 0.0
        %v694 = vadd.f32 %v662, 0.0
        %v695 = vld [vmem:[#allocation2 + $0x1] sm:$0xff]
        %v696 = vld [vmem:[#allocation2 + $0x9] sm:$0xff]
        %v697 = vld [vmem:[#allocation2 + $0x19] sm:$0xff]
        %v698 = vld [vmem:[#allocation2 + $0x21] sm:$0xff]
        %v699 = vld [vmem:[#allocation2 + $0x31] sm:$0xff]
        %v700 = vld [vmem:[#allocation2 + $0x39] sm:$0xff]
        %v701 = vld [vmem:[#allocation2 + $0x49] sm:$0xff]
        %v702 = vld [vmem:[#allocation2 + $0x51] sm:$0xff]
        %v703 = vld [vmem:[#allocation2 + $0x61] sm:$0xff]
        %v704 = vld [vmem:[#allocation2 + $0x69] sm:$0xff]
        %v705 = vld [vmem:[#allocation2 + $0x79] sm:$0xff]
        %v706 = vld [vmem:[#allocation2 + $0x81] sm:$0xff]
        %v707 = vld [vmem:[#allocation2 + $0x91] sm:$0xff]
        %v708 = vld [vmem:[#allocation2 + $0x99] sm:$0xff]
        %v709 = vld [vmem:[#allocation2 + $0xa9] sm:$0xff]
        %v710 = vld [vmem:[#allocation2 + $0xb1] sm:$0xff]
        %v711 = vld [vmem:[#allocation2 + $0xc1] sm:$0xff]
        %v712 = vld [vmem:[#allocation2 + $0xc9] sm:$0xff]
        %v713 = vld [vmem:[#allocation2 + $0xd9] sm:$0xff]
        %v714 = vld [vmem:[#allocation2 + $0xe1] sm:$0xff]
        %v715 = vld [vmem:[#allocation2 + $0xf1] sm:$0xff]
        %v716 = vld [vmem:[#allocation2 + $0xf9] sm:$0xff]
        %v717 = vld [vmem:[#allocation2 + $0x109] sm:$0xff]
        %v718 = vld [vmem:[#allocation2 + $0x111] sm:$0xff]
        %v719 = vld [vmem:[#allocation2 + $0x121] sm:$0xff]
        %v720 = vld [vmem:[#allocation2 + $0x129] sm:$0xff]
        %v721 = vld [vmem:[#allocation2 + $0x139] sm:$0xff]
        %v722 = vld [vmem:[#allocation2 + $0x141] sm:$0xff]
        %v723 = vld [vmem:[#allocation2 + $0x151] sm:$0xff]
        %v724 = vld [vmem:[#allocation2 + $0x159] sm:$0xff]
        %v725 = vld [vmem:[#allocation2 + $0x169] sm:$0xff]
        %v726 = vld [vmem:[#allocation2 + $0x171] sm:$0xff]
        %v727 = vld [vmem:[%s1 + $0x1] sm:$0x1]
        %v728 = vlaneseq
        %v729 = vshrl.u32 %v728, 7
        %v730 = vsub.s32 0, %v729
        %v731 = vrot.slane %v727, %v730
        %v732 = vmul.f32 %v695, %v731
        %v733 = vmul.f32 %v696, %v731
        %v734 = vmul.f32 %v697, %v731
        %v735 = vmul.f32 %v698, %v731
        %v736 = vmul.f32 %v699, %v731
        %v737 = vmul.f32 %v700, %v731
        %v738 = vmul.f32 %v701, %v731
        %v739 = vmul.f32 %v702, %v731
        %v740 = vmul.f32 %v703, %v731
        %v741 = vmul.f32 %v704, %v731
        %v742 = vmul.f32 %v705, %v731
        %v743 = vmul.f32 %v706, %v731
        %v744 = vmul.f32 %v707, %v731
        %v745 = vmul.f32 %v708, %v731
        %v746 = vmul.f32 %v709, %v731
        %v747 = vmul.f32 %v710, %v731
        %v748 = vmul.f32 %v711, %v731
        %v749 = vmul.f32 %v712, %v731
        %v750 = vmul.f32 %v713, %v731
        %v751 = vmul.f32 %v714, %v731
        %v752 = vmul.f32 %v715, %v731
        %v753 = vmul.f32 %v716, %v731
        %v754 = vmul.f32 %v717, %v731
        %v755 = vmul.f32 %v718, %v731
        %v756 = vmul.f32 %v719, %v731
        %v757 = vmul.f32 %v720, %v731
        %v758 = vmul.f32 %v721, %v731
        %v759 = vmul.f32 %v722, %v731
        %v760 = vmul.f32 %v723, %v731
        %v761 = vmul.f32 %v724, %v731
        %v762 = vmul.f32 %v725, %v731
        %v763 = vmul.f32 %v726, %v731
        %v764 = vadd.f32 %v663, %v732
        %v765 = vadd.f32 %v664, %v733
        %v766 = vadd.f32 %v665, %v734
        %v767 = vadd.f32 %v666, %v735
        %v768 = vadd.f32 %v667, %v736
        %v769 = vadd.f32 %v668, %v737
        %v770 = vadd.f32 %v669, %v738
        %v771 = vadd.f32 %v670, %v739
        %v772 = vadd.f32 %v671, %v740
        %v773 = vadd.f32 %v672, %v741
        %v774 = vadd.f32 %v673, %v742
        %v775 = vadd.f32 %v674, %v743
        %v776 = vadd.f32 %v675, %v744
        %v777 = vadd.f32 %v676, %v745
        %v778 = vadd.f32 %v677, %v746
        %v779 = vadd.f32 %v678, %v747
        %v780 = vadd.f32 %v679, %v748
        %v781 = vadd.f32 %v680, %v749
        %v782 = vadd.f32 %v681, %v750
        %v783 = vadd.f32 %v682, %v751
        %v784 = vadd.f32 %v683, %v752
        %v785 = vadd.f32 %v684, %v753
        %v786 = vadd.f32 %v685, %v754
        %v787 = vadd.f32 %v686, %v755
        %v788 = vadd.f32 %v687, %v756
        %v789 = vadd.f32 %v688, %v757
        %v790 = vadd.f32 %v689, %v758
        %v791 = vadd.f32 %v690, %v759
        %v792 = vadd.f32 %v691, %v760
        %v793 = vadd.f32 %v692, %v761
        %v794 = vadd.f32 %v693, %v762
        %v795 = vadd.f32 %v694, %v763
        %v796 = vld [vmem:[#allocation2 + $0x2] sm:$0xff]
        %v797 = vld [vmem:[#allocation2 + $0xa] sm:$0xff]
        %v798 = vld [vmem:[#allocation2 + $0x1a] sm:$0xff]
        %v799 = vld [vmem:[#allocation2 + $0x22] sm:$0xff]
        %v800 = vld [vmem:[#allocation2 + $0x32] sm:$0xff]
        %v801 = vld [vmem:[#allocation2 + $0x3a] sm:$0xff]
        %v802 = vld [vmem:[#allocation2 + $0x4a] sm:$0xff]
        %v803 = vld [vmem:[#allocation2 + $0x52] sm:$0xff]
        %v804 = vld [vmem:[#allocation2 + $0x62] sm:$0xff]
        %v805 = vld [vmem:[#allocation2 + $0x6a] sm:$0xff]
        %v806 = vld [vmem:[#allocation2 + $0x7a] sm:$0xff]
        %v807 = vld [vmem:[#allocation2 + $0x82] sm:$0xff]
        %v808 = vld [vmem:[#allocation2 + $0x92] sm:$0xff]
        %v809 = vld [vmem:[#allocation2 + $0x9a] sm:$0xff]
        %v810 = vld [vmem:[#allocation2 + $0xaa] sm:$0xff]
        %v811 = vld [vmem:[#allocation2 + $0xb2] sm:$0xff]
        %v812 = vld [vmem:[#allocation2 + $0xc2] sm:$0xff]
        %v813 = vld [vmem:[#allocation2 + $0xca] sm:$0xff]
        %v814 = vld [vmem:[#allocation2 + $0xda] sm:$0xff]
        %v815 = vld [vmem:[#allocation2 + $0xe2] sm:$0xff]
        %v816 = vld [vmem:[#allocation2 + $0xf2] sm:$0xff]
        %v817 = vld [vmem:[#allocation2 + $0xfa] sm:$0xff]
        %v818 = vld [vmem:[#allocation2 + $0x10a] sm:$0xff]
        %v819 = vld [vmem:[#allocation2 + $0x112] sm:$0xff]
        %v820 = vld [vmem:[#allocation2 + $0x122] sm:$0xff]
        %v821 = vld [vmem:[#allocation2 + $0x12a] sm:$0xff]
        %v822 = vld [vmem:[#allocation2 + $0x13a] sm:$0xff]
        %v823 = vld [vmem:[#allocation2 + $0x142] sm:$0xff]
        %v824 = vld [vmem:[#allocation2 + $0x152] sm:$0xff]
        %v825 = vld [vmem:[#allocation2 + $0x15a] sm:$0xff]
        %v826 = vld [vmem:[#allocation2 + $0x16a] sm:$0xff]
        %v827 = vld [vmem:[#allocation2 + $0x172] sm:$0xff]
        %v828 = vld [vmem:[%s1 + $0x2] sm:$0x1]
        %v829 = vlaneseq
        %v830 = vshrl.u32 %v829, 7
        %v831 = vsub.s32 0, %v830
        %v832 = vrot.slane %v828, %v831
        %v833 = vmul.f32 %v796, %v832
        %v834 = vmul.f32 %v797, %v832
        %v835 = vmul.f32 %v798, %v832
        %v836 = vmul.f32 %v799, %v832
        %v837 = vmul.f32 %v800, %v832
        %v838 = vmul.f32 %v801, %v832
        %v839 = vmul.f32 %v802, %v832
        %v840 = vmul.f32 %v803, %v832
        %v841 = vmul.f32 %v804, %v832
        %v842 = vmul.f32 %v805, %v832
        %v843 = vmul.f32 %v806, %v832
        %v844 = vmul.f32 %v807, %v832
        %v845 = vmul.f32 %v808, %v832
        %v846 = vmul.f32 %v809, %v832
        %v847 = vmul.f32 %v810, %v832
        %v848 = vmul.f32 %v811, %v832
        %v849 = vmul.f32 %v812, %v832
        %v850 = vmul.f32 %v813, %v832
        %v851 = vmul.f32 %v814, %v832
        %v852 = vmul.f32 %v815, %v832
        %v853 = vmul.f32 %v816, %v832
        %v854 = vmul.f32 %v817, %v832
        %v855 = vmul.f32 %v818, %v832
        %v856 = vmul.f32 %v819, %v832
        %v857 = vmul.f32 %v820, %v832
        %v858 = vmul.f32 %v821, %v832
        %v859 = vmul.f32 %v822, %v832
        %v860 = vmul.f32 %v823, %v832
        %v861 = vmul.f32 %v824, %v832
        %v862 = vmul.f32 %v825, %v832
        %v863 = vmul.f32 %v826, %v832
        %v864 = vmul.f32 %v827, %v832
        %v865 = vadd.f32 %v764, %v833
        %v866 = vadd.f32 %v765, %v834
        %v867 = vadd.f32 %v766, %v835
        %v868 = vadd.f32 %v767, %v836
        %v869 = vadd.f32 %v768, %v837
        %v870 = vadd.f32 %v769, %v838
        %v871 = vadd.f32 %v770, %v839
        %v872 = vadd.f32 %v771, %v840
        %v873 = vadd.f32 %v772, %v841
        %v874 = vadd.f32 %v773, %v842
        %v875 = vadd.f32 %v774, %v843
        %v876 = vadd.f32 %v775, %v844
        %v877 = vadd.f32 %v776, %v845
        %v878 = vadd.f32 %v777, %v846
        %v879 = vadd.f32 %v778, %v847
        %v880 = vadd.f32 %v779, %v848
        %v881 = vadd.f32 %v780, %v849
        %v882 = vadd.f32 %v781, %v850
        %v883 = vadd.f32 %v782, %v851
        %v884 = vadd.f32 %v783, %v852
        %v885 = vadd.f32 %v784, %v853
        %v886 = vadd.f32 %v785, %v854
        %v887 = vadd.f32 %v786, %v855
        %v888 = vadd.f32 %v787, %v856
        %v889 = vadd.f32 %v788, %v857
        %v890 = vadd.f32 %v789, %v858
        %v891 = vadd.f32 %v790, %v859
        %v892 = vadd.f32 %v791, %v860
        %v893 = vadd.f32 %v792, %v861
        %v894 = vadd.f32 %v793, %v862
        %v895 = vadd.f32 %v794, %v863
        %v896 = vadd.f32 %v795, %v864
        %v897 = vld [vmem:[%s561] sm:$0xff]
        %v898 = vld [vmem:[%s561 + $0x8] sm:$0xff]
        %v899 = vld [vmem:[%s561 + $0x18] sm:$0xff]
        %v900 = vld [vmem:[%s561 + $0x20] sm:$0xff]
        %v901 = vld [vmem:[%s561 + $0x30] sm:$0xff]
        %v902 = vld [vmem:[%s561 + $0x38] sm:$0xff]
        %v903 = vld [vmem:[%s561 + $0x48] sm:$0xff]
        %v904 = vld [vmem:[%s561 + $0x50] sm:$0xff]
        %v905 = vld [vmem:[%s561 + $0x60] sm:$0xff]
        %v906 = vld [vmem:[%s561 + $0x68] sm:$0xff]
        %v907 = vld [vmem:[%s561 + $0x78] sm:$0xff]
        %v908 = vld [vmem:[%s561 + $0x80] sm:$0xff]
        %v909 = vld [vmem:[%s561 + $0x90] sm:$0xff]
        %v910 = vld [vmem:[%s561 + $0x98] sm:$0xff]
        %v911 = vld [vmem:[%s561 + $0xa8] sm:$0xff]
        %v912 = vld [vmem:[%s561 + $0xb0] sm:$0xff]
        %v913 = vld [vmem:[%s561 + $0xc0] sm:$0xff]
        %v914 = vld [vmem:[%s561 + $0xc8] sm:$0xff]
        %v915 = vld [vmem:[%s561 + $0xd8] sm:$0xff]
        %v916 = vld [vmem:[%s561 + $0xe0] sm:$0xff]
        %v917 = vld [vmem:[%s561 + $0xf0] sm:$0xff]
        %v918 = vld [vmem:[%s561 + $0xf8] sm:$0xff]
        %v919 = vld [vmem:[%s561 + $0x108] sm:$0xff]
        %v920 = vld [vmem:[%s561 + $0x110] sm:$0xff]
        %v921 = vld [vmem:[%s561 + $0x120] sm:$0xff]
        %v922 = vld [vmem:[%s561 + $0x128] sm:$0xff]
        %v923 = vld [vmem:[%s561 + $0x138] sm:$0xff]
        %v924 = vld [vmem:[%s561 + $0x140] sm:$0xff]
        %v925 = vld [vmem:[%s561 + $0x150] sm:$0xff]
        %v926 = vld [vmem:[%s561 + $0x158] sm:$0xff]
        %v927 = vld [vmem:[%s561 + $0x168] sm:$0xff]
        %v928 = vld [vmem:[%s561 + $0x170] sm:$0xff]
        %v929 = vld [vmem:[%s1 + $0x3] sm:$0x1]
        %v930 = vlaneseq
        %v931 = vshrl.u32 %v930, 7
        %v932 = vsub.s32 0, %v931
        %v933 = vrot.slane %v929, %v932
        %v934 = vmul.f32 %v897, %v933
        %v935 = vmul.f32 %v898, %v933
        %v936 = vmul.f32 %v899, %v933
        %v937 = vmul.f32 %v900, %v933
        %v938 = vmul.f32 %v901, %v933
        %v939 = vmul.f32 %v902, %v933
        %v940 = vmul.f32 %v903, %v933
        %v941 = vmul.f32 %v904, %v933
        %v942 = vmul.f32 %v905, %v933
        %v943 = vmul.f32 %v906, %v933
        %v944 = vmul.f32 %v907, %v933
        %v945 = vmul.f32 %v908, %v933
        %v946 = vmul.f32 %v909, %v933
        %v947 = vmul.f32 %v910, %v933
        %v948 = vmul.f32 %v911, %v933
        %v949 = vmul.f32 %v912, %v933
        %v950 = vmul.f32 %v913, %v933
        %v951 = vmul.f32 %v914, %v933
        %v952 = vmul.f32 %v915, %v933
        %v953 = vmul.f32 %v916, %v933
        %v954 = vmul.f32 %v917, %v933
        %v955 = vmul.f32 %v918, %v933
        %v956 = vmul.f32 %v919, %v933
        %v957 = vmul.f32 %v920, %v933
        %v958 = vmul.f32 %v921, %v933
        %v959 = vmul.f32 %v922, %v933
        %v960 = vmul.f32 %v923, %v933
        %v961 = vmul.f32 %v924, %v933
        %v962 = vmul.f32 %v925, %v933
        %v963 = vmul.f32 %v926, %v933
        %v964 = vmul.f32 %v927, %v933
        %v965 = vmul.f32 %v928, %v933
        %v966 = vadd.f32 %v865, %v934
        %v967 = vadd.f32 %v866, %v935
        %v968 = vadd.f32 %v867, %v936
        %v969 = vadd.f32 %v868, %v937
        %v970 = vadd.f32 %v869, %v938
        %v971 = vadd.f32 %v870, %v939
        %v972 = vadd.f32 %v871, %v940
        %v973 = vadd.f32 %v872, %v941
        %v974 = vadd.f32 %v873, %v942
        %v975 = vadd.f32 %v874, %v943
        %v976 = vadd.f32 %v875, %v944
        %v977 = vadd.f32 %v876, %v945
        %v978 = vadd.f32 %v877, %v946
        %v979 = vadd.f32 %v878, %v947
        %v980 = vadd.f32 %v879, %v948
        %v981 = vadd.f32 %v880, %v949
        %v982 = vadd.f32 %v881, %v950
        %v983 = vadd.f32 %v882, %v951
        %v984 = vadd.f32 %v883, %v952
        %v985 = vadd.f32 %v884, %v953
        %v986 = vadd.f32 %v885, %v954
        %v987 = vadd.f32 %v886, %v955
        %v988 = vadd.f32 %v887, %v956
        %v989 = vadd.f32 %v888, %v957
        %v990 = vadd.f32 %v889, %v958
        %v991 = vadd.f32 %v890, %v959
        %v992 = vadd.f32 %v891, %v960
        %v993 = vadd.f32 %v892, %v961
        %v994 = vadd.f32 %v893, %v962
        %v995 = vadd.f32 %v894, %v963
        %v996 = vadd.f32 %v895, %v964
        %v997 = vadd.f32 %v896, %v965
        %v998 = vld [vmem:[%s561 + $0x1] sm:$0xff]
        %v999 = vld [vmem:[%s561 + $0x9] sm:$0xff]
        %v1000 = vld [vmem:[%s561 + $0x19] sm:$0xff]
        %v1001 = vld [vmem:[%s561 + $0x21] sm:$0xff]
        %v1002 = vld [vmem:[%s561 + $0x31] sm:$0xff]
        %v1003 = vld [vmem:[%s561 + $0x39] sm:$0xff]
        %v1004 = vld [vmem:[%s561 + $0x49] sm:$0xff]
        %v1005 = vld [vmem:[%s561 + $0x51] sm:$0xff]
        %v1006 = vld [vmem:[%s561 + $0x61] sm:$0xff]
        %v1007 = vld [vmem:[%s561 + $0x69] sm:$0xff]
        %v1008 = vld [vmem:[%s561 + $0x79] sm:$0xff]
        %v1009 = vld [vmem:[%s561 + $0x81] sm:$0xff]
        %v1010 = vld [vmem:[%s561 + $0x91] sm:$0xff]
        %v1011 = vld [vmem:[%s561 + $0x99] sm:$0xff]
        %v1012 = vld [vmem:[%s561 + $0xa9] sm:$0xff]
        %v1013 = vld [vmem:[%s561 + $0xb1] sm:$0xff]
        %v1014 = vld [vmem:[%s561 + $0xc1] sm:$0xff]
        %v1015 = vld [vmem:[%s561 + $0xc9] sm:$0xff]
        %v1016 = vld [vmem:[%s561 + $0xd9] sm:$0xff]
        %v1017 = vld [vmem:[%s561 + $0xe1] sm:$0xff]
        %v1018 = vld [vmem:[%s561 + $0xf1] sm:$0xff]
        %v1019 = vld [vmem:[%s561 + $0xf9] sm:$0xff]
        %v1020 = vld [vmem:[%s561 + $0x109] sm:$0xff]
        %v1021 = vld [vmem:[%s561 + $0x111] sm:$0xff]
        %v1022 = vld [vmem:[%s561 + $0x121] sm:$0xff]
        %v1023 = vld [vmem:[%s561 + $0x129] sm:$0xff]
        %v1024 = vld [vmem:[%s561 + $0x139] sm:$0xff]
        %v1025 = vld [vmem:[%s561 + $0x141] sm:$0xff]
        %v1026 = vld [vmem:[%s561 + $0x151] sm:$0xff]
        %v1027 = vld [vmem:[%s561 + $0x159] sm:$0xff]
        %v1028 = vld [vmem:[%s561 + $0x169] sm:$0xff]
        %v1029 = vld [vmem:[%s561 + $0x171] sm:$0xff]
        %v1030 = vld [vmem:[%s1 + $0x4] sm:$0x1]
        %v1031 = vlaneseq
        %v1032 = vshrl.u32 %v1031, 7
        %v1033 = vsub.s32 0, %v1032
        %v1034 = vrot.slane %v1030, %v1033
        %v1035 = vmul.f32 %v998, %v1034
        %v1036 = vmul.f32 %v999, %v1034
        %v1037 = vmul.f32 %v1000, %v1034
        %v1038 = vmul.f32 %v1001, %v1034
        %v1039 = vmul.f32 %v1002, %v1034
        %v1040 = vmul.f32 %v1003, %v1034
        %v1041 = vmul.f32 %v1004, %v1034
        %v1042 = vmul.f32 %v1005, %v1034
        %v1043 = vmul.f32 %v1006, %v1034
        %v1044 = vmul.f32 %v1007, %v1034
        %v1045 = vmul.f32 %v1008, %v1034
        %v1046 = vmul.f32 %v1009, %v1034
        %v1047 = vmul.f32 %v1010, %v1034
        %v1048 = vmul.f32 %v1011, %v1034
        %v1049 = vmul.f32 %v1012, %v1034
        %v1050 = vmul.f32 %v1013, %v1034
        %v1051 = vmul.f32 %v1014, %v1034
        %v1052 = vmul.f32 %v1015, %v1034
        %v1053 = vmul.f32 %v1016, %v1034
        %v1054 = vmul.f32 %v1017, %v1034
        %v1055 = vmul.f32 %v1018, %v1034
        %v1056 = vmul.f32 %v1019, %v1034
        %v1057 = vmul.f32 %v1020, %v1034
        %v1058 = vmul.f32 %v1021, %v1034
        %v1059 = vmul.f32 %v1022, %v1034
        %v1060 = vmul.f32 %v1023, %v1034
        %v1061 = vmul.f32 %v1024, %v1034
        %v1062 = vmul.f32 %v1025, %v1034
        %v1063 = vmul.f32 %v1026, %v1034
        %v1064 = vmul.f32 %v1027, %v1034
        %v1065 = vmul.f32 %v1028, %v1034
        %v1066 = vmul.f32 %v1029, %v1034
        %v1067 = vadd.f32 %v966, %v1035
        %v1068 = vadd.f32 %v967, %v1036
        %v1069 = vadd.f32 %v968, %v1037
        %v1070 = vadd.f32 %v969, %v1038
        %v1071 = vadd.f32 %v970, %v1039
        %v1072 = vadd.f32 %v971, %v1040
        %v1073 = vadd.f32 %v972, %v1041
        %v1074 = vadd.f32 %v973, %v1042
        %v1075 = vadd.f32 %v974, %v1043
        %v1076 = vadd.f32 %v975, %v1044
        %v1077 = vadd.f32 %v976, %v1045
        %v1078 = vadd.f32 %v977, %v1046
        %v1079 = vadd.f32 %v978, %v1047
        %v1080 = vadd.f32 %v979, %v1048
        %v1081 = vadd.f32 %v980, %v1049
        %v1082 = vadd.f32 %v981, %v1050
        %v1083 = vadd.f32 %v982, %v1051
        %v1084 = vadd.f32 %v983, %v1052
        %v1085 = vadd.f32 %v984, %v1053
        %v1086 = vadd.f32 %v985, %v1054
        %v1087 = vadd.f32 %v986, %v1055
        %v1088 = vadd.f32 %v987, %v1056
        %v1089 = vadd.f32 %v988, %v1057
        %v1090 = vadd.f32 %v989, %v1058
        %v1091 = vadd.f32 %v990, %v1059
        %v1092 = vadd.f32 %v991, %v1060
        %v1093 = vadd.f32 %v992, %v1061
        %v1094 = vadd.f32 %v993, %v1062
        %v1095 = vadd.f32 %v994, %v1063
        %v1096 = vadd.f32 %v995, %v1064
        %v1097 = vadd.f32 %v996, %v1065
        %v1098 = vadd.f32 %v997, %v1066
        %v1099 = vld [vmem:[%s561 + $0x2] sm:$0xff]
        %v1100 = vld [vmem:[%s561 + $0xa] sm:$0xff]
        %v1101 = vld [vmem:[%s561 + $0x1a] sm:$0xff]
        %v1102 = vld [vmem:[%s561 + $0x22] sm:$0xff]
        %v1103 = vld [vmem:[%s561 + $0x32] sm:$0xff]
        %v1104 = vld [vmem:[%s561 + $0x3a] sm:$0xff]
        %v1105 = vld [vmem:[%s561 + $0x4a] sm:$0xff]
        %v1106 = vld [vmem:[%s561 + $0x52] sm:$0xff]
        %v1107 = vld [vmem:[%s561 + $0x62] sm:$0xff]
        %v1108 = vld [vmem:[%s561 + $0x6a] sm:$0xff]
        %v1109 = vld [vmem:[%s561 + $0x7a] sm:$0xff]
        %v1110 = vld [vmem:[%s561 + $0x82] sm:$0xff]
        %v1111 = vld [vmem:[%s561 + $0x92] sm:$0xff]
        %v1112 = vld [vmem:[%s561 + $0x9a] sm:$0xff]
        %v1113 = vld [vmem:[%s561 + $0xaa] sm:$0xff]
        %v1114 = vld [vmem:[%s561 + $0xb2] sm:$0xff]
        %v1115 = vld [vmem:[%s561 + $0xc2] sm:$0xff]
        %v1116 = vld [vmem:[%s561 + $0xca] sm:$0xff]
        %v1117 = vld [vmem:[%s561 + $0xda] sm:$0xff]
        %v1118 = vld [vmem:[%s561 + $0xe2] sm:$0xff]
        %v1119 = vld [vmem:[%s561 + $0xf2] sm:$0xff]
        %v1120 = vld [vmem:[%s561 + $0xfa] sm:$0xff]
        %v1121 = vld [vmem:[%s561 + $0x10a] sm:$0xff]
        %v1122 = vld [vmem:[%s561 + $0x112] sm:$0xff]
        %v1123 = vld [vmem:[%s561 + $0x122] sm:$0xff]
        %v1124 = vld [vmem:[%s561 + $0x12a] sm:$0xff]
        %v1125 = vld [vmem:[%s561 + $0x13a] sm:$0xff]
        %v1126 = vld [vmem:[%s561 + $0x142] sm:$0xff]
        %v1127 = vld [vmem:[%s561 + $0x152] sm:$0xff]
        %v1128 = vld [vmem:[%s561 + $0x15a] sm:$0xff]
        %v1129 = vld [vmem:[%s561 + $0x16a] sm:$0xff]
        %v1130 = vld [vmem:[%s561 + $0x172] sm:$0xff]
        %v1131 = vld [vmem:[%s1 + $0x5] sm:$0x1]
        %v1132 = vlaneseq
        %v1133 = vshrl.u32 %v1132, 7
        %v1134 = vsub.s32 0, %v1133
        %v1135 = vrot.slane %v1131, %v1134
        %v1136 = vmul.f32 %v1099, %v1135
        %v1137 = vmul.f32 %v1100, %v1135
        %v1138 = vmul.f32 %v1101, %v1135
        %v1139 = vmul.f32 %v1102, %v1135
        %v1140 = vmul.f32 %v1103, %v1135
        %v1141 = vmul.f32 %v1104, %v1135
        %v1142 = vmul.f32 %v1105, %v1135
        %v1143 = vmul.f32 %v1106, %v1135
        %v1144 = vmul.f32 %v1107, %v1135
        %v1145 = vmul.f32 %v1108, %v1135
        %v1146 = vmul.f32 %v1109, %v1135
        %v1147 = vmul.f32 %v1110, %v1135
        %v1148 = vmul.f32 %v1111, %v1135
        %v1149 = vmul.f32 %v1112, %v1135
        %v1150 = vmul.f32 %v1113, %v1135
        %v1151 = vmul.f32 %v1114, %v1135
        %v1152 = vmul.f32 %v1115, %v1135
        %v1153 = vmul.f32 %v1116, %v1135
        %v1154 = vmul.f32 %v1117, %v1135
        %v1155 = vmul.f32 %v1118, %v1135
        %v1156 = vmul.f32 %v1119, %v1135
        %v1157 = vmul.f32 %v1120, %v1135
        %v1158 = vmul.f32 %v1121, %v1135
        %v1159 = vmul.f32 %v1122, %v1135
        %v1160 = vmul.f32 %v1123, %v1135
        %v1161 = vmul.f32 %v1124, %v1135
        %v1162 = vmul.f32 %v1125, %v1135
        %v1163 = vmul.f32 %v1126, %v1135
        %v1164 = vmul.f32 %v1127, %v1135
        %v1165 = vmul.f32 %v1128, %v1135
        %v1166 = vmul.f32 %v1129, %v1135
        %v1167 = vmul.f32 %v1130, %v1135
        %v1168 = vadd.f32 %v1067, %v1136
        %v1169 = vadd.f32 %v1068, %v1137
        %v1170 = vadd.f32 %v1069, %v1138
        %v1171 = vadd.f32 %v1070, %v1139
        %v1172 = vadd.f32 %v1071, %v1140
        %v1173 = vadd.f32 %v1072, %v1141
        %v1174 = vadd.f32 %v1073, %v1142
        %v1175 = vadd.f32 %v1074, %v1143
        %v1176 = vadd.f32 %v1075, %v1144
        %v1177 = vadd.f32 %v1076, %v1145
        %v1178 = vadd.f32 %v1077, %v1146
        %v1179 = vadd.f32 %v1078, %v1147
        %v1180 = vadd.f32 %v1079, %v1148
        %v1181 = vadd.f32 %v1080, %v1149
        %v1182 = vadd.f32 %v1081, %v1150
        %v1183 = vadd.f32 %v1082, %v1151
        %v1184 = vadd.f32 %v1083, %v1152
        %v1185 = vadd.f32 %v1084, %v1153
        %v1186 = vadd.f32 %v1085, %v1154
        %v1187 = vadd.f32 %v1086, %v1155
        %v1188 = vadd.f32 %v1087, %v1156
        %v1189 = vadd.f32 %v1088, %v1157
        %v1190 = vadd.f32 %v1089, %v1158
        %v1191 = vadd.f32 %v1090, %v1159
        %v1192 = vadd.f32 %v1091, %v1160
        %v1193 = vadd.f32 %v1092, %v1161
        %v1194 = vadd.f32 %v1093, %v1162
        %v1195 = vadd.f32 %v1094, %v1163
        %v1196 = vadd.f32 %v1095, %v1164
        %v1197 = vadd.f32 %v1096, %v1165
        %v1198 = vadd.f32 %v1097, %v1166
        %v1199 = vadd.f32 %v1098, %v1167
        %s1200 = scalar_lea.vmem [#allocation2], 48
        %v1201 = vld [vmem:[%s1200] sm:$0xff]
        %v1202 = vld [vmem:[%s1200 + $0x8] sm:$0xff]
        %v1203 = vld [vmem:[%s1200 + $0x18] sm:$0xff]
        %v1204 = vld [vmem:[%s1200 + $0x20] sm:$0xff]
        %v1205 = vld [vmem:[%s1200 + $0x30] sm:$0xff]
        %v1206 = vld [vmem:[%s1200 + $0x38] sm:$0xff]
        %v1207 = vld [vmem:[%s1200 + $0x48] sm:$0xff]
        %v1208 = vld [vmem:[%s1200 + $0x50] sm:$0xff]
        %v1209 = vld [vmem:[%s1200 + $0x60] sm:$0xff]
        %v1210 = vld [vmem:[%s1200 + $0x68] sm:$0xff]
        %v1211 = vld [vmem:[%s1200 + $0x78] sm:$0xff]
        %v1212 = vld [vmem:[%s1200 + $0x80] sm:$0xff]
        %v1213 = vld [vmem:[%s1200 + $0x90] sm:$0xff]
        %v1214 = vld [vmem:[%s1200 + $0x98] sm:$0xff]
        %v1215 = vld [vmem:[%s1200 + $0xa8] sm:$0xff]
        %v1216 = vld [vmem:[%s1200 + $0xb0] sm:$0xff]
        %v1217 = vld [vmem:[%s1200 + $0xc0] sm:$0xff]
        %v1218 = vld [vmem:[%s1200 + $0xc8] sm:$0xff]
        %v1219 = vld [vmem:[%s1200 + $0xd8] sm:$0xff]
        %v1220 = vld [vmem:[%s1200 + $0xe0] sm:$0xff]
        %v1221 = vld [vmem:[%s1200 + $0xf0] sm:$0xff]
        %v1222 = vld [vmem:[%s1200 + $0xf8] sm:$0xff]
        %v1223 = vld [vmem:[%s1200 + $0x108] sm:$0xff]
        %v1224 = vld [vmem:[%s1200 + $0x110] sm:$0xff]
        %v1225 = vld [vmem:[%s1200 + $0x120] sm:$0xff]
        %v1226 = vld [vmem:[%s1200 + $0x128] sm:$0xff]
        %v1227 = vld [vmem:[%s1200 + $0x138] sm:$0xff]
        %v1228 = vld [vmem:[%s1200 + $0x140] sm:$0xff]
        %v1229 = vld [vmem:[%s1200 + $0x150] sm:$0xff]
        %v1230 = vld [vmem:[%s1200 + $0x158] sm:$0xff]
        %v1231 = vld [vmem:[%s1200 + $0x168] sm:$0xff]
        %v1232 = vld [vmem:[%s1200 + $0x170] sm:$0xff]
        %v1233 = vld [vmem:[%s1 + $0x6] sm:$0x1]
        %v1234 = vlaneseq
        %v1235 = vshrl.u32 %v1234, 7
        %v1236 = vsub.s32 0, %v1235
        %v1237 = vrot.slane %v1233, %v1236
        %v1238 = vmul.f32 %v1201, %v1237
        %v1239 = vmul.f32 %v1202, %v1237
        %v1240 = vmul.f32 %v1203, %v1237
        %v1241 = vmul.f32 %v1204, %v1237
        %v1242 = vmul.f32 %v1205, %v1237
        %v1243 = vmul.f32 %v1206, %v1237
        %v1244 = vmul.f32 %v1207, %v1237
        %v1245 = vmul.f32 %v1208, %v1237
        %v1246 = vmul.f32 %v1209, %v1237
        %v1247 = vmul.f32 %v1210, %v1237
        %v1248 = vmul.f32 %v1211, %v1237
        %v1249 = vmul.f32 %v1212, %v1237
        %v1250 = vmul.f32 %v1213, %v1237
        %v1251 = vmul.f32 %v1214, %v1237
        %v1252 = vmul.f32 %v1215, %v1237
        %v1253 = vmul.f32 %v1216, %v1237
        %v1254 = vmul.f32 %v1217, %v1237
        %v1255 = vmul.f32 %v1218, %v1237
        %v1256 = vmul.f32 %v1219, %v1237
        %v1257 = vmul.f32 %v1220, %v1237
        %v1258 = vmul.f32 %v1221, %v1237
        %v1259 = vmul.f32 %v1222, %v1237
        %v1260 = vmul.f32 %v1223, %v1237
        %v1261 = vmul.f32 %v1224, %v1237
        %v1262 = vmul.f32 %v1225, %v1237
        %v1263 = vmul.f32 %v1226, %v1237
        %v1264 = vmul.f32 %v1227, %v1237
        %v1265 = vmul.f32 %v1228, %v1237
        %v1266 = vmul.f32 %v1229, %v1237
        %v1267 = vmul.f32 %v1230, %v1237
        %v1268 = vmul.f32 %v1231, %v1237
        %v1269 = vmul.f32 %v1232, %v1237
        %v1270 = vadd.f32 %v1168, %v1238
        %v1271 = vadd.f32 %v1169, %v1239
        %v1272 = vadd.f32 %v1170, %v1240
        %v1273 = vadd.f32 %v1171, %v1241
        %v1274 = vadd.f32 %v1172, %v1242
        %v1275 = vadd.f32 %v1173, %v1243
        %v1276 = vadd.f32 %v1174, %v1244
        %v1277 = vadd.f32 %v1175, %v1245
        %v1278 = vadd.f32 %v1176, %v1246
        %v1279 = vadd.f32 %v1177, %v1247
        %v1280 = vadd.f32 %v1178, %v1248
        %v1281 = vadd.f32 %v1179, %v1249
        %v1282 = vadd.f32 %v1180, %v1250
        %v1283 = vadd.f32 %v1181, %v1251
        %v1284 = vadd.f32 %v1182, %v1252
        %v1285 = vadd.f32 %v1183, %v1253
        %v1286 = vadd.f32 %v1184, %v1254
        %v1287 = vadd.f32 %v1185, %v1255
        %v1288 = vadd.f32 %v1186, %v1256
        %v1289 = vadd.f32 %v1187, %v1257
        %v1290 = vadd.f32 %v1188, %v1258
        %v1291 = vadd.f32 %v1189, %v1259
        %v1292 = vadd.f32 %v1190, %v1260
        %v1293 = vadd.f32 %v1191, %v1261
        %v1294 = vadd.f32 %v1192, %v1262
        %v1295 = vadd.f32 %v1193, %v1263
        %v1296 = vadd.f32 %v1194, %v1264
        %v1297 = vadd.f32 %v1195, %v1265
        %v1298 = vadd.f32 %v1196, %v1266
        %v1299 = vadd.f32 %v1197, %v1267
        %v1300 = vadd.f32 %v1198, %v1268
        %v1301 = vadd.f32 %v1199, %v1269
        %v1302 = vld [vmem:[%s1200 + $0x1] sm:$0xff]
        %v1303 = vld [vmem:[%s1200 + $0x9] sm:$0xff]
        %v1304 = vld [vmem:[%s1200 + $0x19] sm:$0xff]
        %v1305 = vld [vmem:[%s1200 + $0x21] sm:$0xff]
        %v1306 = vld [vmem:[%s1200 + $0x31] sm:$0xff]
        %v1307 = vld [vmem:[%s1200 + $0x39] sm:$0xff]
        %v1308 = vld [vmem:[%s1200 + $0x49] sm:$0xff]
        %v1309 = vld [vmem:[%s1200 + $0x51] sm:$0xff]
        %v1310 = vld [vmem:[%s1200 + $0x61] sm:$0xff]
        %v1311 = vld [vmem:[%s1200 + $0x69] sm:$0xff]
        %v1312 = vld [vmem:[%s1200 + $0x79] sm:$0xff]
        %v1313 = vld [vmem:[%s1200 + $0x81] sm:$0xff]
        %v1314 = vld [vmem:[%s1200 + $0x91] sm:$0xff]
        %v1315 = vld [vmem:[%s1200 + $0x99] sm:$0xff]
        %v1316 = vld [vmem:[%s1200 + $0xa9] sm:$0xff]
        %v1317 = vld [vmem:[%s1200 + $0xb1] sm:$0xff]
        %v1318 = vld [vmem:[%s1200 + $0xc1] sm:$0xff]
        %v1319 = vld [vmem:[%s1200 + $0xc9] sm:$0xff]
        %v1320 = vld [vmem:[%s1200 + $0xd9] sm:$0xff]
        %v1321 = vld [vmem:[%s1200 + $0xe1] sm:$0xff]
        %v1322 = vld [vmem:[%s1200 + $0xf1] sm:$0xff]
        %v1323 = vld [vmem:[%s1200 + $0xf9] sm:$0xff]
        %v1324 = vld [vmem:[%s1200 + $0x109] sm:$0xff]
        %v1325 = vld [vmem:[%s1200 + $0x111] sm:$0xff]
        %v1326 = vld [vmem:[%s1200 + $0x121] sm:$0xff]
        %v1327 = vld [vmem:[%s1200 + $0x129] sm:$0xff]
        %v1328 = vld [vmem:[%s1200 + $0x139] sm:$0xff]
        %v1329 = vld [vmem:[%s1200 + $0x141] sm:$0xff]
        %v1330 = vld [vmem:[%s1200 + $0x151] sm:$0xff]
        %v1331 = vld [vmem:[%s1200 + $0x159] sm:$0xff]
        %v1332 = vld [vmem:[%s1200 + $0x169] sm:$0xff]
        %v1333 = vld [vmem:[%s1200 + $0x171] sm:$0xff]
        %v1334 = vld [vmem:[%s1 + $0x7] sm:$0x1]
        %v1335 = vlaneseq
        %v1336 = vshrl.u32 %v1335, 7
        %v1337 = vsub.s32 0, %v1336
        %v1338 = vrot.slane %v1334, %v1337
        %v1339 = vmul.f32 %v1302, %v1338
        %v1340 = vmul.f32 %v1303, %v1338
        %v1341 = vmul.f32 %v1304, %v1338
        %v1342 = vmul.f32 %v1305, %v1338
        %v1343 = vmul.f32 %v1306, %v1338
        %v1344 = vmul.f32 %v1307, %v1338
        %v1345 = vmul.f32 %v1308, %v1338
        %v1346 = vmul.f32 %v1309, %v1338
        %v1347 = vmul.f32 %v1310, %v1338
        %v1348 = vmul.f32 %v1311, %v1338
        %v1349 = vmul.f32 %v1312, %v1338
        %v1350 = vmul.f32 %v1313, %v1338
        %v1351 = vmul.f32 %v1314, %v1338
        %v1352 = vmul.f32 %v1315, %v1338
        %v1353 = vmul.f32 %v1316, %v1338
        %v1354 = vmul.f32 %v1317, %v1338
        %v1355 = vmul.f32 %v1318, %v1338
        %v1356 = vmul.f32 %v1319, %v1338
        %v1357 = vmul.f32 %v1320, %v1338
        %v1358 = vmul.f32 %v1321, %v1338
        %v1359 = vmul.f32 %v1322, %v1338
        %v1360 = vmul.f32 %v1323, %v1338
        %v1361 = vmul.f32 %v1324, %v1338
        %v1362 = vmul.f32 %v1325, %v1338
        %v1363 = vmul.f32 %v1326, %v1338
        %v1364 = vmul.f32 %v1327, %v1338
        %v1365 = vmul.f32 %v1328, %v1338
        %v1366 = vmul.f32 %v1329, %v1338
        %v1367 = vmul.f32 %v1330, %v1338
        %v1368 = vmul.f32 %v1331, %v1338
        %v1369 = vmul.f32 %v1332, %v1338
        %v1370 = vmul.f32 %v1333, %v1338
        %v1371 = vadd.f32 %v1270, %v1339
        %v1372 = vadd.f32 %v1271, %v1340
        %v1373 = vadd.f32 %v1272, %v1341
        %v1374 = vadd.f32 %v1273, %v1342
        %v1375 = vadd.f32 %v1274, %v1343
        %v1376 = vadd.f32 %v1275, %v1344
        %v1377 = vadd.f32 %v1276, %v1345
        %v1378 = vadd.f32 %v1277, %v1346
        %v1379 = vadd.f32 %v1278, %v1347
        %v1380 = vadd.f32 %v1279, %v1348
        %v1381 = vadd.f32 %v1280, %v1349
        %v1382 = vadd.f32 %v1281, %v1350
        %v1383 = vadd.f32 %v1282, %v1351
        %v1384 = vadd.f32 %v1283, %v1352
        %v1385 = vadd.f32 %v1284, %v1353
        %v1386 = vadd.f32 %v1285, %v1354
        %v1387 = vadd.f32 %v1286, %v1355
        %v1388 = vadd.f32 %v1287, %v1356
        %v1389 = vadd.f32 %v1288, %v1357
        %v1390 = vadd.f32 %v1289, %v1358
        %v1391 = vadd.f32 %v1290, %v1359
        %v1392 = vadd.f32 %v1291, %v1360
        %v1393 = vadd.f32 %v1292, %v1361
        %v1394 = vadd.f32 %v1293, %v1362
        %v1395 = vadd.f32 %v1294, %v1363
        %v1396 = vadd.f32 %v1295, %v1364
        %v1397 = vadd.f32 %v1296, %v1365
        %v1398 = vadd.f32 %v1297, %v1366
        %v1399 = vadd.f32 %v1298, %v1367
        %v1400 = vadd.f32 %v1299, %v1368
        %v1401 = vadd.f32 %v1300, %v1369
        %v1402 = vadd.f32 %v1301, %v1370
        %v1403 = vld [vmem:[%s1200 + $0x2] sm:$0xff]
        %v1404 = vld [vmem:[%s1200 + $0xa] sm:$0xff]
        %v1405 = vld [vmem:[%s1200 + $0x1a] sm:$0xff]
        %v1406 = vld [vmem:[%s1200 + $0x22] sm:$0xff]
        %v1407 = vld [vmem:[%s1200 + $0x32] sm:$0xff]
        %v1408 = vld [vmem:[%s1200 + $0x3a] sm:$0xff]
        %v1409 = vld [vmem:[%s1200 + $0x4a] sm:$0xff]
        %v1410 = vld [vmem:[%s1200 + $0x52] sm:$0xff]
        %v1411 = vld [vmem:[%s1200 + $0x62] sm:$0xff]
        %v1412 = vld [vmem:[%s1200 + $0x6a] sm:$0xff]
        %v1413 = vld [vmem:[%s1200 + $0x7a] sm:$0xff]
        %v1414 = vld [vmem:[%s1200 + $0x82] sm:$0xff]
        %v1415 = vld [vmem:[%s1200 + $0x92] sm:$0xff]
        %v1416 = vld [vmem:[%s1200 + $0x9a] sm:$0xff]
        %v1417 = vld [vmem:[%s1200 + $0xaa] sm:$0xff]
        %v1418 = vld [vmem:[%s1200 + $0xb2] sm:$0xff]
        %v1419 = vld [vmem:[%s1200 + $0xc2] sm:$0xff]
        %v1420 = vld [vmem:[%s1200 + $0xca] sm:$0xff]
        %v1421 = vld [vmem:[%s1200 + $0xda] sm:$0xff]
        %v1422 = vld [vmem:[%s1200 + $0xe2] sm:$0xff]
        %v1423 = vld [vmem:[%s1200 + $0xf2] sm:$0xff]
        %v1424 = vld [vmem:[%s1200 + $0xfa] sm:$0xff]
        %v1425 = vld [vmem:[%s1200 + $0x10a] sm:$0xff]
        %v1426 = vld [vmem:[%s1200 + $0x112] sm:$0xff]
        %v1427 = vld [vmem:[%s1200 + $0x122] sm:$0xff]
        %v1428 = vld [vmem:[%s1200 + $0x12a] sm:$0xff]
        %v1429 = vld [vmem:[%s1200 + $0x13a] sm:$0xff]
        %v1430 = vld [vmem:[%s1200 + $0x142] sm:$0xff]
        %v1431 = vld [vmem:[%s1200 + $0x152] sm:$0xff]
        %v1432 = vld [vmem:[%s1200 + $0x15a] sm:$0xff]
        %v1433 = vld [vmem:[%s1200 + $0x16a] sm:$0xff]
        %v1434 = vld [vmem:[%s1200 + $0x172] sm:$0xff]
        %v1435 = vld [vmem:[%s1 + $0x8] sm:$0x1]
        %v1436 = vlaneseq
        %v1437 = vshrl.u32 %v1436, 7
        %v1438 = vsub.s32 0, %v1437
        %v1439 = vrot.slane %v1435, %v1438
        %v1440 = vmul.f32 %v1403, %v1439
        %v1441 = vmul.f32 %v1404, %v1439
        %v1442 = vmul.f32 %v1405, %v1439
        %v1443 = vmul.f32 %v1406, %v1439
        %v1444 = vmul.f32 %v1407, %v1439
        %v1445 = vmul.f32 %v1408, %v1439
        %v1446 = vmul.f32 %v1409, %v1439
        %v1447 = vmul.f32 %v1410, %v1439
        %v1448 = vmul.f32 %v1411, %v1439
        %v1449 = vmul.f32 %v1412, %v1439
        %v1450 = vmul.f32 %v1413, %v1439
        %v1451 = vmul.f32 %v1414, %v1439
        %v1452 = vmul.f32 %v1415, %v1439
        %v1453 = vmul.f32 %v1416, %v1439
        %v1454 = vmul.f32 %v1417, %v1439
        %v1455 = vmul.f32 %v1418, %v1439
        %v1456 = vmul.f32 %v1419, %v1439
        %v1457 = vmul.f32 %v1420, %v1439
        %v1458 = vmul.f32 %v1421, %v1439
        %v1459 = vmul.f32 %v1422, %v1439
        %v1460 = vmul.f32 %v1423, %v1439
        %v1461 = vmul.f32 %v1424, %v1439
        %v1462 = vmul.f32 %v1425, %v1439
        %v1463 = vmul.f32 %v1426, %v1439
        %v1464 = vmul.f32 %v1427, %v1439
        %v1465 = vmul.f32 %v1428, %v1439
        %v1466 = vmul.f32 %v1429, %v1439
        %v1467 = vmul.f32 %v1430, %v1439
        %v1468 = vmul.f32 %v1431, %v1439
        %v1469 = vmul.f32 %v1432, %v1439
        %v1470 = vmul.f32 %v1433, %v1439
        %v1471 = vmul.f32 %v1434, %v1439
        %v1472 = vadd.f32 %v1371, %v1440
        %v1473 = vadd.f32 %v1372, %v1441
        %v1474 = vadd.f32 %v1373, %v1442
        %v1475 = vadd.f32 %v1374, %v1443
        %v1476 = vadd.f32 %v1375, %v1444
        %v1477 = vadd.f32 %v1376, %v1445
        %v1478 = vadd.f32 %v1377, %v1446
        %v1479 = vadd.f32 %v1378, %v1447
        %v1480 = vadd.f32 %v1379, %v1448
        %v1481 = vadd.f32 %v1380, %v1449
        %v1482 = vadd.f32 %v1381, %v1450
        %v1483 = vadd.f32 %v1382, %v1451
        %v1484 = vadd.f32 %v1383, %v1452
        %v1485 = vadd.f32 %v1384, %v1453
        %v1486 = vadd.f32 %v1385, %v1454
        %v1487 = vadd.f32 %v1386, %v1455
        %v1488 = vadd.f32 %v1387, %v1456
        %v1489 = vadd.f32 %v1388, %v1457
        %v1490 = vadd.f32 %v1389, %v1458
        %v1491 = vadd.f32 %v1390, %v1459
        %v1492 = vadd.f32 %v1391, %v1460
        %v1493 = vadd.f32 %v1392, %v1461
        %v1494 = vadd.f32 %v1393, %v1462
        %v1495 = vadd.f32 %v1394, %v1463
        %v1496 = vadd.f32 %v1395, %v1464
        %v1497 = vadd.f32 %v1396, %v1465
        %v1498 = vadd.f32 %v1397, %v1466
        %v1499 = vadd.f32 %v1398, %v1467
        %v1500 = vadd.f32 %v1399, %v1468
        %v1501 = vadd.f32 %v1400, %v1469
        %v1502 = vadd.f32 %v1401, %v1470
        %v1503 = vadd.f32 %v1402, %v1471
        %v1504 = vld [vmem:[%s2] sm:$0xff]
        %v1505 = vld [vmem:[%s3] sm:$0x1]
        %v1507 = vlaneseq
        %v1508 = vshrl.u32 %v1507, 7
        %v1509 = vsub.s32 0, %v1508
        %v1510 = vrot.slane %v1505, %v1509
        %v1513 = vsel %vm385, %v1472, 0
        %v1516 = vsel %vm385, %v1473, 0
        %v1519 = vsel %vm385, %v1474, 0
        %v1522 = vsel %vm385, %v1475, 0
        %v1525 = vsel %vm385, %v1476, 0
        %v1528 = vsel %vm385, %v1477, 0
        %v1531 = vsel %vm385, %v1478, 0
        %v1534 = vsel %vm385, %v1479, 0
        %v1537 = vsel %vm385, %v1480, 0
        %v1540 = vsel %vm385, %v1481, 0
        %v1543 = vsel %vm385, %v1482, 0
        %v1546 = vsel %vm385, %v1483, 0
        %v1549 = vsel %vm385, %v1484, 0
        %v1552 = vsel %vm385, %v1485, 0
        %v1555 = vsel %vm385, %v1486, 0
        %v1558 = vsel %vm385, %v1487, 0
        %v1561 = vsel %vm385, %v1488, 0
        %v1564 = vsel %vm385, %v1489, 0
        %v1567 = vsel %vm385, %v1490, 0
        %v1570 = vsel %vm385, %v1491, 0
        %v1573 = vsel %vm385, %v1492, 0
        %v1576 = vsel %vm385, %v1493, 0
        %v1579 = vsel %vm385, %v1494, 0
        %v1582 = vsel %vm385, %v1495, 0
        %v1585 = vsel %vm385, %v1496, 0
        %v1588 = vsel %vm385, %v1497, 0
        %v1591 = vsel %vm385, %v1498, 0
        %v1594 = vsel %vm385, %v1499, 0
        %v1597 = vsel %vm385, %v1500, 0
        %v1600 = vsel %vm385, %v1501, 0
        %v1603 = vsel %vm385, %v1502, 0
        %v1606 = vsel %vm385, %v1503, 0
        %1608 = vmatprep.subr.mxu0 0.0
        %1609 = vmatpush1.msra.mxu0 0.0
        %1610 = vmatprep.subr.mxu0 0.0
        %1611 = vmatpush1.msra.mxu0 0.0
        %1612 = vmatprep.subr.mxu0 0.0
        %1613 = vmatpush1.msra.mxu0 0.0
        %1614 = vmatprep.subr.mxu0 0.0
        %1615 = vmatpush1.msra.mxu0 0.0
        %1616 = vmatprep.subr.mxu0 0.0
        %1617 = vmatpush1.msra.mxu0 0.0
        %1618 = vmatprep.subr.mxu0 0.0
        %1619 = vmatpush1.msra.mxu0 0.0
        %1620 = vmatprep.subr.mxu0 0.0
        %1621 = vmatpush1.msra.mxu0 0.0
        %1622 = vmatprep.subr.mxu0 0.0
        %1623 = vmatpush1.msra.mxu0 0.0
        %1624 = vmatprep.subr.mxu0 0.0
        %1625 = vmatpush1.msra.mxu0 0.0
        %1626 = vmatprep.subr.mxu0 0.0
        %1627 = vmatpush1.msra.mxu0 0.0
        %1628 = vmatprep.subr.mxu0 0.0
        %1629 = vmatpush1.msra.mxu0 0.0
        %1630 = vmatprep.subr.mxu0 0.0
        %1631 = vmatpush1.msra.mxu0 0.0
        %1632 = vmatprep.subr.mxu0 0.0
        %1633 = vmatpush1.msra.mxu0 0.0
        %1634 = vmatprep.subr.mxu0 0.0
        %1635 = vmatpush1.msra.mxu0 0.0
        %1636 = vmatprep.subr.mxu0 0.0
        %1637 = vmatpush1.msra.mxu0 0.0
        %1638 = vmatprep.subr.mxu0 0.0
        %1639 = vmatpush1.msra.mxu0 %v1504
        %1640 = vmatprep.subr.mxu0 0.0
        %1641 = vmatpush2.msra.mxu0 0.0
        %1642 = vmatprep.subr.mxu0 0.0
        %1643 = vmatpush2.msra.mxu0 0.0
        %1644 = vmatprep.subr.mxu0 0.0
        %1645 = vmatpush2.msra.mxu0 0.0
        %1646 = vmatprep.subr.mxu0 0.0
        %1647 = vmatpush2.msra.mxu0 0.0
        %1648 = vmatprep.subr.mxu0 0.0
        %1649 = vmatpush2.msra.mxu0 0.0
        %1650 = vmatprep.subr.mxu0 0.0
        %1651 = vmatpush2.msra.mxu0 0.0
        %1652 = vmatprep.subr.mxu0 0.0
        %1653 = vmatpush2.msra.mxu0 0.0
        %1654 = vmatprep.subr.mxu0 0.0
        %1655 = vmatpush2.msra.mxu0 0.0
        %1656 = vmatprep.subr.mxu0 0.0
        %1657 = vmatpush2.msra.mxu0 0.0
        %1658 = vmatprep.subr.mxu0 0.0
        %1659 = vmatpush2.msra.mxu0 0.0
        %1660 = vmatprep.subr.mxu0 0.0
        %1661 = vmatpush2.msra.mxu0 0.0
        %1662 = vmatprep.subr.mxu0 0.0
        %1663 = vmatpush2.msra.mxu0 0.0
        %1664 = vmatprep.subr.mxu0 0.0
        %1665 = vmatpush2.msra.mxu0 0.0
        %1666 = vmatprep.subr.mxu0 0.0
        %1667 = vmatpush2.msra.mxu0 0.0
        %1668 = vmatprep.subr.mxu0 0.0
        %1669 = vmatpush2.msra.mxu0 0.0
        %1670 = vmatprep.subr.mxu0 0.0
        %1671 = vmatpush2.msra.mxu0 0.0
        %1672 = vmatprep.mubr.f32.mxu0 0.0
        %1673 = vmatmul.mubr.f32.gmra.mxu0 %v1513
        %v1674 = vpop.f32.mrf.mxu0
        %v1675 = vadd.f32 %v1510, %v1674
        %v1676 = vpop.f32.mrf.mxu0
        %1677 = vmatprep.mubr.f32.mxu0 0.0
        %1678 = vmatmul.mubr.f32.gmra.mxu0 %v1516
        %v1679 = vpop.f32.mrf.mxu0
        %v1680 = vadd.f32 %v1510, %v1679
        %v1681 = vpop.f32.mrf.mxu0
        %1682 = vmatprep.mubr.f32.mxu0 0.0
        %1683 = vmatmul.mubr.f32.gmra.mxu0 %v1519
        %v1684 = vpop.f32.mrf.mxu0
        %v1685 = vadd.f32 %v1510, %v1684
        %v1686 = vpop.f32.mrf.mxu0
        %1687 = vmatprep.mubr.f32.mxu0 0.0
        %1688 = vmatmul.mubr.f32.gmra.mxu0 %v1522
        %v1689 = vpop.f32.mrf.mxu0
        %v1690 = vadd.f32 %v1510, %v1689
        %v1691 = vpop.f32.mrf.mxu0
        %1692 = vmatprep.mubr.f32.mxu0 0.0
        %1693 = vmatmul.mubr.f32.gmra.mxu0 %v1525
        %v1694 = vpop.f32.mrf.mxu0
        %v1695 = vadd.f32 %v1510, %v1694
        %v1696 = vpop.f32.mrf.mxu0
        %1697 = vmatprep.mubr.f32.mxu0 0.0
        %1698 = vmatmul.mubr.f32.gmra.mxu0 %v1528
        %v1699 = vpop.f32.mrf.mxu0
        %v1700 = vadd.f32 %v1510, %v1699
        %v1701 = vpop.f32.mrf.mxu0
        %1702 = vmatprep.mubr.f32.mxu0 0.0
        %1703 = vmatmul.mubr.f32.gmra.mxu0 %v1531
        %v1704 = vpop.f32.mrf.mxu0
        %v1705 = vadd.f32 %v1510, %v1704
        %v1706 = vpop.f32.mrf.mxu0
        %1707 = vmatprep.mubr.f32.mxu0 0.0
        %1708 = vmatmul.mubr.f32.gmra.mxu0 %v1534
        %v1709 = vpop.f32.mrf.mxu0
        %v1710 = vadd.f32 %v1510, %v1709
        %v1711 = vpop.f32.mrf.mxu0
        %1712 = vmatprep.mubr.f32.mxu0 0.0
        %1713 = vmatmul.mubr.f32.gmra.mxu0 %v1537
        %v1714 = vpop.f32.mrf.mxu0
        %v1715 = vadd.f32 %v1510, %v1714
        %v1716 = vpop.f32.mrf.mxu0
        %1717 = vmatprep.mubr.f32.mxu0 0.0
        %1718 = vmatmul.mubr.f32.gmra.mxu0 %v1540
        %v1719 = vpop.f32.mrf.mxu0
        %v1720 = vadd.f32 %v1510, %v1719
        %v1721 = vpop.f32.mrf.mxu0
        %1722 = vmatprep.mubr.f32.mxu0 0.0
        %1723 = vmatmul.mubr.f32.gmra.mxu0 %v1543
        %v1724 = vpop.f32.mrf.mxu0
        %v1725 = vadd.f32 %v1510, %v1724
        %v1726 = vpop.f32.mrf.mxu0
        %1727 = vmatprep.mubr.f32.mxu0 0.0
        %1728 = vmatmul.mubr.f32.gmra.mxu0 %v1546
        %v1729 = vpop.f32.mrf.mxu0
        %v1730 = vadd.f32 %v1510, %v1729
        %v1731 = vpop.f32.mrf.mxu0
        %1732 = vmatprep.mubr.f32.mxu0 0.0
        %1733 = vmatmul.mubr.f32.gmra.mxu0 %v1549
        %v1734 = vpop.f32.mrf.mxu0
        %v1735 = vadd.f32 %v1510, %v1734
        %v1736 = vpop.f32.mrf.mxu0
        %1737 = vmatprep.mubr.f32.mxu0 0.0
        %1738 = vmatmul.mubr.f32.gmra.mxu0 %v1552
        %v1739 = vpop.f32.mrf.mxu0
        %v1740 = vadd.f32 %v1510, %v1739
        %v1741 = vpop.f32.mrf.mxu0
        %1742 = vmatprep.mubr.f32.mxu0 0.0
        %1743 = vmatmul.mubr.f32.gmra.mxu0 %v1555
        %v1744 = vpop.f32.mrf.mxu0
        %v1745 = vadd.f32 %v1510, %v1744
        %v1746 = vpop.f32.mrf.mxu0
        %1747 = vmatprep.mubr.f32.mxu0 0.0
        %1748 = vmatmul.mubr.f32.gmra.mxu0 %v1558
        %v1749 = vpop.f32.mrf.mxu0
        %v1750 = vadd.f32 %v1510, %v1749
        %v1751 = vpop.f32.mrf.mxu0
        %1752 = vmatprep.mubr.f32.mxu0 0.0
        %1753 = vmatmul.mubr.f32.gmra.mxu0 %v1561
        %v1754 = vpop.f32.mrf.mxu0
        %v1755 = vadd.f32 %v1510, %v1754
        %v1756 = vpop.f32.mrf.mxu0
        %1757 = vmatprep.mubr.f32.mxu0 0.0
        %1758 = vmatmul.mubr.f32.gmra.mxu0 %v1564
        %v1759 = vpop.f32.mrf.mxu0
        %v1760 = vadd.f32 %v1510, %v1759
        %v1761 = vpop.f32.mrf.mxu0
        %1762 = vmatprep.mubr.f32.mxu0 0.0
        %1763 = vmatmul.mubr.f32.gmra.mxu0 %v1567
        %v1764 = vpop.f32.mrf.mxu0
        %v1765 = vadd.f32 %v1510, %v1764
        %v1766 = vpop.f32.mrf.mxu0
        %1767 = vmatprep.mubr.f32.mxu0 0.0
        %1768 = vmatmul.mubr.f32.gmra.mxu0 %v1570
        %v1769 = vpop.f32.mrf.mxu0
        %v1770 = vadd.f32 %v1510, %v1769
        %v1771 = vpop.f32.mrf.mxu0
        %1772 = vmatprep.mubr.f32.mxu0 0.0
        %1773 = vmatmul.mubr.f32.gmra.mxu0 %v1573
        %v1774 = vpop.f32.mrf.mxu0
        %v1775 = vadd.f32 %v1510, %v1774
        %v1776 = vpop.f32.mrf.mxu0
        %1777 = vmatprep.mubr.f32.mxu0 0.0
        %1778 = vmatmul.mubr.f32.gmra.mxu0 %v1576
        %v1779 = vpop.f32.mrf.mxu0
        %v1780 = vadd.f32 %v1510, %v1779
        %v1781 = vpop.f32.mrf.mxu0
        %1782 = vmatprep.mubr.f32.mxu0 0.0
        %1783 = vmatmul.mubr.f32.gmra.mxu0 %v1579
        %v1784 = vpop.f32.mrf.mxu0
        %v1785 = vadd.f32 %v1510, %v1784
        %v1786 = vpop.f32.mrf.mxu0
        %1787 = vmatprep.mubr.f32.mxu0 0.0
        %1788 = vmatmul.mubr.f32.gmra.mxu0 %v1582
        %v1789 = vpop.f32.mrf.mxu0
        %v1790 = vadd.f32 %v1510, %v1789
        %v1791 = vpop.f32.mrf.mxu0
        %1792 = vmatprep.mubr.f32.mxu0 0.0
        %1793 = vmatmul.mubr.f32.gmra.mxu0 %v1585
        %v1794 = vpop.f32.mrf.mxu0
        %v1795 = vadd.f32 %v1510, %v1794
        %v1796 = vpop.f32.mrf.mxu0
        %1797 = vmatprep.mubr.f32.mxu0 0.0
        %1798 = vmatmul.mubr.f32.gmra.mxu0 %v1588
        %v1799 = vpop.f32.mrf.mxu0
        %v1800 = vadd.f32 %v1510, %v1799
        %v1801 = vpop.f32.mrf.mxu0
        %1802 = vmatprep.mubr.f32.mxu0 0.0
        %1803 = vmatmul.mubr.f32.gmra.mxu0 %v1591
        %v1804 = vpop.f32.mrf.mxu0
        %v1805 = vadd.f32 %v1510, %v1804
        %v1806 = vpop.f32.mrf.mxu0
        %1807 = vmatprep.mubr.f32.mxu0 0.0
        %1808 = vmatmul.mubr.f32.gmra.mxu0 %v1594
        %v1809 = vpop.f32.mrf.mxu0
        %v1810 = vadd.f32 %v1510, %v1809
        %v1811 = vpop.f32.mrf.mxu0
        %1812 = vmatprep.mubr.f32.mxu0 0.0
        %1813 = vmatmul.mubr.f32.gmra.mxu0 %v1597
        %v1814 = vpop.f32.mrf.mxu0
        %v1815 = vadd.f32 %v1510, %v1814
        %v1816 = vpop.f32.mrf.mxu0
        %1817 = vmatprep.mubr.f32.mxu0 0.0
        %1818 = vmatmul.mubr.f32.gmra.mxu0 %v1600
        %v1819 = vpop.f32.mrf.mxu0
        %v1820 = vadd.f32 %v1510, %v1819
        %v1821 = vpop.f32.mrf.mxu0
        %1822 = vmatprep.mubr.f32.mxu0 0.0
        %1823 = vmatmul.mubr.f32.gmra.mxu0 %v1603
        %v1824 = vpop.f32.mrf.mxu0
        %v1825 = vadd.f32 %v1510, %v1824
        %v1826 = vpop.f32.mrf.mxu0
        %1827 = vmatprep.mubr.f32.mxu0 0.0
        %1828 = vmatmul.mubr.f32.gmra.mxu0 %v1606
        %v1829 = vpop.f32.mrf.mxu0
        %v1830 = vadd.f32 %v1510, %v1829
        %v1831 = vpop.f32.mrf.mxu0
        %1832 = vdwg.mxu0
        %v1833 = vmax.f32 %v1675, 0.0
        %v1834 = vmax.f32 %v1680, 0.0
        %v1835 = vmax.f32 %v1685, 0.0
        %v1836 = vmax.f32 %v1690, 0.0
        %v1837 = vmax.f32 %v1695, 0.0
        %v1838 = vmax.f32 %v1700, 0.0
        %v1839 = vmax.f32 %v1705, 0.0
        %v1840 = vmax.f32 %v1710, 0.0
        %v1841 = vmax.f32 %v1715, 0.0
        %v1842 = vmax.f32 %v1720, 0.0
        %v1843 = vmax.f32 %v1725, 0.0
        %v1844 = vmax.f32 %v1730, 0.0
        %v1845 = vmax.f32 %v1735, 0.0
        %v1846 = vmax.f32 %v1740, 0.0
        %v1847 = vmax.f32 %v1745, 0.0
        %v1848 = vmax.f32 %v1750, 0.0
        %v1849 = vmax.f32 %v1755, 0.0
        %v1850 = vmax.f32 %v1760, 0.0
        %v1851 = vmax.f32 %v1765, 0.0
        %v1852 = vmax.f32 %v1770, 0.0
        %v1853 = vmax.f32 %v1775, 0.0
        %v1854 = vmax.f32 %v1780, 0.0
        %v1855 = vmax.f32 %v1785, 0.0
        %v1856 = vmax.f32 %v1790, 0.0
        %v1857 = vmax.f32 %v1795, 0.0
        %v1858 = vmax.f32 %v1800, 0.0
        %v1859 = vmax.f32 %v1805, 0.0
        %v1860 = vmax.f32 %v1810, 0.0
        %v1861 = vmax.f32 %v1815, 0.0
        %v1862 = vmax.f32 %v1820, 0.0
        %v1863 = vmax.f32 %v1825, 0.0
        %v1864 = vmax.f32 %v1830, 0.0
        %s1865 = scalar_lea.vmem [#allocation3], 24
        %1866 = vst.msk [vmem:[%s1865 + $0x1] sm:$0xff] %vm441, %v1833
        %1867 = vst.msk [vmem:[%s1865 + $0x9] sm:$0xff] %vm441, %v1834
        %1868 = vst.msk [vmem:[%s1865 + $0x19] sm:$0xff] %vm441, %v1835
        %1869 = vst.msk [vmem:[%s1865 + $0x21] sm:$0xff] %vm441, %v1836
        %1870 = vst.msk [vmem:[%s1865 + $0x31] sm:$0xff] %vm441, %v1837
        %1871 = vst.msk [vmem:[%s1865 + $0x39] sm:$0xff] %vm441, %v1838
        %1872 = vst.msk [vmem:[%s1865 + $0x49] sm:$0xff] %vm441, %v1839
        %1873 = vst.msk [vmem:[%s1865 + $0x51] sm:$0xff] %vm441, %v1840
        %1874 = vst.msk [vmem:[%s1865 + $0x61] sm:$0xff] %vm441, %v1841
        %1875 = vst.msk [vmem:[%s1865 + $0x69] sm:$0xff] %vm441, %v1842
        %1876 = vst.msk [vmem:[%s1865 + $0x79] sm:$0xff] %vm441, %v1843
        %1877 = vst.msk [vmem:[%s1865 + $0x81] sm:$0xff] %vm441, %v1844
        %1878 = vst.msk [vmem:[%s1865 + $0x91] sm:$0xff] %vm441, %v1845
        %1879 = vst.msk [vmem:[%s1865 + $0x99] sm:$0xff] %vm441, %v1846
        %1880 = vst.msk [vmem:[%s1865 + $0xa9] sm:$0xff] %vm441, %v1847
        %1881 = vst.msk [vmem:[%s1865 + $0xb1] sm:$0xff] %vm441, %v1848
        %1882 = vst.msk [vmem:[%s1865 + $0xc1] sm:$0xff] %vm441, %v1849
        %1883 = vst.msk [vmem:[%s1865 + $0xc9] sm:$0xff] %vm441, %v1850
        %1884 = vst.msk [vmem:[%s1865 + $0xd9] sm:$0xff] %vm441, %v1851
        %1885 = vst.msk [vmem:[%s1865 + $0xe1] sm:$0xff] %vm441, %v1852
        %1886 = vst.msk [vmem:[%s1865 + $0xf1] sm:$0xff] %vm441, %v1853
        %1887 = vst.msk [vmem:[%s1865 + $0xf9] sm:$0xff] %vm441, %v1854
        %1888 = vst.msk [vmem:[%s1865 + $0x109] sm:$0xff] %vm441, %v1855
        %1889 = vst.msk [vmem:[%s1865 + $0x111] sm:$0xff] %vm441, %v1856
        %1890 = vst.msk [vmem:[%s1865 + $0x121] sm:$0xff] %vm441, %v1857
        %1891 = vst.msk [vmem:[%s1865 + $0x129] sm:$0xff] %vm441, %v1858
        %1892 = vst.msk [vmem:[%s1865 + $0x139] sm:$0xff] %vm441, %v1859
        %1893 = vst.msk [vmem:[%s1865 + $0x141] sm:$0xff] %vm441, %v1860
        %1894 = vst.msk [vmem:[%s1865 + $0x151] sm:$0xff] %vm441, %v1861
        %1895 = vst.msk [vmem:[%s1865 + $0x159] sm:$0xff] %vm441, %v1862
        %1896 = vst.msk [vmem:[%s1865 + $0x169] sm:$0xff] %vm441, %v1863
        %1897 = vst.msk [vmem:[%s1865 + $0x171] sm:$0xff] %vm441, %v1864
        %v1898 = vld [vmem:[#allocation3] sm:$0xff]
        %v1899 = vld [vmem:[#allocation3 + $0x8] sm:$0xff]
        %v1900 = vld [vmem:[#allocation3 + $0x18] sm:$0xff]
        %v1901 = vld [vmem:[#allocation3 + $0x20] sm:$0xff]
        %v1902 = vld [vmem:[#allocation3 + $0x30] sm:$0xff]
        %v1903 = vld [vmem:[#allocation3 + $0x38] sm:$0xff]
        %v1904 = vld [vmem:[#allocation3 + $0x48] sm:$0xff]
        %v1905 = vld [vmem:[#allocation3 + $0x50] sm:$0xff]
        %v1906 = vld [vmem:[#allocation3 + $0x60] sm:$0xff]
        %v1907 = vld [vmem:[#allocation3 + $0x68] sm:$0xff]
        %v1908 = vld [vmem:[#allocation3 + $0x78] sm:$0xff]
        %v1909 = vld [vmem:[#allocation3 + $0x80] sm:$0xff]
        %v1910 = vld [vmem:[#allocation3 + $0x90] sm:$0xff]
        %v1911 = vld [vmem:[#allocation3 + $0x98] sm:$0xff]
        %v1912 = vld [vmem:[#allocation3 + $0xa8] sm:$0xff]
        %v1913 = vld [vmem:[#allocation3 + $0xb0] sm:$0xff]
        %v1914 = vld [vmem:[#allocation3 + $0xc0] sm:$0xff]
        %v1915 = vld [vmem:[#allocation3 + $0xc8] sm:$0xff]
        %v1916 = vld [vmem:[#allocation3 + $0xd8] sm:$0xff]
        %v1917 = vld [vmem:[#allocation3 + $0xe0] sm:$0xff]
        %v1918 = vld [vmem:[#allocation3 + $0xf0] sm:$0xff]
        %v1919 = vld [vmem:[#allocation3 + $0xf8] sm:$0xff]
        %v1920 = vld [vmem:[#allocation3 + $0x108] sm:$0xff]
        %v1921 = vld [vmem:[#allocation3 + $0x110] sm:$0xff]
        %v1922 = vld [vmem:[#allocation3 + $0x120] sm:$0xff]
        %v1923 = vld [vmem:[#allocation3 + $0x128] sm:$0xff]
        %v1924 = vld [vmem:[#allocation3 + $0x138] sm:$0xff]
        %v1925 = vld [vmem:[#allocation3 + $0x140] sm:$0xff]
        %v1926 = vld [vmem:[#allocation3 + $0x150] sm:$0xff]
        %v1927 = vld [vmem:[#allocation3 + $0x158] sm:$0xff]
        %v1928 = vld [vmem:[#allocation3 + $0x168] sm:$0xff]
        %v1929 = vld [vmem:[#allocation3 + $0x170] sm:$0xff]
        %v1930 = vld [vmem:[%s4] sm:$0x1]
        %v1931 = vlaneseq
        %v1932 = vshrl.u32 %v1931, 7
        %v1933 = vsub.s32 0, %v1932
        %v1934 = vrot.slane %v1930, %v1933
        %v1935 = vmul.f32 %v1898, %v1934
        %v1936 = vmul.f32 %v1899, %v1934
        %v1937 = vmul.f32 %v1900, %v1934
        %v1938 = vmul.f32 %v1901, %v1934
        %v1939 = vmul.f32 %v1902, %v1934
        %v1940 = vmul.f32 %v1903, %v1934
        %v1941 = vmul.f32 %v1904, %v1934
        %v1942 = vmul.f32 %v1905, %v1934
        %v1943 = vmul.f32 %v1906, %v1934
        %v1944 = vmul.f32 %v1907, %v1934
        %v1945 = vmul.f32 %v1908, %v1934
        %v1946 = vmul.f32 %v1909, %v1934
        %v1947 = vmul.f32 %v1910, %v1934
        %v1948 = vmul.f32 %v1911, %v1934
        %v1949 = vmul.f32 %v1912, %v1934
        %v1950 = vmul.f32 %v1913, %v1934
        %v1951 = vmul.f32 %v1914, %v1934
        %v1952 = vmul.f32 %v1915, %v1934
        %v1953 = vmul.f32 %v1916, %v1934
        %v1954 = vmul.f32 %v1917, %v1934
        %v1955 = vmul.f32 %v1918, %v1934
        %v1956 = vmul.f32 %v1919, %v1934
        %v1957 = vmul.f32 %v1920, %v1934
        %v1958 = vmul.f32 %v1921, %v1934
        %v1959 = vmul.f32 %v1922, %v1934
        %v1960 = vmul.f32 %v1923, %v1934
        %v1961 = vmul.f32 %v1924, %v1934
        %v1962 = vmul.f32 %v1925, %v1934
        %v1963 = vmul.f32 %v1926, %v1934
        %v1964 = vmul.f32 %v1927, %v1934
        %v1965 = vmul.f32 %v1928, %v1934
        %v1966 = vmul.f32 %v1929, %v1934
        %v1967 = vadd.f32 %v1935, 0.0
        %v1968 = vadd.f32 %v1936, 0.0
        %v1969 = vadd.f32 %v1937, 0.0
        %v1970 = vadd.f32 %v1938, 0.0
        %v1971 = vadd.f32 %v1939, 0.0
        %v1972 = vadd.f32 %v1940, 0.0
        %v1973 = vadd.f32 %v1941, 0.0
        %v1974 = vadd.f32 %v1942, 0.0
        %v1975 = vadd.f32 %v1943, 0.0
        %v1976 = vadd.f32 %v1944, 0.0
        %v1977 = vadd.f32 %v1945, 0.0
        %v1978 = vadd.f32 %v1946, 0.0
        %v1979 = vadd.f32 %v1947, 0.0
        %v1980 = vadd.f32 %v1948, 0.0
        %v1981 = vadd.f32 %v1949, 0.0
        %v1982 = vadd.f32 %v1950, 0.0
        %v1983 = vadd.f32 %v1951, 0.0
        %v1984 = vadd.f32 %v1952, 0.0
        %v1985 = vadd.f32 %v1953, 0.0
        %v1986 = vadd.f32 %v1954, 0.0
        %v1987 = vadd.f32 %v1955, 0.0
        %v1988 = vadd.f32 %v1956, 0.0
        %v1989 = vadd.f32 %v1957, 0.0
        %v1990 = vadd.f32 %v1958, 0.0
        %v1991 = vadd.f32 %v1959, 0.0
        %v1992 = vadd.f32 %v1960, 0.0
        %v1993 = vadd.f32 %v1961, 0.0
        %v1994 = vadd.f32 %v1962, 0.0
        %v1995 = vadd.f32 %v1963, 0.0
        %v1996 = vadd.f32 %v1964, 0.0
        %v1997 = vadd.f32 %v1965, 0.0
        %v1998 = vadd.f32 %v1966, 0.0
        %v1999 = vld [vmem:[#allocation3 + $0x1] sm:$0xff]
        %v2000 = vld [vmem:[#allocation3 + $0x9] sm:$0xff]
        %v2001 = vld [vmem:[#allocation3 + $0x19] sm:$0xff]
        %v2002 = vld [vmem:[#allocation3 + $0x21] sm:$0xff]
        %v2003 = vld [vmem:[#allocation3 + $0x31] sm:$0xff]
        %v2004 = vld [vmem:[#allocation3 + $0x39] sm:$0xff]
        %v2005 = vld [vmem:[#allocation3 + $0x49] sm:$0xff]
        %v2006 = vld [vmem:[#allocation3 + $0x51] sm:$0xff]
        %v2007 = vld [vmem:[#allocation3 + $0x61] sm:$0xff]
        %v2008 = vld [vmem:[#allocation3 + $0x69] sm:$0xff]
        %v2009 = vld [vmem:[#allocation3 + $0x79] sm:$0xff]
        %v2010 = vld [vmem:[#allocation3 + $0x81] sm:$0xff]
        %v2011 = vld [vmem:[#allocation3 + $0x91] sm:$0xff]
        %v2012 = vld [vmem:[#allocation3 + $0x99] sm:$0xff]
        %v2013 = vld [vmem:[#allocation3 + $0xa9] sm:$0xff]
        %v2014 = vld [vmem:[#allocation3 + $0xb1] sm:$0xff]
        %v2015 = vld [vmem:[#allocation3 + $0xc1] sm:$0xff]
        %v2016 = vld [vmem:[#allocation3 + $0xc9] sm:$0xff]
        %v2017 = vld [vmem:[#allocation3 + $0xd9] sm:$0xff]
        %v2018 = vld [vmem:[#allocation3 + $0xe1] sm:$0xff]
        %v2019 = vld [vmem:[#allocation3 + $0xf1] sm:$0xff]
        %v2020 = vld [vmem:[#allocation3 + $0xf9] sm:$0xff]
        %v2021 = vld [vmem:[#allocation3 + $0x109] sm:$0xff]
        %v2022 = vld [vmem:[#allocation3 + $0x111] sm:$0xff]
        %v2023 = vld [vmem:[#allocation3 + $0x121] sm:$0xff]
        %v2024 = vld [vmem:[#allocation3 + $0x129] sm:$0xff]
        %v2025 = vld [vmem:[#allocation3 + $0x139] sm:$0xff]
        %v2026 = vld [vmem:[#allocation3 + $0x141] sm:$0xff]
        %v2027 = vld [vmem:[#allocation3 + $0x151] sm:$0xff]
        %v2028 = vld [vmem:[#allocation3 + $0x159] sm:$0xff]
        %v2029 = vld [vmem:[#allocation3 + $0x169] sm:$0xff]
        %v2030 = vld [vmem:[#allocation3 + $0x171] sm:$0xff]
        %v2031 = vld [vmem:[%s4 + $0x1] sm:$0x1]
        %v2032 = vlaneseq
        %v2033 = vshrl.u32 %v2032, 7
        %v2034 = vsub.s32 0, %v2033
        %v2035 = vrot.slane %v2031, %v2034
        %v2036 = vmul.f32 %v1999, %v2035
        %v2037 = vmul.f32 %v2000, %v2035
        %v2038 = vmul.f32 %v2001, %v2035
        %v2039 = vmul.f32 %v2002, %v2035
        %v2040 = vmul.f32 %v2003, %v2035
        %v2041 = vmul.f32 %v2004, %v2035
        %v2042 = vmul.f32 %v2005, %v2035
        %v2043 = vmul.f32 %v2006, %v2035
        %v2044 = vmul.f32 %v2007, %v2035
        %v2045 = vmul.f32 %v2008, %v2035
        %v2046 = vmul.f32 %v2009, %v2035
        %v2047 = vmul.f32 %v2010, %v2035
        %v2048 = vmul.f32 %v2011, %v2035
        %v2049 = vmul.f32 %v2012, %v2035
        %v2050 = vmul.f32 %v2013, %v2035
        %v2051 = vmul.f32 %v2014, %v2035
        %v2052 = vmul.f32 %v2015, %v2035
        %v2053 = vmul.f32 %v2016, %v2035
        %v2054 = vmul.f32 %v2017, %v2035
        %v2055 = vmul.f32 %v2018, %v2035
        %v2056 = vmul.f32 %v2019, %v2035
        %v2057 = vmul.f32 %v2020, %v2035
        %v2058 = vmul.f32 %v2021, %v2035
        %v2059 = vmul.f32 %v2022, %v2035
        %v2060 = vmul.f32 %v2023, %v2035
        %v2061 = vmul.f32 %v2024, %v2035
        %v2062 = vmul.f32 %v2025, %v2035
        %v2063 = vmul.f32 %v2026, %v2035
        %v2064 = vmul.f32 %v2027, %v2035
        %v2065 = vmul.f32 %v2028, %v2035
        %v2066 = vmul.f32 %v2029, %v2035
        %v2067 = vmul.f32 %v2030, %v2035
        %v2068 = vadd.f32 %v1967, %v2036
        %v2069 = vadd.f32 %v1968, %v2037
        %v2070 = vadd.f32 %v1969, %v2038
        %v2071 = vadd.f32 %v1970, %v2039
        %v2072 = vadd.f32 %v1971, %v2040
        %v2073 = vadd.f32 %v1972, %v2041
        %v2074 = vadd.f32 %v1973, %v2042
        %v2075 = vadd.f32 %v1974, %v2043
        %v2076 = vadd.f32 %v1975, %v2044
        %v2077 = vadd.f32 %v1976, %v2045
        %v2078 = vadd.f32 %v1977, %v2046
        %v2079 = vadd.f32 %v1978, %v2047
        %v2080 = vadd.f32 %v1979, %v2048
        %v2081 = vadd.f32 %v1980, %v2049
        %v2082 = vadd.f32 %v1981, %v2050
        %v2083 = vadd.f32 %v1982, %v2051
        %v2084 = vadd.f32 %v1983, %v2052
        %v2085 = vadd.f32 %v1984, %v2053
        %v2086 = vadd.f32 %v1985, %v2054
        %v2087 = vadd.f32 %v1986, %v2055
        %v2088 = vadd.f32 %v1987, %v2056
        %v2089 = vadd.f32 %v1988, %v2057
        %v2090 = vadd.f32 %v1989, %v2058
        %v2091 = vadd.f32 %v1990, %v2059
        %v2092 = vadd.f32 %v1991, %v2060
        %v2093 = vadd.f32 %v1992, %v2061
        %v2094 = vadd.f32 %v1993, %v2062
        %v2095 = vadd.f32 %v1994, %v2063
        %v2096 = vadd.f32 %v1995, %v2064
        %v2097 = vadd.f32 %v1996, %v2065
        %v2098 = vadd.f32 %v1997, %v2066
        %v2099 = vadd.f32 %v1998, %v2067
        %v2100 = vld [vmem:[#allocation3 + $0x2] sm:$0xff]
        %v2101 = vld [vmem:[#allocation3 + $0xa] sm:$0xff]
        %v2102 = vld [vmem:[#allocation3 + $0x1a] sm:$0xff]
        %v2103 = vld [vmem:[#allocation3 + $0x22] sm:$0xff]
        %v2104 = vld [vmem:[#allocation3 + $0x32] sm:$0xff]
        %v2105 = vld [vmem:[#allocation3 + $0x3a] sm:$0xff]
        %v2106 = vld [vmem:[#allocation3 + $0x4a] sm:$0xff]
        %v2107 = vld [vmem:[#allocation3 + $0x52] sm:$0xff]
        %v2108 = vld [vmem:[#allocation3 + $0x62] sm:$0xff]
        %v2109 = vld [vmem:[#allocation3 + $0x6a] sm:$0xff]
        %v2110 = vld [vmem:[#allocation3 + $0x7a] sm:$0xff]
        %v2111 = vld [vmem:[#allocation3 + $0x82] sm:$0xff]
        %v2112 = vld [vmem:[#allocation3 + $0x92] sm:$0xff]
        %v2113 = vld [vmem:[#allocation3 + $0x9a] sm:$0xff]
        %v2114 = vld [vmem:[#allocation3 + $0xaa] sm:$0xff]
        %v2115 = vld [vmem:[#allocation3 + $0xb2] sm:$0xff]
        %v2116 = vld [vmem:[#allocation3 + $0xc2] sm:$0xff]
        %v2117 = vld [vmem:[#allocation3 + $0xca] sm:$0xff]
        %v2118 = vld [vmem:[#allocation3 + $0xda] sm:$0xff]
        %v2119 = vld [vmem:[#allocation3 + $0xe2] sm:$0xff]
        %v2120 = vld [vmem:[#allocation3 + $0xf2] sm:$0xff]
        %v2121 = vld [vmem:[#allocation3 + $0xfa] sm:$0xff]
        %v2122 = vld [vmem:[#allocation3 + $0x10a] sm:$0xff]
        %v2123 = vld [vmem:[#allocation3 + $0x112] sm:$0xff]
        %v2124 = vld [vmem:[#allocation3 + $0x122] sm:$0xff]
        %v2125 = vld [vmem:[#allocation3 + $0x12a] sm:$0xff]
        %v2126 = vld [vmem:[#allocation3 + $0x13a] sm:$0xff]
        %v2127 = vld [vmem:[#allocation3 + $0x142] sm:$0xff]
        %v2128 = vld [vmem:[#allocation3 + $0x152] sm:$0xff]
        %v2129 = vld [vmem:[#allocation3 + $0x15a] sm:$0xff]
        %v2130 = vld [vmem:[#allocation3 + $0x16a] sm:$0xff]
        %v2131 = vld [vmem:[#allocation3 + $0x172] sm:$0xff]
        %v2132 = vld [vmem:[%s4 + $0x2] sm:$0x1]
        %v2133 = vlaneseq
        %v2134 = vshrl.u32 %v2133, 7
        %v2135 = vsub.s32 0, %v2134
        %v2136 = vrot.slane %v2132, %v2135
        %v2137 = vmul.f32 %v2100, %v2136
        %v2138 = vmul.f32 %v2101, %v2136
        %v2139 = vmul.f32 %v2102, %v2136
        %v2140 = vmul.f32 %v2103, %v2136
        %v2141 = vmul.f32 %v2104, %v2136
        %v2142 = vmul.f32 %v2105, %v2136
        %v2143 = vmul.f32 %v2106, %v2136
        %v2144 = vmul.f32 %v2107, %v2136
        %v2145 = vmul.f32 %v2108, %v2136
        %v2146 = vmul.f32 %v2109, %v2136
        %v2147 = vmul.f32 %v2110, %v2136
        %v2148 = vmul.f32 %v2111, %v2136
        %v2149 = vmul.f32 %v2112, %v2136
        %v2150 = vmul.f32 %v2113, %v2136
        %v2151 = vmul.f32 %v2114, %v2136
        %v2152 = vmul.f32 %v2115, %v2136
        %v2153 = vmul.f32 %v2116, %v2136
        %v2154 = vmul.f32 %v2117, %v2136
        %v2155 = vmul.f32 %v2118, %v2136
        %v2156 = vmul.f32 %v2119, %v2136
        %v2157 = vmul.f32 %v2120, %v2136
        %v2158 = vmul.f32 %v2121, %v2136
        %v2159 = vmul.f32 %v2122, %v2136
        %v2160 = vmul.f32 %v2123, %v2136
        %v2161 = vmul.f32 %v2124, %v2136
        %v2162 = vmul.f32 %v2125, %v2136
        %v2163 = vmul.f32 %v2126, %v2136
        %v2164 = vmul.f32 %v2127, %v2136
        %v2165 = vmul.f32 %v2128, %v2136
        %v2166 = vmul.f32 %v2129, %v2136
        %v2167 = vmul.f32 %v2130, %v2136
        %v2168 = vmul.f32 %v2131, %v2136
        %v2169 = vadd.f32 %v2068, %v2137
        %v2170 = vadd.f32 %v2069, %v2138
        %v2171 = vadd.f32 %v2070, %v2139
        %v2172 = vadd.f32 %v2071, %v2140
        %v2173 = vadd.f32 %v2072, %v2141
        %v2174 = vadd.f32 %v2073, %v2142
        %v2175 = vadd.f32 %v2074, %v2143
        %v2176 = vadd.f32 %v2075, %v2144
        %v2177 = vadd.f32 %v2076, %v2145
        %v2178 = vadd.f32 %v2077, %v2146
        %v2179 = vadd.f32 %v2078, %v2147
        %v2180 = vadd.f32 %v2079, %v2148
        %v2181 = vadd.f32 %v2080, %v2149
        %v2182 = vadd.f32 %v2081, %v2150
        %v2183 = vadd.f32 %v2082, %v2151
        %v2184 = vadd.f32 %v2083, %v2152
        %v2185 = vadd.f32 %v2084, %v2153
        %v2186 = vadd.f32 %v2085, %v2154
        %v2187 = vadd.f32 %v2086, %v2155
        %v2188 = vadd.f32 %v2087, %v2156
        %v2189 = vadd.f32 %v2088, %v2157
        %v2190 = vadd.f32 %v2089, %v2158
        %v2191 = vadd.f32 %v2090, %v2159
        %v2192 = vadd.f32 %v2091, %v2160
        %v2193 = vadd.f32 %v2092, %v2161
        %v2194 = vadd.f32 %v2093, %v2162
        %v2195 = vadd.f32 %v2094, %v2163
        %v2196 = vadd.f32 %v2095, %v2164
        %v2197 = vadd.f32 %v2096, %v2165
        %v2198 = vadd.f32 %v2097, %v2166
        %v2199 = vadd.f32 %v2098, %v2167
        %v2200 = vadd.f32 %v2099, %v2168
        %v2201 = vld [vmem:[%s1865] sm:$0xff]
        %v2202 = vld [vmem:[%s1865 + $0x8] sm:$0xff]
        %v2203 = vld [vmem:[%s1865 + $0x18] sm:$0xff]
        %v2204 = vld [vmem:[%s1865 + $0x20] sm:$0xff]
        %v2205 = vld [vmem:[%s1865 + $0x30] sm:$0xff]
        %v2206 = vld [vmem:[%s1865 + $0x38] sm:$0xff]
        %v2207 = vld [vmem:[%s1865 + $0x48] sm:$0xff]
        %v2208 = vld [vmem:[%s1865 + $0x50] sm:$0xff]
        %v2209 = vld [vmem:[%s1865 + $0x60] sm:$0xff]
        %v2210 = vld [vmem:[%s1865 + $0x68] sm:$0xff]
        %v2211 = vld [vmem:[%s1865 + $0x78] sm:$0xff]
        %v2212 = vld [vmem:[%s1865 + $0x80] sm:$0xff]
        %v2213 = vld [vmem:[%s1865 + $0x90] sm:$0xff]
        %v2214 = vld [vmem:[%s1865 + $0x98] sm:$0xff]
        %v2215 = vld [vmem:[%s1865 + $0xa8] sm:$0xff]
        %v2216 = vld [vmem:[%s1865 + $0xb0] sm:$0xff]
        %v2217 = vld [vmem:[%s1865 + $0xc0] sm:$0xff]
        %v2218 = vld [vmem:[%s1865 + $0xc8] sm:$0xff]
        %v2219 = vld [vmem:[%s1865 + $0xd8] sm:$0xff]
        %v2220 = vld [vmem:[%s1865 + $0xe0] sm:$0xff]
        %v2221 = vld [vmem:[%s1865 + $0xf0] sm:$0xff]
        %v2222 = vld [vmem:[%s1865 + $0xf8] sm:$0xff]
        %v2223 = vld [vmem:[%s1865 + $0x108] sm:$0xff]
        %v2224 = vld [vmem:[%s1865 + $0x110] sm:$0xff]
        %v2225 = vld [vmem:[%s1865 + $0x120] sm:$0xff]
        %v2226 = vld [vmem:[%s1865 + $0x128] sm:$0xff]
        %v2227 = vld [vmem:[%s1865 + $0x138] sm:$0xff]
        %v2228 = vld [vmem:[%s1865 + $0x140] sm:$0xff]
        %v2229 = vld [vmem:[%s1865 + $0x150] sm:$0xff]
        %v2230 = vld [vmem:[%s1865 + $0x158] sm:$0xff]
        %v2231 = vld [vmem:[%s1865 + $0x168] sm:$0xff]
        %v2232 = vld [vmem:[%s1865 + $0x170] sm:$0xff]
        %v2233 = vld [vmem:[%s4 + $0x3] sm:$0x1]
        %v2234 = vlaneseq
        %v2235 = vshrl.u32 %v2234, 7
        %v2236 = vsub.s32 0, %v2235
        %v2237 = vrot.slane %v2233, %v2236
        %v2238 = vmul.f32 %v2201, %v2237
        %v2239 = vmul.f32 %v2202, %v2237
        %v2240 = vmul.f32 %v2203, %v2237
        %v2241 = vmul.f32 %v2204, %v2237
        %v2242 = vmul.f32 %v2205, %v2237
        %v2243 = vmul.f32 %v2206, %v2237
        %v2244 = vmul.f32 %v2207, %v2237
        %v2245 = vmul.f32 %v2208, %v2237
        %v2246 = vmul.f32 %v2209, %v2237
        %v2247 = vmul.f32 %v2210, %v2237
        %v2248 = vmul.f32 %v2211, %v2237
        %v2249 = vmul.f32 %v2212, %v2237
        %v2250 = vmul.f32 %v2213, %v2237
        %v2251 = vmul.f32 %v2214, %v2237
        %v2252 = vmul.f32 %v2215, %v2237
        %v2253 = vmul.f32 %v2216, %v2237
        %v2254 = vmul.f32 %v2217, %v2237
        %v2255 = vmul.f32 %v2218, %v2237
        %v2256 = vmul.f32 %v2219, %v2237
        %v2257 = vmul.f32 %v2220, %v2237
        %v2258 = vmul.f32 %v2221, %v2237
        %v2259 = vmul.f32 %v2222, %v2237
        %v2260 = vmul.f32 %v2223, %v2237
        %v2261 = vmul.f32 %v2224, %v2237
        %v2262 = vmul.f32 %v2225, %v2237
        %v2263 = vmul.f32 %v2226, %v2237
        %v2264 = vmul.f32 %v2227, %v2237
        %v2265 = vmul.f32 %v2228, %v2237
        %v2266 = vmul.f32 %v2229, %v2237
        %v2267 = vmul.f32 %v2230, %v2237
        %v2268 = vmul.f32 %v2231, %v2237
        %v2269 = vmul.f32 %v2232, %v2237
        %v2270 = vadd.f32 %v2169, %v2238
        %v2271 = vadd.f32 %v2170, %v2239
        %v2272 = vadd.f32 %v2171, %v2240
        %v2273 = vadd.f32 %v2172, %v2241
        %v2274 = vadd.f32 %v2173, %v2242
        %v2275 = vadd.f32 %v2174, %v2243
        %v2276 = vadd.f32 %v2175, %v2244
        %v2277 = vadd.f32 %v2176, %v2245
        %v2278 = vadd.f32 %v2177, %v2246
        %v2279 = vadd.f32 %v2178, %v2247
        %v2280 = vadd.f32 %v2179, %v2248
        %v2281 = vadd.f32 %v2180, %v2249
        %v2282 = vadd.f32 %v2181, %v2250
        %v2283 = vadd.f32 %v2182, %v2251
        %v2284 = vadd.f32 %v2183, %v2252
        %v2285 = vadd.f32 %v2184, %v2253
        %v2286 = vadd.f32 %v2185, %v2254
        %v2287 = vadd.f32 %v2186, %v2255
        %v2288 = vadd.f32 %v2187, %v2256
        %v2289 = vadd.f32 %v2188, %v2257
        %v2290 = vadd.f32 %v2189, %v2258
        %v2291 = vadd.f32 %v2190, %v2259
        %v2292 = vadd.f32 %v2191, %v2260
        %v2293 = vadd.f32 %v2192, %v2261
        %v2294 = vadd.f32 %v2193, %v2262
        %v2295 = vadd.f32 %v2194, %v2263
        %v2296 = vadd.f32 %v2195, %v2264
        %v2297 = vadd.f32 %v2196, %v2265
        %v2298 = vadd.f32 %v2197, %v2266
        %v2299 = vadd.f32 %v2198, %v2267
        %v2300 = vadd.f32 %v2199, %v2268
        %v2301 = vadd.f32 %v2200, %v2269
        %v2302 = vld [vmem:[%s1865 + $0x1] sm:$0xff]
        %v2303 = vld [vmem:[%s1865 + $0x9] sm:$0xff]
        %v2304 = vld [vmem:[%s1865 + $0x19] sm:$0xff]
        %v2305 = vld [vmem:[%s1865 + $0x21] sm:$0xff]
        %v2306 = vld [vmem:[%s1865 + $0x31] sm:$0xff]
        %v2307 = vld [vmem:[%s1865 + $0x39] sm:$0xff]
        %v2308 = vld [vmem:[%s1865 + $0x49] sm:$0xff]
        %v2309 = vld [vmem:[%s1865 + $0x51] sm:$0xff]
        %v2310 = vld [vmem:[%s1865 + $0x61] sm:$0xff]
        %v2311 = vld [vmem:[%s1865 + $0x69] sm:$0xff]
        %v2312 = vld [vmem:[%s1865 + $0x79] sm:$0xff]
        %v2313 = vld [vmem:[%s1865 + $0x81] sm:$0xff]
        %v2314 = vld [vmem:[%s1865 + $0x91] sm:$0xff]
        %v2315 = vld [vmem:[%s1865 + $0x99] sm:$0xff]
        %v2316 = vld [vmem:[%s1865 + $0xa9] sm:$0xff]
        %v2317 = vld [vmem:[%s1865 + $0xb1] sm:$0xff]
        %v2318 = vld [vmem:[%s1865 + $0xc1] sm:$0xff]
        %v2319 = vld [vmem:[%s1865 + $0xc9] sm:$0xff]
        %v2320 = vld [vmem:[%s1865 + $0xd9] sm:$0xff]
        %v2321 = vld [vmem:[%s1865 + $0xe1] sm:$0xff]
        %v2322 = vld [vmem:[%s1865 + $0xf1] sm:$0xff]
        %v2323 = vld [vmem:[%s1865 + $0xf9] sm:$0xff]
        %v2324 = vld [vmem:[%s1865 + $0x109] sm:$0xff]
        %v2325 = vld [vmem:[%s1865 + $0x111] sm:$0xff]
        %v2326 = vld [vmem:[%s1865 + $0x121] sm:$0xff]
        %v2327 = vld [vmem:[%s1865 + $0x129] sm:$0xff]
        %v2328 = vld [vmem:[%s1865 + $0x139] sm:$0xff]
        %v2329 = vld [vmem:[%s1865 + $0x141] sm:$0xff]
        %v2330 = vld [vmem:[%s1865 + $0x151] sm:$0xff]
        %v2331 = vld [vmem:[%s1865 + $0x159] sm:$0xff]
        %v2332 = vld [vmem:[%s1865 + $0x169] sm:$0xff]
        %v2333 = vld [vmem:[%s1865 + $0x171] sm:$0xff]
        %v2334 = vld [vmem:[%s4 + $0x4] sm:$0x1]
        %v2335 = vlaneseq
        %v2336 = vshrl.u32 %v2335, 7
        %v2337 = vsub.s32 0, %v2336
        %v2338 = vrot.slane %v2334, %v2337
        %v2339 = vmul.f32 %v2302, %v2338
        %v2340 = vmul.f32 %v2303, %v2338
        %v2341 = vmul.f32 %v2304, %v2338
        %v2342 = vmul.f32 %v2305, %v2338
        %v2343 = vmul.f32 %v2306, %v2338
        %v2344 = vmul.f32 %v2307, %v2338
        %v2345 = vmul.f32 %v2308, %v2338
        %v2346 = vmul.f32 %v2309, %v2338
        %v2347 = vmul.f32 %v2310, %v2338
        %v2348 = vmul.f32 %v2311, %v2338
        %v2349 = vmul.f32 %v2312, %v2338
        %v2350 = vmul.f32 %v2313, %v2338
        %v2351 = vmul.f32 %v2314, %v2338
        %v2352 = vmul.f32 %v2315, %v2338
        %v2353 = vmul.f32 %v2316, %v2338
        %v2354 = vmul.f32 %v2317, %v2338
        %v2355 = vmul.f32 %v2318, %v2338
        %v2356 = vmul.f32 %v2319, %v2338
        %v2357 = vmul.f32 %v2320, %v2338
        %v2358 = vmul.f32 %v2321, %v2338
        %v2359 = vmul.f32 %v2322, %v2338
        %v2360 = vmul.f32 %v2323, %v2338
        %v2361 = vmul.f32 %v2324, %v2338
        %v2362 = vmul.f32 %v2325, %v2338
        %v2363 = vmul.f32 %v2326, %v2338
        %v2364 = vmul.f32 %v2327, %v2338
        %v2365 = vmul.f32 %v2328, %v2338
        %v2366 = vmul.f32 %v2329, %v2338
        %v2367 = vmul.f32 %v2330, %v2338
        %v2368 = vmul.f32 %v2331, %v2338
        %v2369 = vmul.f32 %v2332, %v2338
        %v2370 = vmul.f32 %v2333, %v2338
        %v2371 = vadd.f32 %v2270, %v2339
        %v2372 = vadd.f32 %v2271, %v2340
        %v2373 = vadd.f32 %v2272, %v2341
        %v2374 = vadd.f32 %v2273, %v2342
        %v2375 = vadd.f32 %v2274, %v2343
        %v2376 = vadd.f32 %v2275, %v2344
        %v2377 = vadd.f32 %v2276, %v2345
        %v2378 = vadd.f32 %v2277, %v2346
        %v2379 = vadd.f32 %v2278, %v2347
        %v2380 = vadd.f32 %v2279, %v2348
        %v2381 = vadd.f32 %v2280, %v2349
        %v2382 = vadd.f32 %v2281, %v2350
        %v2383 = vadd.f32 %v2282, %v2351
        %v2384 = vadd.f32 %v2283, %v2352
        %v2385 = vadd.f32 %v2284, %v2353
        %v2386 = vadd.f32 %v2285, %v2354
        %v2387 = vadd.f32 %v2286, %v2355
        %v2388 = vadd.f32 %v2287, %v2356
        %v2389 = vadd.f32 %v2288, %v2357
        %v2390 = vadd.f32 %v2289, %v2358
        %v2391 = vadd.f32 %v2290, %v2359
        %v2392 = vadd.f32 %v2291, %v2360
        %v2393 = vadd.f32 %v2292, %v2361
        %v2394 = vadd.f32 %v2293, %v2362
        %v2395 = vadd.f32 %v2294, %v2363
        %v2396 = vadd.f32 %v2295, %v2364
        %v2397 = vadd.f32 %v2296, %v2365
        %v2398 = vadd.f32 %v2297, %v2366
        %v2399 = vadd.f32 %v2298, %v2367
        %v2400 = vadd.f32 %v2299, %v2368
        %v2401 = vadd.f32 %v2300, %v2369
        %v2402 = vadd.f32 %v2301, %v2370
        %v2403 = vld [vmem:[%s1865 + $0x2] sm:$0xff]
        %v2404 = vld [vmem:[%s1865 + $0xa] sm:$0xff]
        %v2405 = vld [vmem:[%s1865 + $0x1a] sm:$0xff]
        %v2406 = vld [vmem:[%s1865 + $0x22] sm:$0xff]
        %v2407 = vld [vmem:[%s1865 + $0x32] sm:$0xff]
        %v2408 = vld [vmem:[%s1865 + $0x3a] sm:$0xff]
        %v2409 = vld [vmem:[%s1865 + $0x4a] sm:$0xff]
        %v2410 = vld [vmem:[%s1865 + $0x52] sm:$0xff]
        %v2411 = vld [vmem:[%s1865 + $0x62] sm:$0xff]
        %v2412 = vld [vmem:[%s1865 + $0x6a] sm:$0xff]
        %v2413 = vld [vmem:[%s1865 + $0x7a] sm:$0xff]
        %v2414 = vld [vmem:[%s1865 + $0x82] sm:$0xff]
        %v2415 = vld [vmem:[%s1865 + $0x92] sm:$0xff]
        %v2416 = vld [vmem:[%s1865 + $0x9a] sm:$0xff]
        %v2417 = vld [vmem:[%s1865 + $0xaa] sm:$0xff]
        %v2418 = vld [vmem:[%s1865 + $0xb2] sm:$0xff]
        %v2419 = vld [vmem:[%s1865 + $0xc2] sm:$0xff]
        %v2420 = vld [vmem:[%s1865 + $0xca] sm:$0xff]
        %v2421 = vld [vmem:[%s1865 + $0xda] sm:$0xff]
        %v2422 = vld [vmem:[%s1865 + $0xe2] sm:$0xff]
        %v2423 = vld [vmem:[%s1865 + $0xf2] sm:$0xff]
        %v2424 = vld [vmem:[%s1865 + $0xfa] sm:$0xff]
        %v2425 = vld [vmem:[%s1865 + $0x10a] sm:$0xff]
        %v2426 = vld [vmem:[%s1865 + $0x112] sm:$0xff]
        %v2427 = vld [vmem:[%s1865 + $0x122] sm:$0xff]
        %v2428 = vld [vmem:[%s1865 + $0x12a] sm:$0xff]
        %v2429 = vld [vmem:[%s1865 + $0x13a] sm:$0xff]
        %v2430 = vld [vmem:[%s1865 + $0x142] sm:$0xff]
        %v2431 = vld [vmem:[%s1865 + $0x152] sm:$0xff]
        %v2432 = vld [vmem:[%s1865 + $0x15a] sm:$0xff]
        %v2433 = vld [vmem:[%s1865 + $0x16a] sm:$0xff]
        %v2434 = vld [vmem:[%s1865 + $0x172] sm:$0xff]
        %v2435 = vld [vmem:[%s4 + $0x5] sm:$0x1]
        %v2436 = vlaneseq
        %v2437 = vshrl.u32 %v2436, 7
        %v2438 = vsub.s32 0, %v2437
        %v2439 = vrot.slane %v2435, %v2438
        %v2440 = vmul.f32 %v2403, %v2439
        %v2441 = vmul.f32 %v2404, %v2439
        %v2442 = vmul.f32 %v2405, %v2439
        %v2443 = vmul.f32 %v2406, %v2439
        %v2444 = vmul.f32 %v2407, %v2439
        %v2445 = vmul.f32 %v2408, %v2439
        %v2446 = vmul.f32 %v2409, %v2439
        %v2447 = vmul.f32 %v2410, %v2439
        %v2448 = vmul.f32 %v2411, %v2439
        %v2449 = vmul.f32 %v2412, %v2439
        %v2450 = vmul.f32 %v2413, %v2439
        %v2451 = vmul.f32 %v2414, %v2439
        %v2452 = vmul.f32 %v2415, %v2439
        %v2453 = vmul.f32 %v2416, %v2439
        %v2454 = vmul.f32 %v2417, %v2439
        %v2455 = vmul.f32 %v2418, %v2439
        %v2456 = vmul.f32 %v2419, %v2439
        %v2457 = vmul.f32 %v2420, %v2439
        %v2458 = vmul.f32 %v2421, %v2439
        %v2459 = vmul.f32 %v2422, %v2439
        %v2460 = vmul.f32 %v2423, %v2439
        %v2461 = vmul.f32 %v2424, %v2439
        %v2462 = vmul.f32 %v2425, %v2439
        %v2463 = vmul.f32 %v2426, %v2439
        %v2464 = vmul.f32 %v2427, %v2439
        %v2465 = vmul.f32 %v2428, %v2439
        %v2466 = vmul.f32 %v2429, %v2439
        %v2467 = vmul.f32 %v2430, %v2439
        %v2468 = vmul.f32 %v2431, %v2439
        %v2469 = vmul.f32 %v2432, %v2439
        %v2470 = vmul.f32 %v2433, %v2439
        %v2471 = vmul.f32 %v2434, %v2439
        %v2472 = vadd.f32 %v2371, %v2440
        %v2473 = vadd.f32 %v2372, %v2441
        %v2474 = vadd.f32 %v2373, %v2442
        %v2475 = vadd.f32 %v2374, %v2443
        %v2476 = vadd.f32 %v2375, %v2444
        %v2477 = vadd.f32 %v2376, %v2445
        %v2478 = vadd.f32 %v2377, %v2446
        %v2479 = vadd.f32 %v2378, %v2447
        %v2480 = vadd.f32 %v2379, %v2448
        %v2481 = vadd.f32 %v2380, %v2449
        %v2482 = vadd.f32 %v2381, %v2450
        %v2483 = vadd.f32 %v2382, %v2451
        %v2484 = vadd.f32 %v2383, %v2452
        %v2485 = vadd.f32 %v2384, %v2453
        %v2486 = vadd.f32 %v2385, %v2454
        %v2487 = vadd.f32 %v2386, %v2455
        %v2488 = vadd.f32 %v2387, %v2456
        %v2489 = vadd.f32 %v2388, %v2457
        %v2490 = vadd.f32 %v2389, %v2458
        %v2491 = vadd.f32 %v2390, %v2459
        %v2492 = vadd.f32 %v2391, %v2460
        %v2493 = vadd.f32 %v2392, %v2461
        %v2494 = vadd.f32 %v2393, %v2462
        %v2495 = vadd.f32 %v2394, %v2463
        %v2496 = vadd.f32 %v2395, %v2464
        %v2497 = vadd.f32 %v2396, %v2465
        %v2498 = vadd.f32 %v2397, %v2466
        %v2499 = vadd.f32 %v2398, %v2467
        %v2500 = vadd.f32 %v2399, %v2468
        %v2501 = vadd.f32 %v2400, %v2469
        %v2502 = vadd.f32 %v2401, %v2470
        %v2503 = vadd.f32 %v2402, %v2471
        %s2504 = scalar_lea.vmem [#allocation3], 48
        %v2505 = vld [vmem:[%s2504] sm:$0xff]
        %v2506 = vld [vmem:[%s2504 + $0x8] sm:$0xff]
        %v2507 = vld [vmem:[%s2504 + $0x18] sm:$0xff]
        %v2508 = vld [vmem:[%s2504 + $0x20] sm:$0xff]
        %v2509 = vld [vmem:[%s2504 + $0x30] sm:$0xff]
        %v2510 = vld [vmem:[%s2504 + $0x38] sm:$0xff]
        %v2511 = vld [vmem:[%s2504 + $0x48] sm:$0xff]
        %v2512 = vld [vmem:[%s2504 + $0x50] sm:$0xff]
        %v2513 = vld [vmem:[%s2504 + $0x60] sm:$0xff]
        %v2514 = vld [vmem:[%s2504 + $0x68] sm:$0xff]
        %v2515 = vld [vmem:[%s2504 + $0x78] sm:$0xff]
        %v2516 = vld [vmem:[%s2504 + $0x80] sm:$0xff]
        %v2517 = vld [vmem:[%s2504 + $0x90] sm:$0xff]
        %v2518 = vld [vmem:[%s2504 + $0x98] sm:$0xff]
        %v2519 = vld [vmem:[%s2504 + $0xa8] sm:$0xff]
        %v2520 = vld [vmem:[%s2504 + $0xb0] sm:$0xff]
        %v2521 = vld [vmem:[%s2504 + $0xc0] sm:$0xff]
        %v2522 = vld [vmem:[%s2504 + $0xc8] sm:$0xff]
        %v2523 = vld [vmem:[%s2504 + $0xd8] sm:$0xff]
        %v2524 = vld [vmem:[%s2504 + $0xe0] sm:$0xff]
        %v2525 = vld [vmem:[%s2504 + $0xf0] sm:$0xff]
        %v2526 = vld [vmem:[%s2504 + $0xf8] sm:$0xff]
        %v2527 = vld [vmem:[%s2504 + $0x108] sm:$0xff]
        %v2528 = vld [vmem:[%s2504 + $0x110] sm:$0xff]
        %v2529 = vld [vmem:[%s2504 + $0x120] sm:$0xff]
        %v2530 = vld [vmem:[%s2504 + $0x128] sm:$0xff]
        %v2531 = vld [vmem:[%s2504 + $0x138] sm:$0xff]
        %v2532 = vld [vmem:[%s2504 + $0x140] sm:$0xff]
        %v2533 = vld [vmem:[%s2504 + $0x150] sm:$0xff]
        %v2534 = vld [vmem:[%s2504 + $0x158] sm:$0xff]
        %v2535 = vld [vmem:[%s2504 + $0x168] sm:$0xff]
        %v2536 = vld [vmem:[%s2504 + $0x170] sm:$0xff]
        %v2537 = vld [vmem:[%s4 + $0x6] sm:$0x1]
        %v2538 = vlaneseq
        %v2539 = vshrl.u32 %v2538, 7
        %v2540 = vsub.s32 0, %v2539
        %v2541 = vrot.slane %v2537, %v2540
        %v2542 = vmul.f32 %v2505, %v2541
        %v2543 = vmul.f32 %v2506, %v2541
        %v2544 = vmul.f32 %v2507, %v2541
        %v2545 = vmul.f32 %v2508, %v2541
        %v2546 = vmul.f32 %v2509, %v2541
        %v2547 = vmul.f32 %v2510, %v2541
        %v2548 = vmul.f32 %v2511, %v2541
        %v2549 = vmul.f32 %v2512, %v2541
        %v2550 = vmul.f32 %v2513, %v2541
        %v2551 = vmul.f32 %v2514, %v2541
        %v2552 = vmul.f32 %v2515, %v2541
        %v2553 = vmul.f32 %v2516, %v2541
        %v2554 = vmul.f32 %v2517, %v2541
        %v2555 = vmul.f32 %v2518, %v2541
        %v2556 = vmul.f32 %v2519, %v2541
        %v2557 = vmul.f32 %v2520, %v2541
        %v2558 = vmul.f32 %v2521, %v2541
        %v2559 = vmul.f32 %v2522, %v2541
        %v2560 = vmul.f32 %v2523, %v2541
        %v2561 = vmul.f32 %v2524, %v2541
        %v2562 = vmul.f32 %v2525, %v2541
        %v2563 = vmul.f32 %v2526, %v2541
        %v2564 = vmul.f32 %v2527, %v2541
        %v2565 = vmul.f32 %v2528, %v2541
        %v2566 = vmul.f32 %v2529, %v2541
        %v2567 = vmul.f32 %v2530, %v2541
        %v2568 = vmul.f32 %v2531, %v2541
        %v2569 = vmul.f32 %v2532, %v2541
        %v2570 = vmul.f32 %v2533, %v2541
        %v2571 = vmul.f32 %v2534, %v2541
        %v2572 = vmul.f32 %v2535, %v2541
        %v2573 = vmul.f32 %v2536, %v2541
        %v2574 = vadd.f32 %v2472, %v2542
        %v2575 = vadd.f32 %v2473, %v2543
        %v2576 = vadd.f32 %v2474, %v2544
        %v2577 = vadd.f32 %v2475, %v2545
        %v2578 = vadd.f32 %v2476, %v2546
        %v2579 = vadd.f32 %v2477, %v2547
        %v2580 = vadd.f32 %v2478, %v2548
        %v2581 = vadd.f32 %v2479, %v2549
        %v2582 = vadd.f32 %v2480, %v2550
        %v2583 = vadd.f32 %v2481, %v2551
        %v2584 = vadd.f32 %v2482, %v2552
        %v2585 = vadd.f32 %v2483, %v2553
        %v2586 = vadd.f32 %v2484, %v2554
        %v2587 = vadd.f32 %v2485, %v2555
        %v2588 = vadd.f32 %v2486, %v2556
        %v2589 = vadd.f32 %v2487, %v2557
        %v2590 = vadd.f32 %v2488, %v2558
        %v2591 = vadd.f32 %v2489, %v2559
        %v2592 = vadd.f32 %v2490, %v2560
        %v2593 = vadd.f32 %v2491, %v2561
        %v2594 = vadd.f32 %v2492, %v2562
        %v2595 = vadd.f32 %v2493, %v2563
        %v2596 = vadd.f32 %v2494, %v2564
        %v2597 = vadd.f32 %v2495, %v2565
        %v2598 = vadd.f32 %v2496, %v2566
        %v2599 = vadd.f32 %v2497, %v2567
        %v2600 = vadd.f32 %v2498, %v2568
        %v2601 = vadd.f32 %v2499, %v2569
        %v2602 = vadd.f32 %v2500, %v2570
        %v2603 = vadd.f32 %v2501, %v2571
        %v2604 = vadd.f32 %v2502, %v2572
        %v2605 = vadd.f32 %v2503, %v2573
        %v2606 = vld [vmem:[%s2504 + $0x1] sm:$0xff]
        %v2607 = vld [vmem:[%s2504 + $0x9] sm:$0xff]
        %v2608 = vld [vmem:[%s2504 + $0x19] sm:$0xff]
        %v2609 = vld [vmem:[%s2504 + $0x21] sm:$0xff]
        %v2610 = vld [vmem:[%s2504 + $0x31] sm:$0xff]
        %v2611 = vld [vmem:[%s2504 + $0x39] sm:$0xff]
        %v2612 = vld [vmem:[%s2504 + $0x49] sm:$0xff]
        %v2613 = vld [vmem:[%s2504 + $0x51] sm:$0xff]
        %v2614 = vld [vmem:[%s2504 + $0x61] sm:$0xff]
        %v2615 = vld [vmem:[%s2504 + $0x69] sm:$0xff]
        %v2616 = vld [vmem:[%s2504 + $0x79] sm:$0xff]
        %v2617 = vld [vmem:[%s2504 + $0x81] sm:$0xff]
        %v2618 = vld [vmem:[%s2504 + $0x91] sm:$0xff]
        %v2619 = vld [vmem:[%s2504 + $0x99] sm:$0xff]
        %v2620 = vld [vmem:[%s2504 + $0xa9] sm:$0xff]
        %v2621 = vld [vmem:[%s2504 + $0xb1] sm:$0xff]
        %v2622 = vld [vmem:[%s2504 + $0xc1] sm:$0xff]
        %v2623 = vld [vmem:[%s2504 + $0xc9] sm:$0xff]
        %v2624 = vld [vmem:[%s2504 + $0xd9] sm:$0xff]
        %v2625 = vld [vmem:[%s2504 + $0xe1] sm:$0xff]
        %v2626 = vld [vmem:[%s2504 + $0xf1] sm:$0xff]
        %v2627 = vld [vmem:[%s2504 + $0xf9] sm:$0xff]
        %v2628 = vld [vmem:[%s2504 + $0x109] sm:$0xff]
        %v2629 = vld [vmem:[%s2504 + $0x111] sm:$0xff]
        %v2630 = vld [vmem:[%s2504 + $0x121] sm:$0xff]
        %v2631 = vld [vmem:[%s2504 + $0x129] sm:$0xff]
        %v2632 = vld [vmem:[%s2504 + $0x139] sm:$0xff]
        %v2633 = vld [vmem:[%s2504 + $0x141] sm:$0xff]
        %v2634 = vld [vmem:[%s2504 + $0x151] sm:$0xff]
        %v2635 = vld [vmem:[%s2504 + $0x159] sm:$0xff]
        %v2636 = vld [vmem:[%s2504 + $0x169] sm:$0xff]
        %v2637 = vld [vmem:[%s2504 + $0x171] sm:$0xff]
        %v2638 = vld [vmem:[%s4 + $0x7] sm:$0x1]
        %v2639 = vlaneseq
        %v2640 = vshrl.u32 %v2639, 7
        %v2641 = vsub.s32 0, %v2640
        %v2642 = vrot.slane %v2638, %v2641
        %v2643 = vmul.f32 %v2606, %v2642
        %v2644 = vmul.f32 %v2607, %v2642
        %v2645 = vmul.f32 %v2608, %v2642
        %v2646 = vmul.f32 %v2609, %v2642
        %v2647 = vmul.f32 %v2610, %v2642
        %v2648 = vmul.f32 %v2611, %v2642
        %v2649 = vmul.f32 %v2612, %v2642
        %v2650 = vmul.f32 %v2613, %v2642
        %v2651 = vmul.f32 %v2614, %v2642
        %v2652 = vmul.f32 %v2615, %v2642
        %v2653 = vmul.f32 %v2616, %v2642
        %v2654 = vmul.f32 %v2617, %v2642
        %v2655 = vmul.f32 %v2618, %v2642
        %v2656 = vmul.f32 %v2619, %v2642
        %v2657 = vmul.f32 %v2620, %v2642
        %v2658 = vmul.f32 %v2621, %v2642
        %v2659 = vmul.f32 %v2622, %v2642
        %v2660 = vmul.f32 %v2623, %v2642
        %v2661 = vmul.f32 %v2624, %v2642
        %v2662 = vmul.f32 %v2625, %v2642
        %v2663 = vmul.f32 %v2626, %v2642
        %v2664 = vmul.f32 %v2627, %v2642
        %v2665 = vmul.f32 %v2628, %v2642
        %v2666 = vmul.f32 %v2629, %v2642
        %v2667 = vmul.f32 %v2630, %v2642
        %v2668 = vmul.f32 %v2631, %v2642
        %v2669 = vmul.f32 %v2632, %v2642
        %v2670 = vmul.f32 %v2633, %v2642
        %v2671 = vmul.f32 %v2634, %v2642
        %v2672 = vmul.f32 %v2635, %v2642
        %v2673 = vmul.f32 %v2636, %v2642
        %v2674 = vmul.f32 %v2637, %v2642
        %v2675 = vadd.f32 %v2574, %v2643
        %v2676 = vadd.f32 %v2575, %v2644
        %v2677 = vadd.f32 %v2576, %v2645
        %v2678 = vadd.f32 %v2577, %v2646
        %v2679 = vadd.f32 %v2578, %v2647
        %v2680 = vadd.f32 %v2579, %v2648
        %v2681 = vadd.f32 %v2580, %v2649
        %v2682 = vadd.f32 %v2581, %v2650
        %v2683 = vadd.f32 %v2582, %v2651
        %v2684 = vadd.f32 %v2583, %v2652
        %v2685 = vadd.f32 %v2584, %v2653
        %v2686 = vadd.f32 %v2585, %v2654
        %v2687 = vadd.f32 %v2586, %v2655
        %v2688 = vadd.f32 %v2587, %v2656
        %v2689 = vadd.f32 %v2588, %v2657
        %v2690 = vadd.f32 %v2589, %v2658
        %v2691 = vadd.f32 %v2590, %v2659
        %v2692 = vadd.f32 %v2591, %v2660
        %v2693 = vadd.f32 %v2592, %v2661
        %v2694 = vadd.f32 %v2593, %v2662
        %v2695 = vadd.f32 %v2594, %v2663
        %v2696 = vadd.f32 %v2595, %v2664
        %v2697 = vadd.f32 %v2596, %v2665
        %v2698 = vadd.f32 %v2597, %v2666
        %v2699 = vadd.f32 %v2598, %v2667
        %v2700 = vadd.f32 %v2599, %v2668
        %v2701 = vadd.f32 %v2600, %v2669
        %v2702 = vadd.f32 %v2601, %v2670
        %v2703 = vadd.f32 %v2602, %v2671
        %v2704 = vadd.f32 %v2603, %v2672
        %v2705 = vadd.f32 %v2604, %v2673
        %v2706 = vadd.f32 %v2605, %v2674
        %v2707 = vld [vmem:[%s2504 + $0x2] sm:$0xff]
        %v2708 = vld [vmem:[%s2504 + $0xa] sm:$0xff]
        %v2709 = vld [vmem:[%s2504 + $0x1a] sm:$0xff]
        %v2710 = vld [vmem:[%s2504 + $0x22] sm:$0xff]
        %v2711 = vld [vmem:[%s2504 + $0x32] sm:$0xff]
        %v2712 = vld [vmem:[%s2504 + $0x3a] sm:$0xff]
        %v2713 = vld [vmem:[%s2504 + $0x4a] sm:$0xff]
        %v2714 = vld [vmem:[%s2504 + $0x52] sm:$0xff]
        %v2715 = vld [vmem:[%s2504 + $0x62] sm:$0xff]
        %v2716 = vld [vmem:[%s2504 + $0x6a] sm:$0xff]
        %v2717 = vld [vmem:[%s2504 + $0x7a] sm:$0xff]
        %v2718 = vld [vmem:[%s2504 + $0x82] sm:$0xff]
        %v2719 = vld [vmem:[%s2504 + $0x92] sm:$0xff]
        %v2720 = vld [vmem:[%s2504 + $0x9a] sm:$0xff]
        %v2721 = vld [vmem:[%s2504 + $0xaa] sm:$0xff]
        %v2722 = vld [vmem:[%s2504 + $0xb2] sm:$0xff]
        %v2723 = vld [vmem:[%s2504 + $0xc2] sm:$0xff]
        %v2724 = vld [vmem:[%s2504 + $0xca] sm:$0xff]
        %v2725 = vld [vmem:[%s2504 + $0xda] sm:$0xff]
        %v2726 = vld [vmem:[%s2504 + $0xe2] sm:$0xff]
        %v2727 = vld [vmem:[%s2504 + $0xf2] sm:$0xff]
        %v2728 = vld [vmem:[%s2504 + $0xfa] sm:$0xff]
        %v2729 = vld [vmem:[%s2504 + $0x10a] sm:$0xff]
        %v2730 = vld [vmem:[%s2504 + $0x112] sm:$0xff]
        %v2731 = vld [vmem:[%s2504 + $0x122] sm:$0xff]
        %v2732 = vld [vmem:[%s2504 + $0x12a] sm:$0xff]
        %v2733 = vld [vmem:[%s2504 + $0x13a] sm:$0xff]
        %v2734 = vld [vmem:[%s2504 + $0x142] sm:$0xff]
        %v2735 = vld [vmem:[%s2504 + $0x152] sm:$0xff]
        %v2736 = vld [vmem:[%s2504 + $0x15a] sm:$0xff]
        %v2737 = vld [vmem:[%s2504 + $0x16a] sm:$0xff]
        %v2738 = vld [vmem:[%s2504 + $0x172] sm:$0xff]
        %v2739 = vld [vmem:[%s4 + $0x8] sm:$0x1]
        %v2740 = vlaneseq
        %v2741 = vshrl.u32 %v2740, 7
        %v2742 = vsub.s32 0, %v2741
        %v2743 = vrot.slane %v2739, %v2742
        %v2744 = vmul.f32 %v2707, %v2743
        %v2745 = vmul.f32 %v2708, %v2743
        %v2746 = vmul.f32 %v2709, %v2743
        %v2747 = vmul.f32 %v2710, %v2743
        %v2748 = vmul.f32 %v2711, %v2743
        %v2749 = vmul.f32 %v2712, %v2743
        %v2750 = vmul.f32 %v2713, %v2743
        %v2751 = vmul.f32 %v2714, %v2743
        %v2752 = vmul.f32 %v2715, %v2743
        %v2753 = vmul.f32 %v2716, %v2743
        %v2754 = vmul.f32 %v2717, %v2743
        %v2755 = vmul.f32 %v2718, %v2743
        %v2756 = vmul.f32 %v2719, %v2743
        %v2757 = vmul.f32 %v2720, %v2743
        %v2758 = vmul.f32 %v2721, %v2743
        %v2759 = vmul.f32 %v2722, %v2743
        %v2760 = vmul.f32 %v2723, %v2743
        %v2761 = vmul.f32 %v2724, %v2743
        %v2762 = vmul.f32 %v2725, %v2743
        %v2763 = vmul.f32 %v2726, %v2743
        %v2764 = vmul.f32 %v2727, %v2743
        %v2765 = vmul.f32 %v2728, %v2743
        %v2766 = vmul.f32 %v2729, %v2743
        %v2767 = vmul.f32 %v2730, %v2743
        %v2768 = vmul.f32 %v2731, %v2743
        %v2769 = vmul.f32 %v2732, %v2743
        %v2770 = vmul.f32 %v2733, %v2743
        %v2771 = vmul.f32 %v2734, %v2743
        %v2772 = vmul.f32 %v2735, %v2743
        %v2773 = vmul.f32 %v2736, %v2743
        %v2774 = vmul.f32 %v2737, %v2743
        %v2775 = vmul.f32 %v2738, %v2743
        %v2776 = vadd.f32 %v2675, %v2744
        %v2777 = vadd.f32 %v2676, %v2745
        %v2778 = vadd.f32 %v2677, %v2746
        %v2779 = vadd.f32 %v2678, %v2747
        %v2780 = vadd.f32 %v2679, %v2748
        %v2781 = vadd.f32 %v2680, %v2749
        %v2782 = vadd.f32 %v2681, %v2750
        %v2783 = vadd.f32 %v2682, %v2751
        %v2784 = vadd.f32 %v2683, %v2752
        %v2785 = vadd.f32 %v2684, %v2753
        %v2786 = vadd.f32 %v2685, %v2754
        %v2787 = vadd.f32 %v2686, %v2755
        %v2788 = vadd.f32 %v2687, %v2756
        %v2789 = vadd.f32 %v2688, %v2757
        %v2790 = vadd.f32 %v2689, %v2758
        %v2791 = vadd.f32 %v2690, %v2759
        %v2792 = vadd.f32 %v2691, %v2760
        %v2793 = vadd.f32 %v2692, %v2761
        %v2794 = vadd.f32 %v2693, %v2762
        %v2795 = vadd.f32 %v2694, %v2763
        %v2796 = vadd.f32 %v2695, %v2764
        %v2797 = vadd.f32 %v2696, %v2765
        %v2798 = vadd.f32 %v2697, %v2766
        %v2799 = vadd.f32 %v2698, %v2767
        %v2800 = vadd.f32 %v2699, %v2768
        %v2801 = vadd.f32 %v2700, %v2769
        %v2802 = vadd.f32 %v2701, %v2770
        %v2803 = vadd.f32 %v2702, %v2771
        %v2804 = vadd.f32 %v2703, %v2772
        %v2805 = vadd.f32 %v2704, %v2773
        %v2806 = vadd.f32 %v2705, %v2774
        %v2807 = vadd.f32 %v2706, %v2775
        %v2808 = vld [vmem:[%s5] sm:$0xff]
        %v2809 = vld [vmem:[%s5 + $0x8] sm:$0xff]
        %v2810 = vld [vmem:[%s6] sm:$0x1]
        %v2812 = vlaneseq
        %v2813 = vshrl.u32 %v2812, 7
        %v2814 = vsub.s32 0, %v2813
        %v2815 = vrot.slane %v2810, %v2814
        %v2818 = vsel %vm441, %v2776, 0
        %v2821 = vsel %vm441, %v2777, 0
        %v2824 = vsel %vm441, %v2778, 0
        %v2827 = vsel %vm441, %v2779, 0
        %v2830 = vsel %vm441, %v2780, 0
        %v2833 = vsel %vm441, %v2781, 0
        %v2836 = vsel %vm441, %v2782, 0
        %v2839 = vsel %vm441, %v2783, 0
        %v2842 = vsel %vm441, %v2784, 0
        %v2845 = vsel %vm441, %v2785, 0
        %v2848 = vsel %vm441, %v2786, 0
        %v2851 = vsel %vm441, %v2787, 0
        %v2854 = vsel %vm441, %v2788, 0
        %v2857 = vsel %vm441, %v2789, 0
        %v2860 = vsel %vm441, %v2790, 0
        %v2863 = vsel %vm441, %v2791, 0
        %v2866 = vsel %vm441, %v2792, 0
        %v2869 = vsel %vm441, %v2793, 0
        %v2872 = vsel %vm441, %v2794, 0
        %v2875 = vsel %vm441, %v2795, 0
        %v2878 = vsel %vm441, %v2796, 0
        %v2881 = vsel %vm441, %v2797, 0
        %v2884 = vsel %vm441, %v2798, 0
        %v2887 = vsel %vm441, %v2799, 0
        %v2890 = vsel %vm441, %v2800, 0
        %v2893 = vsel %vm441, %v2801, 0
        %v2896 = vsel %vm441, %v2802, 0
        %v2899 = vsel %vm441, %v2803, 0
        %v2902 = vsel %vm441, %v2804, 0
        %v2905 = vsel %vm441, %v2805, 0
        %v2908 = vsel %vm441, %v2806, 0
        %v2911 = vsel %vm441, %v2807, 0
        %2913 = vmatprep.subr.mxu0 0.0
        %2914 = vmatpush1.msra.mxu0 0.0
        %2915 = vmatprep.subr.mxu0 0.0
        %2916 = vmatpush1.msra.mxu0 0.0
        %2917 = vmatprep.subr.mxu0 0.0
        %2918 = vmatpush1.msra.mxu0 0.0
        %2919 = vmatprep.subr.mxu0 0.0
        %2920 = vmatpush1.msra.mxu0 0.0
        %2921 = vmatprep.subr.mxu0 0.0
        %2922 = vmatpush1.msra.mxu0 0.0
        %2923 = vmatprep.subr.mxu0 0.0
        %2924 = vmatpush1.msra.mxu0 0.0
        %2925 = vmatprep.subr.mxu0 0.0
        %2926 = vmatpush1.msra.mxu0 0.0
        %2927 = vmatprep.subr.mxu0 0.0
        %2928 = vmatpush1.msra.mxu0 0.0
        %2929 = vmatprep.subr.mxu0 0.0
        %2930 = vmatpush1.msra.mxu0 0.0
        %2931 = vmatprep.subr.mxu0 0.0
        %2932 = vmatpush1.msra.mxu0 0.0
        %2933 = vmatprep.subr.mxu0 0.0
        %2934 = vmatpush1.msra.mxu0 0.0
        %2935 = vmatprep.subr.mxu0 0.0
        %2936 = vmatpush1.msra.mxu0 0.0
        %2937 = vmatprep.subr.mxu0 0.0
        %2938 = vmatpush1.msra.mxu0 0.0
        %2939 = vmatprep.subr.mxu0 0.0
        %2940 = vmatpush1.msra.mxu0 0.0
        %2941 = vmatprep.subr.mxu0 0.0
        %2942 = vmatpush1.msra.mxu0 %v2809
        %2943 = vmatprep.subr.mxu0 0.0
        %2944 = vmatpush1.msra.mxu0 %v2808
        %2945 = vmatprep.subr.mxu0 0.0
        %2946 = vmatpush2.msra.mxu0 0.0
        %2947 = vmatprep.subr.mxu0 0.0
        %2948 = vmatpush2.msra.mxu0 0.0
        %2949 = vmatprep.subr.mxu0 0.0
        %2950 = vmatpush2.msra.mxu0 0.0
        %2951 = vmatprep.subr.mxu0 0.0
        %2952 = vmatpush2.msra.mxu0 0.0
        %2953 = vmatprep.subr.mxu0 0.0
        %2954 = vmatpush2.msra.mxu0 0.0
        %2955 = vmatprep.subr.mxu0 0.0
        %2956 = vmatpush2.msra.mxu0 0.0
        %2957 = vmatprep.subr.mxu0 0.0
        %2958 = vmatpush2.msra.mxu0 0.0
        %2959 = vmatprep.subr.mxu0 0.0
        %2960 = vmatpush2.msra.mxu0 0.0
        %2961 = vmatprep.subr.mxu0 0.0
        %2962 = vmatpush2.msra.mxu0 0.0
        %2963 = vmatprep.subr.mxu0 0.0
        %2964 = vmatpush2.msra.mxu0 0.0
        %2965 = vmatprep.subr.mxu0 0.0
        %2966 = vmatpush2.msra.mxu0 0.0
        %2967 = vmatprep.subr.mxu0 0.0
        %2968 = vmatpush2.msra.mxu0 0.0
        %2969 = vmatprep.subr.mxu0 0.0
        %2970 = vmatpush2.msra.mxu0 0.0
        %2971 = vmatprep.subr.mxu0 0.0
        %2972 = vmatpush2.msra.mxu0 0.0
        %2973 = vmatprep.subr.mxu0 0.0
        %2974 = vmatpush2.msra.mxu0 0.0
        %2975 = vmatprep.subr.mxu0 0.0
        %2976 = vmatpush2.msra.mxu0 0.0
        %2977 = vmatprep.mubr.f32.mxu0 0.0
        %2978 = vmatmul.mubr.f32.gmra.mxu0 %v2818
        %v2979 = vpop.f32.mrf.mxu0
        %v2980 = vadd.f32 %v2815, %v2979
        %v2981 = vpop.f32.mrf.mxu0
        %2982 = vmatprep.mubr.f32.mxu0 0.0
        %2983 = vmatmul.mubr.f32.gmra.mxu0 %v2821
        %v2984 = vpop.f32.mrf.mxu0
        %v2985 = vadd.f32 %v2815, %v2984
        %v2986 = vpop.f32.mrf.mxu0
        %2987 = vmatprep.mubr.f32.mxu0 0.0
        %2988 = vmatmul.mubr.f32.gmra.mxu0 %v2824
        %v2989 = vpop.f32.mrf.mxu0
        %v2990 = vadd.f32 %v2815, %v2989
        %v2991 = vpop.f32.mrf.mxu0
        %2992 = vmatprep.mubr.f32.mxu0 0.0
        %2993 = vmatmul.mubr.f32.gmra.mxu0 %v2827
        %v2994 = vpop.f32.mrf.mxu0
        %v2995 = vadd.f32 %v2815, %v2994
        %v2996 = vpop.f32.mrf.mxu0
        %2997 = vmatprep.mubr.f32.mxu0 0.0
        %2998 = vmatmul.mubr.f32.gmra.mxu0 %v2830
        %v2999 = vpop.f32.mrf.mxu0
        %v3000 = vadd.f32 %v2815, %v2999
        %v3001 = vpop.f32.mrf.mxu0
        %3002 = vmatprep.mubr.f32.mxu0 0.0
        %3003 = vmatmul.mubr.f32.gmra.mxu0 %v2833
        %v3004 = vpop.f32.mrf.mxu0
        %v3005 = vadd.f32 %v2815, %v3004
        %v3006 = vpop.f32.mrf.mxu0
        %3007 = vmatprep.mubr.f32.mxu0 0.0
        %3008 = vmatmul.mubr.f32.gmra.mxu0 %v2836
        %v3009 = vpop.f32.mrf.mxu0
        %v3010 = vadd.f32 %v2815, %v3009
        %v3011 = vpop.f32.mrf.mxu0
        %3012 = vmatprep.mubr.f32.mxu0 0.0
        %3013 = vmatmul.mubr.f32.gmra.mxu0 %v2839
        %v3014 = vpop.f32.mrf.mxu0
        %v3015 = vadd.f32 %v2815, %v3014
        %v3016 = vpop.f32.mrf.mxu0
        %3017 = vmatprep.mubr.f32.mxu0 0.0
        %3018 = vmatmul.mubr.f32.gmra.mxu0 %v2842
        %v3019 = vpop.f32.mrf.mxu0
        %v3020 = vadd.f32 %v2815, %v3019
        %v3021 = vpop.f32.mrf.mxu0
        %3022 = vmatprep.mubr.f32.mxu0 0.0
        %3023 = vmatmul.mubr.f32.gmra.mxu0 %v2845
        %v3024 = vpop.f32.mrf.mxu0
        %v3025 = vadd.f32 %v2815, %v3024
        %v3026 = vpop.f32.mrf.mxu0
        %3027 = vmatprep.mubr.f32.mxu0 0.0
        %3028 = vmatmul.mubr.f32.gmra.mxu0 %v2848
        %v3029 = vpop.f32.mrf.mxu0
        %v3030 = vadd.f32 %v2815, %v3029
        %v3031 = vpop.f32.mrf.mxu0
        %3032 = vmatprep.mubr.f32.mxu0 0.0
        %3033 = vmatmul.mubr.f32.gmra.mxu0 %v2851
        %v3034 = vpop.f32.mrf.mxu0
        %v3035 = vadd.f32 %v2815, %v3034
        %v3036 = vpop.f32.mrf.mxu0
        %3037 = vmatprep.mubr.f32.mxu0 0.0
        %3038 = vmatmul.mubr.f32.gmra.mxu0 %v2854
        %v3039 = vpop.f32.mrf.mxu0
        %v3040 = vadd.f32 %v2815, %v3039
        %v3041 = vpop.f32.mrf.mxu0
        %3042 = vmatprep.mubr.f32.mxu0 0.0
        %3043 = vmatmul.mubr.f32.gmra.mxu0 %v2857
        %v3044 = vpop.f32.mrf.mxu0
        %v3045 = vadd.f32 %v2815, %v3044
        %v3046 = vpop.f32.mrf.mxu0
        %3047 = vmatprep.mubr.f32.mxu0 0.0
        %3048 = vmatmul.mubr.f32.gmra.mxu0 %v2860
        %v3049 = vpop.f32.mrf.mxu0
        %v3050 = vadd.f32 %v2815, %v3049
        %v3051 = vpop.f32.mrf.mxu0
        %3052 = vmatprep.mubr.f32.mxu0 0.0
        %3053 = vmatmul.mubr.f32.gmra.mxu0 %v2863
        %v3054 = vpop.f32.mrf.mxu0
        %v3055 = vadd.f32 %v2815, %v3054
        %v3056 = vpop.f32.mrf.mxu0
        %3057 = vmatprep.mubr.f32.mxu0 0.0
        %3058 = vmatmul.mubr.f32.gmra.mxu0 %v2866
        %v3059 = vpop.f32.mrf.mxu0
        %v3060 = vadd.f32 %v2815, %v3059
        %v3061 = vpop.f32.mrf.mxu0
        %3062 = vmatprep.mubr.f32.mxu0 0.0
        %3063 = vmatmul.mubr.f32.gmra.mxu0 %v2869
        %v3064 = vpop.f32.mrf.mxu0
        %v3065 = vadd.f32 %v2815, %v3064
        %v3066 = vpop.f32.mrf.mxu0
        %3067 = vmatprep.mubr.f32.mxu0 0.0
        %3068 = vmatmul.mubr.f32.gmra.mxu0 %v2872
        %v3069 = vpop.f32.mrf.mxu0
        %v3070 = vadd.f32 %v2815, %v3069
        %v3071 = vpop.f32.mrf.mxu0
        %3072 = vmatprep.mubr.f32.mxu0 0.0
        %3073 = vmatmul.mubr.f32.gmra.mxu0 %v2875
        %v3074 = vpop.f32.mrf.mxu0
        %v3075 = vadd.f32 %v2815, %v3074
        %v3076 = vpop.f32.mrf.mxu0
        %3077 = vmatprep.mubr.f32.mxu0 0.0
        %3078 = vmatmul.mubr.f32.gmra.mxu0 %v2878
        %v3079 = vpop.f32.mrf.mxu0
        %v3080 = vadd.f32 %v2815, %v3079
        %v3081 = vpop.f32.mrf.mxu0
        %3082 = vmatprep.mubr.f32.mxu0 0.0
        %3083 = vmatmul.mubr.f32.gmra.mxu0 %v2881
        %v3084 = vpop.f32.mrf.mxu0
        %v3085 = vadd.f32 %v2815, %v3084
        %v3086 = vpop.f32.mrf.mxu0
        %3087 = vmatprep.mubr.f32.mxu0 0.0
        %3088 = vmatmul.mubr.f32.gmra.mxu0 %v2884
        %v3089 = vpop.f32.mrf.mxu0
        %v3090 = vadd.f32 %v2815, %v3089
        %v3091 = vpop.f32.mrf.mxu0
        %3092 = vmatprep.mubr.f32.mxu0 0.0
        %3093 = vmatmul.mubr.f32.gmra.mxu0 %v2887
        %v3094 = vpop.f32.mrf.mxu0
        %v3095 = vadd.f32 %v2815, %v3094
        %v3096 = vpop.f32.mrf.mxu0
        %3097 = vmatprep.mubr.f32.mxu0 0.0
        %3098 = vmatmul.mubr.f32.gmra.mxu0 %v2890
        %v3099 = vpop.f32.mrf.mxu0
        %v3100 = vadd.f32 %v2815, %v3099
        %v3101 = vpop.f32.mrf.mxu0
        %3102 = vmatprep.mubr.f32.mxu0 0.0
        %3103 = vmatmul.mubr.f32.gmra.mxu0 %v2893
        %v3104 = vpop.f32.mrf.mxu0
        %v3105 = vadd.f32 %v2815, %v3104
        %v3106 = vpop.f32.mrf.mxu0
        %3107 = vmatprep.mubr.f32.mxu0 0.0
        %3108 = vmatmul.mubr.f32.gmra.mxu0 %v2896
        %v3109 = vpop.f32.mrf.mxu0
        %v3110 = vadd.f32 %v2815, %v3109
        %v3111 = vpop.f32.mrf.mxu0
        %3112 = vmatprep.mubr.f32.mxu0 0.0
        %3113 = vmatmul.mubr.f32.gmra.mxu0 %v2899
        %v3114 = vpop.f32.mrf.mxu0
        %v3115 = vadd.f32 %v2815, %v3114
        %v3116 = vpop.f32.mrf.mxu0
        %3117 = vmatprep.mubr.f32.mxu0 0.0
        %3118 = vmatmul.mubr.f32.gmra.mxu0 %v2902
        %v3119 = vpop.f32.mrf.mxu0
        %v3120 = vadd.f32 %v2815, %v3119
        %v3121 = vpop.f32.mrf.mxu0
        %3122 = vmatprep.mubr.f32.mxu0 0.0
        %3123 = vmatmul.mubr.f32.gmra.mxu0 %v2905
        %v3124 = vpop.f32.mrf.mxu0
        %v3125 = vadd.f32 %v2815, %v3124
        %v3126 = vpop.f32.mrf.mxu0
        %3127 = vmatprep.mubr.f32.mxu0 0.0
        %3128 = vmatmul.mubr.f32.gmra.mxu0 %v2908
        %v3129 = vpop.f32.mrf.mxu0
        %v3130 = vadd.f32 %v2815, %v3129
        %v3131 = vpop.f32.mrf.mxu0
        %3132 = vmatprep.mubr.f32.mxu0 0.0
        %3133 = vmatmul.mubr.f32.gmra.mxu0 %v2911
        %v3134 = vpop.f32.mrf.mxu0
        %v3135 = vadd.f32 %v2815, %v3134
        %v3136 = vpop.f32.mrf.mxu0
        %3137 = vdwg.mxu0
        %v3138 = vmax.f32 %v2980, 0.0
        %v3139 = vmax.f32 %v2985, 0.0
        %v3140 = vmax.f32 %v2990, 0.0
        %v3141 = vmax.f32 %v2995, 0.0
        %v3142 = vmax.f32 %v3000, 0.0
        %v3143 = vmax.f32 %v3005, 0.0
        %v3144 = vmax.f32 %v3010, 0.0
        %v3145 = vmax.f32 %v3015, 0.0
        %v3146 = vmax.f32 %v3020, 0.0
        %v3147 = vmax.f32 %v3025, 0.0
        %v3148 = vmax.f32 %v3030, 0.0
        %v3149 = vmax.f32 %v3035, 0.0
        %v3150 = vmax.f32 %v3040, 0.0
        %v3151 = vmax.f32 %v3045, 0.0
        %v3152 = vmax.f32 %v3050, 0.0
        %v3153 = vmax.f32 %v3055, 0.0
        %v3154 = vmax.f32 %v3060, 0.0
        %v3155 = vmax.f32 %v3065, 0.0
        %v3156 = vmax.f32 %v3070, 0.0
        %v3157 = vmax.f32 %v3075, 0.0
        %v3158 = vmax.f32 %v3080, 0.0
        %v3159 = vmax.f32 %v3085, 0.0
        %v3160 = vmax.f32 %v3090, 0.0
        %v3161 = vmax.f32 %v3095, 0.0
        %v3162 = vmax.f32 %v3100, 0.0
        %v3163 = vmax.f32 %v3105, 0.0
        %v3164 = vmax.f32 %v3110, 0.0
        %v3165 = vmax.f32 %v3115, 0.0
        %v3166 = vmax.f32 %v3120, 0.0
        %v3167 = vmax.f32 %v3125, 0.0
        %v3168 = vmax.f32 %v3130, 0.0
        %v3169 = vmax.f32 %v3135, 0.0
        %3170 = vst.msk [vmem:[%s1865 + $0x1] sm:$0xff] %vm441, %v3138
        %3171 = vst.msk [vmem:[%s1865 + $0x9] sm:$0xff] %vm441, %v3139
        %3172 = vst.msk [vmem:[%s1865 + $0x19] sm:$0xff] %vm441, %v3140
        %3173 = vst.msk [vmem:[%s1865 + $0x21] sm:$0xff] %vm441, %v3141
        %3174 = vst.msk [vmem:[%s1865 + $0x31] sm:$0xff] %vm441, %v3142
        %3175 = vst.msk [vmem:[%s1865 + $0x39] sm:$0xff] %vm441, %v3143
        %3176 = vst.msk [vmem:[%s1865 + $0x49] sm:$0xff] %vm441, %v3144
        %3177 = vst.msk [vmem:[%s1865 + $0x51] sm:$0xff] %vm441, %v3145
        %3178 = vst.msk [vmem:[%s1865 + $0x61] sm:$0xff] %vm441, %v3146
        %3179 = vst.msk [vmem:[%s1865 + $0x69] sm:$0xff] %vm441, %v3147
        %3180 = vst.msk [vmem:[%s1865 + $0x79] sm:$0xff] %vm441, %v3148
        %3181 = vst.msk [vmem:[%s1865 + $0x81] sm:$0xff] %vm441, %v3149
        %3182 = vst.msk [vmem:[%s1865 + $0x91] sm:$0xff] %vm441, %v3150
        %3183 = vst.msk [vmem:[%s1865 + $0x99] sm:$0xff] %vm441, %v3151
        %3184 = vst.msk [vmem:[%s1865 + $0xa9] sm:$0xff] %vm441, %v3152
        %3185 = vst.msk [vmem:[%s1865 + $0xb1] sm:$0xff] %vm441, %v3153
        %3186 = vst.msk [vmem:[%s1865 + $0xc1] sm:$0xff] %vm441, %v3154
        %3187 = vst.msk [vmem:[%s1865 + $0xc9] sm:$0xff] %vm441, %v3155
        %3188 = vst.msk [vmem:[%s1865 + $0xd9] sm:$0xff] %vm441, %v3156
        %3189 = vst.msk [vmem:[%s1865 + $0xe1] sm:$0xff] %vm441, %v3157
        %3190 = vst.msk [vmem:[%s1865 + $0xf1] sm:$0xff] %vm441, %v3158
        %3191 = vst.msk [vmem:[%s1865 + $0xf9] sm:$0xff] %vm441, %v3159
        %3192 = vst.msk [vmem:[%s1865 + $0x109] sm:$0xff] %vm441, %v3160
        %3193 = vst.msk [vmem:[%s1865 + $0x111] sm:$0xff] %vm441, %v3161
        %3194 = vst.msk [vmem:[%s1865 + $0x121] sm:$0xff] %vm441, %v3162
        %3195 = vst.msk [vmem:[%s1865 + $0x129] sm:$0xff] %vm441, %v3163
        %3196 = vst.msk [vmem:[%s1865 + $0x139] sm:$0xff] %vm441, %v3164
        %3197 = vst.msk [vmem:[%s1865 + $0x141] sm:$0xff] %vm441, %v3165
        %3198 = vst.msk [vmem:[%s1865 + $0x151] sm:$0xff] %vm441, %v3166
        %3199 = vst.msk [vmem:[%s1865 + $0x159] sm:$0xff] %vm441, %v3167
        %3200 = vst.msk [vmem:[%s1865 + $0x169] sm:$0xff] %vm441, %v3168
        %3201 = vst.msk [vmem:[%s1865 + $0x171] sm:$0xff] %vm441, %v3169
        %v3202 = vld [vmem:[#allocation3] sm:$0xff]
        %v3203 = vld [vmem:[#allocation3 + $0x8] sm:$0xff]
        %v3204 = vld [vmem:[#allocation3 + $0x30] sm:$0xff]
        %v3205 = vld [vmem:[#allocation3 + $0x38] sm:$0xff]
        %v3206 = vld [vmem:[#allocation3 + $0x60] sm:$0xff]
        %v3207 = vld [vmem:[#allocation3 + $0x68] sm:$0xff]
        %v3208 = vld [vmem:[#allocation3 + $0x90] sm:$0xff]
        %v3209 = vld [vmem:[#allocation3 + $0x98] sm:$0xff]
        %v3210 = vld [vmem:[#allocation3 + $0xc0] sm:$0xff]
        %v3211 = vld [vmem:[#allocation3 + $0xc8] sm:$0xff]
        %v3212 = vld [vmem:[#allocation3 + $0xf0] sm:$0xff]
        %v3213 = vld [vmem:[#allocation3 + $0xf8] sm:$0xff]
        %v3214 = vld [vmem:[#allocation3 + $0x120] sm:$0xff]
        %v3215 = vld [vmem:[#allocation3 + $0x128] sm:$0xff]
        %v3216 = vld [vmem:[#allocation3 + $0x150] sm:$0xff]
        %v3217 = vld [vmem:[#allocation3 + $0x158] sm:$0xff]
        %v3218 = vld [vmem:[%s7] sm:$0x1]
        %v3219 = vlaneseq
        %v3220 = vshrl.u32 %v3219, 7
        %v3221 = vsub.s32 0, %v3220
        %v3222 = vrot.slane %v3218, %v3221
        %v3223 = vmul.f32 %v3202, %v3222
        %v3224 = vmul.f32 %v3203, %v3222
        %v3225 = vmul.f32 %v3204, %v3222
        %v3226 = vmul.f32 %v3205, %v3222
        %v3227 = vmul.f32 %v3206, %v3222
        %v3228 = vmul.f32 %v3207, %v3222
        %v3229 = vmul.f32 %v3208, %v3222
        %v3230 = vmul.f32 %v3209, %v3222
        %v3231 = vmul.f32 %v3210, %v3222
        %v3232 = vmul.f32 %v3211, %v3222
        %v3233 = vmul.f32 %v3212, %v3222
        %v3234 = vmul.f32 %v3213, %v3222
        %v3235 = vmul.f32 %v3214, %v3222
        %v3236 = vmul.f32 %v3215, %v3222
        %v3237 = vmul.f32 %v3216, %v3222
        %v3238 = vmul.f32 %v3217, %v3222
        %v3239 = vadd.f32 %v3223, 0.0
        %v3240 = vadd.f32 %v3224, 0.0
        %v3241 = vadd.f32 %v3225, 0.0
        %v3242 = vadd.f32 %v3226, 0.0
        %v3243 = vadd.f32 %v3227, 0.0
        %v3244 = vadd.f32 %v3228, 0.0
        %v3245 = vadd.f32 %v3229, 0.0
        %v3246 = vadd.f32 %v3230, 0.0
        %v3247 = vadd.f32 %v3231, 0.0
        %v3248 = vadd.f32 %v3232, 0.0
        %v3249 = vadd.f32 %v3233, 0.0
        %v3250 = vadd.f32 %v3234, 0.0
        %v3251 = vadd.f32 %v3235, 0.0
        %v3252 = vadd.f32 %v3236, 0.0
        %v3253 = vadd.f32 %v3237, 0.0
        %v3254 = vadd.f32 %v3238, 0.0
        %v3255 = vld [vmem:[#allocation3 + $0x1] sm:$0xff]
        %v3256 = vld [vmem:[#allocation3 + $0x9] sm:$0xff]
        %v3257 = vld [vmem:[#allocation3 + $0x31] sm:$0xff]
        %v3258 = vld [vmem:[#allocation3 + $0x39] sm:$0xff]
        %v3259 = vld [vmem:[#allocation3 + $0x61] sm:$0xff]
        %v3260 = vld [vmem:[#allocation3 + $0x69] sm:$0xff]
        %v3261 = vld [vmem:[#allocation3 + $0x91] sm:$0xff]
        %v3262 = vld [vmem:[#allocation3 + $0x99] sm:$0xff]
        %v3263 = vld [vmem:[#allocation3 + $0xc1] sm:$0xff]
        %v3264 = vld [vmem:[#allocation3 + $0xc9] sm:$0xff]
        %v3265 = vld [vmem:[#allocation3 + $0xf1] sm:$0xff]
        %v3266 = vld [vmem:[#allocation3 + $0xf9] sm:$0xff]
        %v3267 = vld [vmem:[#allocation3 + $0x121] sm:$0xff]
        %v3268 = vld [vmem:[#allocation3 + $0x129] sm:$0xff]
        %v3269 = vld [vmem:[#allocation3 + $0x151] sm:$0xff]
        %v3270 = vld [vmem:[#allocation3 + $0x159] sm:$0xff]
        %v3271 = vld [vmem:[%s7 + $0x1] sm:$0x1]
        %v3272 = vlaneseq
        %v3273 = vshrl.u32 %v3272, 7
        %v3274 = vsub.s32 0, %v3273
        %v3275 = vrot.slane %v3271, %v3274
        %v3276 = vmul.f32 %v3255, %v3275
        %v3277 = vmul.f32 %v3256, %v3275
        %v3278 = vmul.f32 %v3257, %v3275
        %v3279 = vmul.f32 %v3258, %v3275
        %v3280 = vmul.f32 %v3259, %v3275
        %v3281 = vmul.f32 %v3260, %v3275
        %v3282 = vmul.f32 %v3261, %v3275
        %v3283 = vmul.f32 %v3262, %v3275
        %v3284 = vmul.f32 %v3263, %v3275
        %v3285 = vmul.f32 %v3264, %v3275
        %v3286 = vmul.f32 %v3265, %v3275
        %v3287 = vmul.f32 %v3266, %v3275
        %v3288 = vmul.f32 %v3267, %v3275
        %v3289 = vmul.f32 %v3268, %v3275
        %v3290 = vmul.f32 %v3269, %v3275
        %v3291 = vmul.f32 %v3270, %v3275
        %v3292 = vadd.f32 %v3239, %v3276
        %v3293 = vadd.f32 %v3240, %v3277
        %v3294 = vadd.f32 %v3241, %v3278
        %v3295 = vadd.f32 %v3242, %v3279
        %v3296 = vadd.f32 %v3243, %v3280
        %v3297 = vadd.f32 %v3244, %v3281
        %v3298 = vadd.f32 %v3245, %v3282
        %v3299 = vadd.f32 %v3246, %v3283
        %v3300 = vadd.f32 %v3247, %v3284
        %v3301 = vadd.f32 %v3248, %v3285
        %v3302 = vadd.f32 %v3249, %v3286
        %v3303 = vadd.f32 %v3250, %v3287
        %v3304 = vadd.f32 %v3251, %v3288
        %v3305 = vadd.f32 %v3252, %v3289
        %v3306 = vadd.f32 %v3253, %v3290
        %v3307 = vadd.f32 %v3254, %v3291
        %v3308 = vld [vmem:[#allocation3 + $0x2] sm:$0xff]
        %v3309 = vld [vmem:[#allocation3 + $0xa] sm:$0xff]
        %v3310 = vld [vmem:[#allocation3 + $0x32] sm:$0xff]
        %v3311 = vld [vmem:[#allocation3 + $0x3a] sm:$0xff]
        %v3312 = vld [vmem:[#allocation3 + $0x62] sm:$0xff]
        %v3313 = vld [vmem:[#allocation3 + $0x6a] sm:$0xff]
        %v3314 = vld [vmem:[#allocation3 + $0x92] sm:$0xff]
        %v3315 = vld [vmem:[#allocation3 + $0x9a] sm:$0xff]
        %v3316 = vld [vmem:[#allocation3 + $0xc2] sm:$0xff]
        %v3317 = vld [vmem:[#allocation3 + $0xca] sm:$0xff]
        %v3318 = vld [vmem:[#allocation3 + $0xf2] sm:$0xff]
        %v3319 = vld [vmem:[#allocation3 + $0xfa] sm:$0xff]
        %v3320 = vld [vmem:[#allocation3 + $0x122] sm:$0xff]
        %v3321 = vld [vmem:[#allocation3 + $0x12a] sm:$0xff]
        %v3322 = vld [vmem:[#allocation3 + $0x152] sm:$0xff]
        %v3323 = vld [vmem:[#allocation3 + $0x15a] sm:$0xff]
        %v3324 = vld [vmem:[%s7 + $0x2] sm:$0x1]
        %v3325 = vlaneseq
        %v3326 = vshrl.u32 %v3325, 7
        %v3327 = vsub.s32 0, %v3326
        %v3328 = vrot.slane %v3324, %v3327
        %v3329 = vmul.f32 %v3308, %v3328
        %v3330 = vmul.f32 %v3309, %v3328
        %v3331 = vmul.f32 %v3310, %v3328
        %v3332 = vmul.f32 %v3311, %v3328
        %v3333 = vmul.f32 %v3312, %v3328
        %v3334 = vmul.f32 %v3313, %v3328
        %v3335 = vmul.f32 %v3314, %v3328
        %v3336 = vmul.f32 %v3315, %v3328
        %v3337 = vmul.f32 %v3316, %v3328
        %v3338 = vmul.f32 %v3317, %v3328
        %v3339 = vmul.f32 %v3318, %v3328
        %v3340 = vmul.f32 %v3319, %v3328
        %v3341 = vmul.f32 %v3320, %v3328
        %v3342 = vmul.f32 %v3321, %v3328
        %v3343 = vmul.f32 %v3322, %v3328
        %v3344 = vmul.f32 %v3323, %v3328
        %v3345 = vadd.f32 %v3292, %v3329
        %v3346 = vadd.f32 %v3293, %v3330
        %v3347 = vadd.f32 %v3294, %v3331
        %v3348 = vadd.f32 %v3295, %v3332
        %v3349 = vadd.f32 %v3296, %v3333
        %v3350 = vadd.f32 %v3297, %v3334
        %v3351 = vadd.f32 %v3298, %v3335
        %v3352 = vadd.f32 %v3299, %v3336
        %v3353 = vadd.f32 %v3300, %v3337
        %v3354 = vadd.f32 %v3301, %v3338
        %v3355 = vadd.f32 %v3302, %v3339
        %v3356 = vadd.f32 %v3303, %v3340
        %v3357 = vadd.f32 %v3304, %v3341
        %v3358 = vadd.f32 %v3305, %v3342
        %v3359 = vadd.f32 %v3306, %v3343
        %v3360 = vadd.f32 %v3307, %v3344
        %v3361 = vld [vmem:[%s1865] sm:$0xff]
        %v3362 = vld [vmem:[%s1865 + $0x8] sm:$0xff]
        %v3363 = vld [vmem:[%s1865 + $0x30] sm:$0xff]
        %v3364 = vld [vmem:[%s1865 + $0x38] sm:$0xff]
        %v3365 = vld [vmem:[%s1865 + $0x60] sm:$0xff]
        %v3366 = vld [vmem:[%s1865 + $0x68] sm:$0xff]
        %v3367 = vld [vmem:[%s1865 + $0x90] sm:$0xff]
        %v3368 = vld [vmem:[%s1865 + $0x98] sm:$0xff]
        %v3369 = vld [vmem:[%s1865 + $0xc0] sm:$0xff]
        %v3370 = vld [vmem:[%s1865 + $0xc8] sm:$0xff]
        %v3371 = vld [vmem:[%s1865 + $0xf0] sm:$0xff]
        %v3372 = vld [vmem:[%s1865 + $0xf8] sm:$0xff]
        %v3373 = vld [vmem:[%s1865 + $0x120] sm:$0xff]
        %v3374 = vld [vmem:[%s1865 + $0x128] sm:$0xff]
        %v3375 = vld [vmem:[%s1865 + $0x150] sm:$0xff]
        %v3376 = vld [vmem:[%s1865 + $0x158] sm:$0xff]
        %v3377 = vld [vmem:[%s7 + $0x3] sm:$0x1]
        %v3378 = vlaneseq
        %v3379 = vshrl.u32 %v3378, 7
        %v3380 = vsub.s32 0, %v3379
        %v3381 = vrot.slane %v3377, %v3380
        %v3382 = vmul.f32 %v3361, %v3381
        %v3383 = vmul.f32 %v3362, %v3381
        %v3384 = vmul.f32 %v3363, %v3381
        %v3385 = vmul.f32 %v3364, %v3381
        %v3386 = vmul.f32 %v3365, %v3381
        %v3387 = vmul.f32 %v3366, %v3381
        %v3388 = vmul.f32 %v3367, %v3381
        %v3389 = vmul.f32 %v3368, %v3381
        %v3390 = vmul.f32 %v3369, %v3381
        %v3391 = vmul.f32 %v3370, %v3381
        %v3392 = vmul.f32 %v3371, %v3381
        %v3393 = vmul.f32 %v3372, %v3381
        %v3394 = vmul.f32 %v3373, %v3381
        %v3395 = vmul.f32 %v3374, %v3381
        %v3396 = vmul.f32 %v3375, %v3381
        %v3397 = vmul.f32 %v3376, %v3381
        %v3398 = vadd.f32 %v3345, %v3382
        %v3399 = vadd.f32 %v3346, %v3383
        %v3400 = vadd.f32 %v3347, %v3384
        %v3401 = vadd.f32 %v3348, %v3385
        %v3402 = vadd.f32 %v3349, %v3386
        %v3403 = vadd.f32 %v3350, %v3387
        %v3404 = vadd.f32 %v3351, %v3388
        %v3405 = vadd.f32 %v3352, %v3389
        %v3406 = vadd.f32 %v3353, %v3390
        %v3407 = vadd.f32 %v3354, %v3391
        %v3408 = vadd.f32 %v3355, %v3392
        %v3409 = vadd.f32 %v3356, %v3393
        %v3410 = vadd.f32 %v3357, %v3394
        %v3411 = vadd.f32 %v3358, %v3395
        %v3412 = vadd.f32 %v3359, %v3396
        %v3413 = vadd.f32 %v3360, %v3397
        %v3414 = vld [vmem:[%s1865 + $0x1] sm:$0xff]
        %v3415 = vld [vmem:[%s1865 + $0x9] sm:$0xff]
        %v3416 = vld [vmem:[%s1865 + $0x31] sm:$0xff]
        %v3417 = vld [vmem:[%s1865 + $0x39] sm:$0xff]
        %v3418 = vld [vmem:[%s1865 + $0x61] sm:$0xff]
        %v3419 = vld [vmem:[%s1865 + $0x69] sm:$0xff]
        %v3420 = vld [vmem:[%s1865 + $0x91] sm:$0xff]
        %v3421 = vld [vmem:[%s1865 + $0x99] sm:$0xff]
        %v3422 = vld [vmem:[%s1865 + $0xc1] sm:$0xff]
        %v3423 = vld [vmem:[%s1865 + $0xc9] sm:$0xff]
        %v3424 = vld [vmem:[%s1865 + $0xf1] sm:$0xff]
        %v3425 = vld [vmem:[%s1865 + $0xf9] sm:$0xff]
        %v3426 = vld [vmem:[%s1865 + $0x121] sm:$0xff]
        %v3427 = vld [vmem:[%s1865 + $0x129] sm:$0xff]
        %v3428 = vld [vmem:[%s1865 + $0x151] sm:$0xff]
        %v3429 = vld [vmem:[%s1865 + $0x159] sm:$0xff]
        %v3430 = vld [vmem:[%s7 + $0x4] sm:$0x1]
        %v3431 = vlaneseq
        %v3432 = vshrl.u32 %v3431, 7
        %v3433 = vsub.s32 0, %v3432
        %v3434 = vrot.slane %v3430, %v3433
        %v3435 = vmul.f32 %v3414, %v3434
        %v3436 = vmul.f32 %v3415, %v3434
        %v3437 = vmul.f32 %v3416, %v3434
        %v3438 = vmul.f32 %v3417, %v3434
        %v3439 = vmul.f32 %v3418, %v3434
        %v3440 = vmul.f32 %v3419, %v3434
        %v3441 = vmul.f32 %v3420, %v3434
        %v3442 = vmul.f32 %v3421, %v3434
        %v3443 = vmul.f32 %v3422, %v3434
        %v3444 = vmul.f32 %v3423, %v3434
        %v3445 = vmul.f32 %v3424, %v3434
        %v3446 = vmul.f32 %v3425, %v3434
        %v3447 = vmul.f32 %v3426, %v3434
        %v3448 = vmul.f32 %v3427, %v3434
        %v3449 = vmul.f32 %v3428, %v3434
        %v3450 = vmul.f32 %v3429, %v3434
        %v3451 = vadd.f32 %v3398, %v3435
        %v3452 = vadd.f32 %v3399, %v3436
        %v3453 = vadd.f32 %v3400, %v3437
        %v3454 = vadd.f32 %v3401, %v3438
        %v3455 = vadd.f32 %v3402, %v3439
        %v3456 = vadd.f32 %v3403, %v3440
        %v3457 = vadd.f32 %v3404, %v3441
        %v3458 = vadd.f32 %v3405, %v3442
        %v3459 = vadd.f32 %v3406, %v3443
        %v3460 = vadd.f32 %v3407, %v3444
        %v3461 = vadd.f32 %v3408, %v3445
        %v3462 = vadd.f32 %v3409, %v3446
        %v3463 = vadd.f32 %v3410, %v3447
        %v3464 = vadd.f32 %v3411, %v3448
        %v3465 = vadd.f32 %v3412, %v3449
        %v3466 = vadd.f32 %v3413, %v3450
        %v3467 = vld [vmem:[%s1865 + $0x2] sm:$0xff]
        %v3468 = vld [vmem:[%s1865 + $0xa] sm:$0xff]
        %v3469 = vld [vmem:[%s1865 + $0x32] sm:$0xff]
        %v3470 = vld [vmem:[%s1865 + $0x3a] sm:$0xff]
        %v3471 = vld [vmem:[%s1865 + $0x62] sm:$0xff]
        %v3472 = vld [vmem:[%s1865 + $0x6a] sm:$0xff]
        %v3473 = vld [vmem:[%s1865 + $0x92] sm:$0xff]
        %v3474 = vld [vmem:[%s1865 + $0x9a] sm:$0xff]
        %v3475 = vld [vmem:[%s1865 + $0xc2] sm:$0xff]
        %v3476 = vld [vmem:[%s1865 + $0xca] sm:$0xff]
        %v3477 = vld [vmem:[%s1865 + $0xf2] sm:$0xff]
        %v3478 = vld [vmem:[%s1865 + $0xfa] sm:$0xff]
        %v3479 = vld [vmem:[%s1865 + $0x122] sm:$0xff]
        %v3480 = vld [vmem:[%s1865 + $0x12a] sm:$0xff]
        %v3481 = vld [vmem:[%s1865 + $0x152] sm:$0xff]
        %v3482 = vld [vmem:[%s1865 + $0x15a] sm:$0xff]
        %v3483 = vld [vmem:[%s7 + $0x5] sm:$0x1]
        %v3484 = vlaneseq
        %v3485 = vshrl.u32 %v3484, 7
        %v3486 = vsub.s32 0, %v3485
        %v3487 = vrot.slane %v3483, %v3486
        %v3488 = vmul.f32 %v3467, %v3487
        %v3489 = vmul.f32 %v3468, %v3487
        %v3490 = vmul.f32 %v3469, %v3487
        %v3491 = vmul.f32 %v3470, %v3487
        %v3492 = vmul.f32 %v3471, %v3487
        %v3493 = vmul.f32 %v3472, %v3487
        %v3494 = vmul.f32 %v3473, %v3487
        %v3495 = vmul.f32 %v3474, %v3487
        %v3496 = vmul.f32 %v3475, %v3487
        %v3497 = vmul.f32 %v3476, %v3487
        %v3498 = vmul.f32 %v3477, %v3487
        %v3499 = vmul.f32 %v3478, %v3487
        %v3500 = vmul.f32 %v3479, %v3487
        %v3501 = vmul.f32 %v3480, %v3487
        %v3502 = vmul.f32 %v3481, %v3487
        %v3503 = vmul.f32 %v3482, %v3487
        %v3504 = vadd.f32 %v3451, %v3488
        %v3505 = vadd.f32 %v3452, %v3489
        %v3506 = vadd.f32 %v3453, %v3490
        %v3507 = vadd.f32 %v3454, %v3491
        %v3508 = vadd.f32 %v3455, %v3492
        %v3509 = vadd.f32 %v3456, %v3493
        %v3510 = vadd.f32 %v3457, %v3494
        %v3511 = vadd.f32 %v3458, %v3495
        %v3512 = vadd.f32 %v3459, %v3496
        %v3513 = vadd.f32 %v3460, %v3497
        %v3514 = vadd.f32 %v3461, %v3498
        %v3515 = vadd.f32 %v3462, %v3499
        %v3516 = vadd.f32 %v3463, %v3500
        %v3517 = vadd.f32 %v3464, %v3501
        %v3518 = vadd.f32 %v3465, %v3502
        %v3519 = vadd.f32 %v3466, %v3503
        %v3520 = vld [vmem:[%s2504] sm:$0xff]
        %v3521 = vld [vmem:[%s2504 + $0x8] sm:$0xff]
        %v3522 = vld [vmem:[%s2504 + $0x30] sm:$0xff]
        %v3523 = vld [vmem:[%s2504 + $0x38] sm:$0xff]
        %v3524 = vld [vmem:[%s2504 + $0x60] sm:$0xff]
        %v3525 = vld [vmem:[%s2504 + $0x68] sm:$0xff]
        %v3526 = vld [vmem:[%s2504 + $0x90] sm:$0xff]
        %v3527 = vld [vmem:[%s2504 + $0x98] sm:$0xff]
        %v3528 = vld [vmem:[%s2504 + $0xc0] sm:$0xff]
        %v3529 = vld [vmem:[%s2504 + $0xc8] sm:$0xff]
        %v3530 = vld [vmem:[%s2504 + $0xf0] sm:$0xff]
        %v3531 = vld [vmem:[%s2504 + $0xf8] sm:$0xff]
        %v3532 = vld [vmem:[%s2504 + $0x120] sm:$0xff]
        %v3533 = vld [vmem:[%s2504 + $0x128] sm:$0xff]
        %v3534 = vld [vmem:[%s2504 + $0x150] sm:$0xff]
        %v3535 = vld [vmem:[%s2504 + $0x158] sm:$0xff]
        %v3536 = vld [vmem:[%s7 + $0x6] sm:$0x1]
        %v3537 = vlaneseq
        %v3538 = vshrl.u32 %v3537, 7
        %v3539 = vsub.s32 0, %v3538
        %v3540 = vrot.slane %v3536, %v3539
        %v3541 = vmul.f32 %v3520, %v3540
        %v3542 = vmul.f32 %v3521, %v3540
        %v3543 = vmul.f32 %v3522, %v3540
        %v3544 = vmul.f32 %v3523, %v3540
        %v3545 = vmul.f32 %v3524, %v3540
        %v3546 = vmul.f32 %v3525, %v3540
        %v3547 = vmul.f32 %v3526, %v3540
        %v3548 = vmul.f32 %v3527, %v3540
        %v3549 = vmul.f32 %v3528, %v3540
        %v3550 = vmul.f32 %v3529, %v3540
        %v3551 = vmul.f32 %v3530, %v3540
        %v3552 = vmul.f32 %v3531, %v3540
        %v3553 = vmul.f32 %v3532, %v3540
        %v3554 = vmul.f32 %v3533, %v3540
        %v3555 = vmul.f32 %v3534, %v3540
        %v3556 = vmul.f32 %v3535, %v3540
        %v3557 = vadd.f32 %v3504, %v3541
        %v3558 = vadd.f32 %v3505, %v3542
        %v3559 = vadd.f32 %v3506, %v3543
        %v3560 = vadd.f32 %v3507, %v3544
        %v3561 = vadd.f32 %v3508, %v3545
        %v3562 = vadd.f32 %v3509, %v3546
        %v3563 = vadd.f32 %v3510, %v3547
        %v3564 = vadd.f32 %v3511, %v3548
        %v3565 = vadd.f32 %v3512, %v3549
        %v3566 = vadd.f32 %v3513, %v3550
        %v3567 = vadd.f32 %v3514, %v3551
        %v3568 = vadd.f32 %v3515, %v3552
        %v3569 = vadd.f32 %v3516, %v3553
        %v3570 = vadd.f32 %v3517, %v3554
        %v3571 = vadd.f32 %v3518, %v3555
        %v3572 = vadd.f32 %v3519, %v3556
        %v3573 = vld [vmem:[%s2504 + $0x1] sm:$0xff]
        %v3574 = vld [vmem:[%s2504 + $0x9] sm:$0xff]
        %v3575 = vld [vmem:[%s2504 + $0x31] sm:$0xff]
        %v3576 = vld [vmem:[%s2504 + $0x39] sm:$0xff]
        %v3577 = vld [vmem:[%s2504 + $0x61] sm:$0xff]
        %v3578 = vld [vmem:[%s2504 + $0x69] sm:$0xff]
        %v3579 = vld [vmem:[%s2504 + $0x91] sm:$0xff]
        %v3580 = vld [vmem:[%s2504 + $0x99] sm:$0xff]
        %v3581 = vld [vmem:[%s2504 + $0xc1] sm:$0xff]
        %v3582 = vld [vmem:[%s2504 + $0xc9] sm:$0xff]
        %v3583 = vld [vmem:[%s2504 + $0xf1] sm:$0xff]
        %v3584 = vld [vmem:[%s2504 + $0xf9] sm:$0xff]
        %v3585 = vld [vmem:[%s2504 + $0x121] sm:$0xff]
        %v3586 = vld [vmem:[%s2504 + $0x129] sm:$0xff]
        %v3587 = vld [vmem:[%s2504 + $0x151] sm:$0xff]
        %v3588 = vld [vmem:[%s2504 + $0x159] sm:$0xff]
        %v3589 = vld [vmem:[%s7 + $0x7] sm:$0x1]
        %v3590 = vlaneseq
        %v3591 = vshrl.u32 %v3590, 7
        %v3592 = vsub.s32 0, %v3591
        %v3593 = vrot.slane %v3589, %v3592
        %v3594 = vmul.f32 %v3573, %v3593
        %v3595 = vmul.f32 %v3574, %v3593
        %v3596 = vmul.f32 %v3575, %v3593
        %v3597 = vmul.f32 %v3576, %v3593
        %v3598 = vmul.f32 %v3577, %v3593
        %v3599 = vmul.f32 %v3578, %v3593
        %v3600 = vmul.f32 %v3579, %v3593
        %v3601 = vmul.f32 %v3580, %v3593
        %v3602 = vmul.f32 %v3581, %v3593
        %v3603 = vmul.f32 %v3582, %v3593
        %v3604 = vmul.f32 %v3583, %v3593
        %v3605 = vmul.f32 %v3584, %v3593
        %v3606 = vmul.f32 %v3585, %v3593
        %v3607 = vmul.f32 %v3586, %v3593
        %v3608 = vmul.f32 %v3587, %v3593
        %v3609 = vmul.f32 %v3588, %v3593
        %v3610 = vadd.f32 %v3557, %v3594
        %v3611 = vadd.f32 %v3558, %v3595
        %v3612 = vadd.f32 %v3559, %v3596
        %v3613 = vadd.f32 %v3560, %v3597
        %v3614 = vadd.f32 %v3561, %v3598
        %v3615 = vadd.f32 %v3562, %v3599
        %v3616 = vadd.f32 %v3563, %v3600
        %v3617 = vadd.f32 %v3564, %v3601
        %v3618 = vadd.f32 %v3565, %v3602
        %v3619 = vadd.f32 %v3566, %v3603
        %v3620 = vadd.f32 %v3567, %v3604
        %v3621 = vadd.f32 %v3568, %v3605
        %v3622 = vadd.f32 %v3569, %v3606
        %v3623 = vadd.f32 %v3570, %v3607
        %v3624 = vadd.f32 %v3571, %v3608
        %v3625 = vadd.f32 %v3572, %v3609
        %v3626 = vld [vmem:[%s2504 + $0x2] sm:$0xff]
        %v3627 = vld [vmem:[%s2504 + $0xa] sm:$0xff]
        %v3628 = vld [vmem:[%s2504 + $0x32] sm:$0xff]
        %v3629 = vld [vmem:[%s2504 + $0x3a] sm:$0xff]
        %v3630 = vld [vmem:[%s2504 + $0x62] sm:$0xff]
        %v3631 = vld [vmem:[%s2504 + $0x6a] sm:$0xff]
        %v3632 = vld [vmem:[%s2504 + $0x92] sm:$0xff]
        %v3633 = vld [vmem:[%s2504 + $0x9a] sm:$0xff]
        %v3634 = vld [vmem:[%s2504 + $0xc2] sm:$0xff]
        %v3635 = vld [vmem:[%s2504 + $0xca] sm:$0xff]
        %v3636 = vld [vmem:[%s2504 + $0xf2] sm:$0xff]
        %v3637 = vld [vmem:[%s2504 + $0xfa] sm:$0xff]
        %v3638 = vld [vmem:[%s2504 + $0x122] sm:$0xff]
        %v3639 = vld [vmem:[%s2504 + $0x12a] sm:$0xff]
        %v3640 = vld [vmem:[%s2504 + $0x152] sm:$0xff]
        %v3641 = vld [vmem:[%s2504 + $0x15a] sm:$0xff]
        %v3642 = vld [vmem:[%s7 + $0x8] sm:$0x1]
        %v3643 = vlaneseq
        %v3644 = vshrl.u32 %v3643, 7
        %v3645 = vsub.s32 0, %v3644
        %v3646 = vrot.slane %v3642, %v3645
        %v3647 = vmul.f32 %v3626, %v3646
        %v3648 = vmul.f32 %v3627, %v3646
        %v3649 = vmul.f32 %v3628, %v3646
        %v3650 = vmul.f32 %v3629, %v3646
        %v3651 = vmul.f32 %v3630, %v3646
        %v3652 = vmul.f32 %v3631, %v3646
        %v3653 = vmul.f32 %v3632, %v3646
        %v3654 = vmul.f32 %v3633, %v3646
        %v3655 = vmul.f32 %v3634, %v3646
        %v3656 = vmul.f32 %v3635, %v3646
        %v3657 = vmul.f32 %v3636, %v3646
        %v3658 = vmul.f32 %v3637, %v3646
        %v3659 = vmul.f32 %v3638, %v3646
        %v3660 = vmul.f32 %v3639, %v3646
        %v3661 = vmul.f32 %v3640, %v3646
        %v3662 = vmul.f32 %v3641, %v3646
        %v3663 = vadd.f32 %v3610, %v3647
        %v3664 = vadd.f32 %v3611, %v3648
        %v3665 = vadd.f32 %v3612, %v3649
        %v3666 = vadd.f32 %v3613, %v3650
        %v3667 = vadd.f32 %v3614, %v3651
        %v3668 = vadd.f32 %v3615, %v3652
        %v3669 = vadd.f32 %v3616, %v3653
        %v3670 = vadd.f32 %v3617, %v3654
        %v3671 = vadd.f32 %v3618, %v3655
        %v3672 = vadd.f32 %v3619, %v3656
        %v3673 = vadd.f32 %v3620, %v3657
        %v3674 = vadd.f32 %v3621, %v3658
        %v3675 = vadd.f32 %v3622, %v3659
        %v3676 = vadd.f32 %v3623, %v3660
        %v3677 = vadd.f32 %v3624, %v3661
        %v3678 = vadd.f32 %v3625, %v3662
        %v3687 = vrot.slane %v3663, 1
        %v3688 = vrot.slane %v3665, 1
        %v3689 = vrot.slane %v3667, 1
        %v3690 = vrot.slane %v3669, 1
        %v3691 = vrot.slane %v3671, 1
        %v3692 = vrot.slane %v3673, 1
        %v3693 = vrot.slane %v3675, 1
        %v3694 = vrot.slane %v3677, 1
        %v3703 = vrot.slane %v3663, 2
        %v3704 = vrot.slane %v3665, 2
        %v3705 = vrot.slane %v3667, 2
        %v3706 = vrot.slane %v3669, 2
        %v3707 = vrot.slane %v3671, 2
        %v3708 = vrot.slane %v3673, 2
        %v3709 = vrot.slane %v3675, 2
        %v3710 = vrot.slane %v3677, 2
        %v3719 = vrot.slane %v3663, 3
        %v3720 = vrot.slane %v3665, 3
        %v3721 = vrot.slane %v3667, 3
        %v3722 = vrot.slane %v3669, 3
        %v3723 = vrot.slane %v3671, 3
        %v3724 = vrot.slane %v3673, 3
        %v3725 = vrot.slane %v3675, 3
        %v3726 = vrot.slane %v3677, 3
        %v3743 = vrot.slane %v3664, 4
        %v3744 = vrot.slane %v3666, 4
        %v3745 = vrot.slane %v3668, 4
        %v3746 = vrot.slane %v3670, 4
        %v3747 = vrot.slane %v3672, 4
        %v3748 = vrot.slane %v3674, 4
        %v3749 = vrot.slane %v3676, 4
        %v3750 = vrot.slane %v3678, 4
        %v3759 = vrot.slane %v3664, 5
        %v3760 = vrot.slane %v3666, 5
        %v3761 = vrot.slane %v3668, 5
        %v3762 = vrot.slane %v3670, 5
        %v3763 = vrot.slane %v3672, 5
        %v3764 = vrot.slane %v3674, 5
        %v3765 = vrot.slane %v3676, 5
        %v3766 = vrot.slane %v3678, 5
        %v3775 = vrot.slane %v3664, 6
        %v3776 = vrot.slane %v3666, 6
        %v3777 = vrot.slane %v3668, 6
        %v3778 = vrot.slane %v3670, 6
        %v3779 = vrot.slane %v3672, 6
        %v3780 = vrot.slane %v3674, 6
        %v3781 = vrot.slane %v3676, 6
        %v3782 = vrot.slane %v3678, 6
        %v3791 = vrot.slane %v3664, 7
        %v3792 = vrot.slane %v3666, 7
        %v3793 = vrot.slane %v3668, 7
        %v3794 = vrot.slane %v3670, 7
        %v3795 = vrot.slane %v3672, 7
        %v3796 = vrot.slane %v3674, 7
        %v3797 = vrot.slane %v3676, 7
        %v3798 = vrot.slane %v3678, 7
        %vm3807 = vcmask 1040384
        %v3808 = vsel %vm3807, %v3663, %v3687
        %v3809 = vsel %vm3807, %v3665, %v3688
        %v3810 = vsel %vm3807, %v3667, %v3689
        %v3811 = vsel %vm3807, %v3669, %v3690
        %v3812 = vsel %vm3807, %v3671, %v3691
        %v3813 = vsel %vm3807, %v3673, %v3692
        %v3814 = vsel %vm3807, %v3675, %v3693
        %v3815 = vsel %vm3807, %v3677, %v3694
        %vm3816 = vcmask 1041408
        %v3817 = vsel %vm3816, %v3808, %v3703
        %v3818 = vsel %vm3816, %v3809, %v3704
        %v3819 = vsel %vm3816, %v3810, %v3705
        %v3820 = vsel %vm3816, %v3811, %v3706
        %v3821 = vsel %vm3816, %v3812, %v3707
        %v3822 = vsel %vm3816, %v3813, %v3708
        %v3823 = vsel %vm3816, %v3814, %v3709
        %v3824 = vsel %vm3816, %v3815, %v3710
        %vm3825 = vcmask 1042432
        %v3826 = vsel %vm3825, %v3817, %v3719
        %v3827 = vsel %vm3825, %v3818, %v3720
        %v3828 = vsel %vm3825, %v3819, %v3721
        %v3829 = vsel %vm3825, %v3820, %v3722
        %v3830 = vsel %vm3825, %v3821, %v3723
        %v3831 = vsel %vm3825, %v3822, %v3724
        %v3832 = vsel %vm3825, %v3823, %v3725
        %v3833 = vsel %vm3825, %v3824, %v3726
        %vm3834 = vcmask 1043456
        %v3835 = vsel %vm3834, %v3826, %v3743
        %v3836 = vsel %vm3834, %v3827, %v3744
        %v3837 = vsel %vm3834, %v3828, %v3745
        %v3838 = vsel %vm3834, %v3829, %v3746
        %v3839 = vsel %vm3834, %v3830, %v3747
        %v3840 = vsel %vm3834, %v3831, %v3748
        %v3841 = vsel %vm3834, %v3832, %v3749
        %v3842 = vsel %vm3834, %v3833, %v3750
        %vm3843 = vcmask 1044480
        %v3844 = vsel %vm3843, %v3835, %v3759
        %v3845 = vsel %vm3843, %v3836, %v3760
        %v3846 = vsel %vm3843, %v3837, %v3761
        %v3847 = vsel %vm3843, %v3838, %v3762
        %v3848 = vsel %vm3843, %v3839, %v3763
        %v3849 = vsel %vm3843, %v3840, %v3764
        %v3850 = vsel %vm3843, %v3841, %v3765
        %v3851 = vsel %vm3843, %v3842, %v3766
        %vm3852 = vcmask 1045504
        %v3853 = vsel %vm3852, %v3844, %v3775
        %v3854 = vsel %vm3852, %v3845, %v3776
        %v3855 = vsel %vm3852, %v3846, %v3777
        %v3856 = vsel %vm3852, %v3847, %v3778
        %v3857 = vsel %vm3852, %v3848, %v3779
        %v3858 = vsel %vm3852, %v3849, %v3780
        %v3859 = vsel %vm3852, %v3850, %v3781
        %v3860 = vsel %vm3852, %v3851, %v3782
        %vm3861 = vcmask 1046528
        %v3862 = vsel %vm3861, %v3853, %v3791
        %v3863 = vsel %vm3861, %v3854, %v3792
        %v3864 = vsel %vm3861, %v3855, %v3793
        %v3865 = vsel %vm3861, %v3856, %v3794
        %v3866 = vsel %vm3861, %v3857, %v3795
        %v3867 = vsel %vm3861, %v3858, %v3796
        %v3868 = vsel %vm3861, %v3859, %v3797
        %v3869 = vsel %vm3861, %v3860, %v3798
        %v3870 = vld [vmem:[%s8] sm:$0xff]
        %v3871 = vld [vmem:[%s8 + $0x8] sm:$0xff]
        %v3880 = vrot.slane %v497, 1
        %v3881 = vrot.slane %v501, 1
        %v3882 = vrot.slane %v505, 1
        %v3883 = vrot.slane %v509, 1
        %v3884 = vrot.slane %v513, 1
        %v3885 = vrot.slane %v517, 1
        %v3886 = vrot.slane %v521, 1
        %v3887 = vrot.slane %v525, 1
        %v3896 = vrot.slane %v497, 2
        %v3897 = vrot.slane %v501, 2
        %v3898 = vrot.slane %v505, 2
        %v3899 = vrot.slane %v509, 2
        %v3900 = vrot.slane %v513, 2
        %v3901 = vrot.slane %v517, 2
        %v3902 = vrot.slane %v521, 2
        %v3903 = vrot.slane %v525, 2
        %v3912 = vrot.slane %v497, 3
        %v3913 = vrot.slane %v501, 3
        %v3914 = vrot.slane %v505, 3
        %v3915 = vrot.slane %v509, 3
        %v3916 = vrot.slane %v513, 3
        %v3917 = vrot.slane %v517, 3
        %v3918 = vrot.slane %v521, 3
        %v3919 = vrot.slane %v525, 3
        %v3936 = vrot.slane %v498, 4
        %v3937 = vrot.slane %v502, 4
        %v3938 = vrot.slane %v506, 4
        %v3939 = vrot.slane %v510, 4
        %v3940 = vrot.slane %v514, 4
        %v3941 = vrot.slane %v518, 4
        %v3942 = vrot.slane %v522, 4
        %v3943 = vrot.slane %v526, 4
        %v3952 = vrot.slane %v498, 5
        %v3953 = vrot.slane %v502, 5
        %v3954 = vrot.slane %v506, 5
        %v3955 = vrot.slane %v510, 5
        %v3956 = vrot.slane %v514, 5
        %v3957 = vrot.slane %v518, 5
        %v3958 = vrot.slane %v522, 5
        %v3959 = vrot.slane %v526, 5
        %v3968 = vrot.slane %v498, 6
        %v3969 = vrot.slane %v502, 6
        %v3970 = vrot.slane %v506, 6
        %v3971 = vrot.slane %v510, 6
        %v3972 = vrot.slane %v514, 6
        %v3973 = vrot.slane %v518, 6
        %v3974 = vrot.slane %v522, 6
        %v3975 = vrot.slane %v526, 6
        %v3984 = vrot.slane %v498, 7
        %v3985 = vrot.slane %v502, 7
        %v3986 = vrot.slane %v506, 7
        %v3987 = vrot.slane %v510, 7
        %v3988 = vrot.slane %v514, 7
        %v3989 = vrot.slane %v518, 7
        %v3990 = vrot.slane %v522, 7
        %v3991 = vrot.slane %v526, 7
        %v4000 = vsel %vm3807, %v497, %v3880
        %v4001 = vsel %vm3807, %v501, %v3881
        %v4002 = vsel %vm3807, %v505, %v3882
        %v4003 = vsel %vm3807, %v509, %v3883
        %v4004 = vsel %vm3807, %v513, %v3884
        %v4005 = vsel %vm3807, %v517, %v3885
        %v4006 = vsel %vm3807, %v521, %v3886
        %v4007 = vsel %vm3807, %v525, %v3887
        %v4008 = vsel %vm3816, %v4000, %v3896
        %v4009 = vsel %vm3816, %v4001, %v3897
        %v4010 = vsel %vm3816, %v4002, %v3898
        %v4011 = vsel %vm3816, %v4003, %v3899
        %v4012 = vsel %vm3816, %v4004, %v3900
        %v4013 = vsel %vm3816, %v4005, %v3901
        %v4014 = vsel %vm3816, %v4006, %v3902
        %v4015 = vsel %vm3816, %v4007, %v3903
        %v4016 = vsel %vm3825, %v4008, %v3912
        %v4017 = vsel %vm3825, %v4009, %v3913
        %v4018 = vsel %vm3825, %v4010, %v3914
        %v4019 = vsel %vm3825, %v4011, %v3915
        %v4020 = vsel %vm3825, %v4012, %v3916
        %v4021 = vsel %vm3825, %v4013, %v3917
        %v4022 = vsel %vm3825, %v4014, %v3918
        %v4023 = vsel %vm3825, %v4015, %v3919
        %v4024 = vsel %vm3834, %v4016, %v3936
        %v4025 = vsel %vm3834, %v4017, %v3937
        %v4026 = vsel %vm3834, %v4018, %v3938
        %v4027 = vsel %vm3834, %v4019, %v3939
        %v4028 = vsel %vm3834, %v4020, %v3940
        %v4029 = vsel %vm3834, %v4021, %v3941
        %v4030 = vsel %vm3834, %v4022, %v3942
        %v4031 = vsel %vm3834, %v4023, %v3943
        %v4032 = vsel %vm3843, %v4024, %v3952
        %v4033 = vsel %vm3843, %v4025, %v3953
        %v4034 = vsel %vm3843, %v4026, %v3954
        %v4035 = vsel %vm3843, %v4027, %v3955
        %v4036 = vsel %vm3843, %v4028, %v3956
        %v4037 = vsel %vm3843, %v4029, %v3957
        %v4038 = vsel %vm3843, %v4030, %v3958
        %v4039 = vsel %vm3843, %v4031, %v3959
        %v4040 = vsel %vm3852, %v4032, %v3968
        %v4041 = vsel %vm3852, %v4033, %v3969
        %v4042 = vsel %vm3852, %v4034, %v3970
        %v4043 = vsel %vm3852, %v4035, %v3971
        %v4044 = vsel %vm3852, %v4036, %v3972
        %v4045 = vsel %vm3852, %v4037, %v3973
        %v4046 = vsel %vm3852, %v4038, %v3974
        %v4047 = vsel %vm3852, %v4039, %v3975
        %v4048 = vsel %vm3861, %v4040, %v3984
        %v4049 = vsel %vm3861, %v4041, %v3985
        %v4050 = vsel %vm3861, %v4042, %v3986
        %v4051 = vsel %vm3861, %v4043, %v3987
        %v4052 = vsel %vm3861, %v4044, %v3988
        %v4053 = vsel %vm3861, %v4045, %v3989
        %v4054 = vsel %vm3861, %v4046, %v3990
        %v4055 = vsel %vm3861, %v4047, %v3991
        %v4056 = vld [vmem:[%s9] sm:$0xff]
        %v4058 = vsel %vm385, %v4048, 0
        %v4061 = vsel %vm385, %v4049, 0
        %v4064 = vsel %vm385, %v4050, 0
        %v4067 = vsel %vm385, %v4051, 0
        %v4070 = vsel %vm385, %v4052, 0
        %v4073 = vsel %vm385, %v4053, 0
        %v4076 = vsel %vm385, %v4054, 0
        %v4079 = vsel %vm385, %v4055, 0
        %4081 = vmatprep.subr.mxu0 0.0
        %4082 = vmatpush1.msra.mxu0 0.0
        %4083 = vmatprep.subr.mxu0 0.0
        %4084 = vmatpush1.msra.mxu0 0.0
        %4085 = vmatprep.subr.mxu0 0.0
        %4086 = vmatpush1.msra.mxu0 0.0
        %4087 = vmatprep.subr.mxu0 0.0
        %4088 = vmatpush1.msra.mxu0 0.0
        %4089 = vmatprep.subr.mxu0 0.0
        %4090 = vmatpush1.msra.mxu0 0.0
        %4091 = vmatprep.subr.mxu0 0.0
        %4092 = vmatpush1.msra.mxu0 0.0
        %4093 = vmatprep.subr.mxu0 0.0
        %4094 = vmatpush1.msra.mxu0 0.0
        %4095 = vmatprep.subr.mxu0 0.0
        %4096 = vmatpush1.msra.mxu0 0.0
        %4097 = vmatprep.subr.mxu0 0.0
        %4098 = vmatpush1.msra.mxu0 0.0
        %4099 = vmatprep.subr.mxu0 0.0
        %4100 = vmatpush1.msra.mxu0 0.0
        %4101 = vmatprep.subr.mxu0 0.0
        %4102 = vmatpush1.msra.mxu0 0.0
        %4103 = vmatprep.subr.mxu0 0.0
        %4104 = vmatpush1.msra.mxu0 0.0
        %4105 = vmatprep.subr.mxu0 0.0
        %4106 = vmatpush1.msra.mxu0 0.0
        %4107 = vmatprep.subr.mxu0 0.0
        %4108 = vmatpush1.msra.mxu0 0.0
        %4109 = vmatprep.subr.mxu0 0.0
        %4110 = vmatpush1.msra.mxu0 0.0
        %4111 = vmatprep.subr.mxu0 0.0
        %4112 = vmatpush1.msra.mxu0 %v4056
        %4113 = vmatprep.subr.mxu0 0.0
        %4114 = vmatpush2.msra.mxu0 0.0
        %4115 = vmatprep.subr.mxu0 0.0
        %4116 = vmatpush2.msra.mxu0 0.0
        %4117 = vmatprep.subr.mxu0 0.0
        %4118 = vmatpush2.msra.mxu0 0.0
        %4119 = vmatprep.subr.mxu0 0.0
        %4120 = vmatpush2.msra.mxu0 0.0
        %4121 = vmatprep.subr.mxu0 0.0
        %4122 = vmatpush2.msra.mxu0 0.0
        %4123 = vmatprep.subr.mxu0 0.0
        %4124 = vmatpush2.msra.mxu0 0.0
        %4125 = vmatprep.subr.mxu0 0.0
        %4126 = vmatpush2.msra.mxu0 0.0
        %4127 = vmatprep.subr.mxu0 0.0
        %4128 = vmatpush2.msra.mxu0 0.0
        %4129 = vmatprep.subr.mxu0 0.0
        %4130 = vmatpush2.msra.mxu0 0.0
        %4131 = vmatprep.subr.mxu0 0.0
        %4132 = vmatpush2.msra.mxu0 0.0
        %4133 = vmatprep.subr.mxu0 0.0
        %4134 = vmatpush2.msra.mxu0 0.0
        %4135 = vmatprep.subr.mxu0 0.0
        %4136 = vmatpush2.msra.mxu0 0.0
        %4137 = vmatprep.subr.mxu0 0.0
        %4138 = vmatpush2.msra.mxu0 0.0
        %4139 = vmatprep.subr.mxu0 0.0
        %4140 = vmatpush2.msra.mxu0 0.0
        %4141 = vmatprep.subr.mxu0 0.0
        %4142 = vmatpush2.msra.mxu0 0.0
        %4143 = vmatprep.subr.mxu0 0.0
        %4144 = vmatpush2.msra.mxu0 0.0
        %4145 = vmatprep.mubr.f32.mxu0 0.0
        %4146 = vmatmul.mubr.f32.gmra.mxu0 %v4058
        %v4147 = vpop.f32.mrf.mxu0
        %v4148 = vadd.f32 0.0, %v4147
        %v4149 = vpop.f32.mrf.mxu0
        %4150 = vmatprep.mubr.f32.mxu0 0.0
        %4151 = vmatmul.mubr.f32.gmra.mxu0 %v4061
        %v4152 = vpop.f32.mrf.mxu0
        %v4153 = vadd.f32 0.0, %v4152
        %v4154 = vpop.f32.mrf.mxu0
        %4155 = vmatprep.mubr.f32.mxu0 0.0
        %4156 = vmatmul.mubr.f32.gmra.mxu0 %v4064
        %v4157 = vpop.f32.mrf.mxu0
        %v4158 = vadd.f32 0.0, %v4157
        %v4159 = vpop.f32.mrf.mxu0
        %4160 = vmatprep.mubr.f32.mxu0 0.0
        %4161 = vmatmul.mubr.f32.gmra.mxu0 %v4067
        %v4162 = vpop.f32.mrf.mxu0
        %v4163 = vadd.f32 0.0, %v4162
        %v4164 = vpop.f32.mrf.mxu0
        %4165 = vmatprep.mubr.f32.mxu0 0.0
        %4166 = vmatmul.mubr.f32.gmra.mxu0 %v4070
        %v4167 = vpop.f32.mrf.mxu0
        %v4168 = vadd.f32 0.0, %v4167
        %v4169 = vpop.f32.mrf.mxu0
        %4170 = vmatprep.mubr.f32.mxu0 0.0
        %4171 = vmatmul.mubr.f32.gmra.mxu0 %v4073
        %v4172 = vpop.f32.mrf.mxu0
        %v4173 = vadd.f32 0.0, %v4172
        %v4174 = vpop.f32.mrf.mxu0
        %4175 = vmatprep.mubr.f32.mxu0 0.0
        %4176 = vmatmul.mubr.f32.gmra.mxu0 %v4076
        %v4177 = vpop.f32.mrf.mxu0
        %v4178 = vadd.f32 0.0, %v4177
        %v4179 = vpop.f32.mrf.mxu0
        %4180 = vmatprep.mubr.f32.mxu0 0.0
        %4181 = vmatmul.mubr.f32.gmra.mxu0 %v4079
        %v4182 = vpop.f32.mrf.mxu0
        %v4183 = vadd.f32 0.0, %v4182
        %v4184 = vpop.f32.mrf.mxu0
        %4185 = vdwg.mxu0
        %v4187 = vsel %vm441, %v3862, 0
        %v4190 = vsel %vm441, %v3863, 0
        %v4193 = vsel %vm441, %v3864, 0
        %v4196 = vsel %vm441, %v3865, 0
        %v4199 = vsel %vm441, %v3866, 0
        %v4202 = vsel %vm441, %v3867, 0
        %v4205 = vsel %vm441, %v3868, 0
        %v4208 = vsel %vm441, %v3869, 0
        %4210 = vmatprep.subr.mxu0 0.0
        %4211 = vmatpush1.msra.mxu0 0.0
        %4212 = vmatprep.subr.mxu0 0.0
        %4213 = vmatpush1.msra.mxu0 0.0
        %4214 = vmatprep.subr.mxu0 0.0
        %4215 = vmatpush1.msra.mxu0 0.0
        %4216 = vmatprep.subr.mxu0 0.0
        %4217 = vmatpush1.msra.mxu0 0.0
        %4218 = vmatprep.subr.mxu0 0.0
        %4219 = vmatpush1.msra.mxu0 0.0
        %4220 = vmatprep.subr.mxu0 0.0
        %4221 = vmatpush1.msra.mxu0 0.0
        %4222 = vmatprep.subr.mxu0 0.0
        %4223 = vmatpush1.msra.mxu0 0.0
        %4224 = vmatprep.subr.mxu0 0.0
        %4225 = vmatpush1.msra.mxu0 0.0
        %4226 = vmatprep.subr.mxu0 0.0
        %4227 = vmatpush1.msra.mxu0 0.0
        %4228 = vmatprep.subr.mxu0 0.0
        %4229 = vmatpush1.msra.mxu0 0.0
        %4230 = vmatprep.subr.mxu0 0.0
        %4231 = vmatpush1.msra.mxu0 0.0
        %4232 = vmatprep.subr.mxu0 0.0
        %4233 = vmatpush1.msra.mxu0 0.0
        %4234 = vmatprep.subr.mxu0 0.0
        %4235 = vmatpush1.msra.mxu0 0.0
        %4236 = vmatprep.subr.mxu0 0.0
        %4237 = vmatpush1.msra.mxu0 0.0
        %4238 = vmatprep.subr.mxu0 0.0
        %4239 = vmatpush1.msra.mxu0 %v3871
        %4240 = vmatprep.subr.mxu0 0.0
        %4241 = vmatpush1.msra.mxu0 %v3870
        %4242 = vmatprep.subr.mxu0 0.0
        %4243 = vmatpush2.msra.mxu0 0.0
        %4244 = vmatprep.subr.mxu0 0.0
        %4245 = vmatpush2.msra.mxu0 0.0
        %4246 = vmatprep.subr.mxu0 0.0
        %4247 = vmatpush2.msra.mxu0 0.0
        %4248 = vmatprep.subr.mxu0 0.0
        %4249 = vmatpush2.msra.mxu0 0.0
        %4250 = vmatprep.subr.mxu0 0.0
        %4251 = vmatpush2.msra.mxu0 0.0
        %4252 = vmatprep.subr.mxu0 0.0
        %4253 = vmatpush2.msra.mxu0 0.0
        %4254 = vmatprep.subr.mxu0 0.0
        %4255 = vmatpush2.msra.mxu0 0.0
        %4256 = vmatprep.subr.mxu0 0.0
        %4257 = vmatpush2.msra.mxu0 0.0
        %4258 = vmatprep.subr.mxu0 0.0
        %4259 = vmatpush2.msra.mxu0 0.0
        %4260 = vmatprep.subr.mxu0 0.0
        %4261 = vmatpush2.msra.mxu0 0.0
        %4262 = vmatprep.subr.mxu0 0.0
        %4263 = vmatpush2.msra.mxu0 0.0
        %4264 = vmatprep.subr.mxu0 0.0
        %4265 = vmatpush2.msra.mxu0 0.0
        %4266 = vmatprep.subr.mxu0 0.0
        %4267 = vmatpush2.msra.mxu0 0.0
        %4268 = vmatprep.subr.mxu0 0.0
        %4269 = vmatpush2.msra.mxu0 0.0
        %4270 = vmatprep.subr.mxu0 0.0
        %4271 = vmatpush2.msra.mxu0 0.0
        %4272 = vmatprep.subr.mxu0 0.0
        %4273 = vmatpush2.msra.mxu0 0.0
        %4274 = vmatprep.mubr.f32.mxu0 0.0
        %4275 = vmatmul.mubr.f32.gmra.mxu0 %v4187
        %v4276 = vpop.f32.mrf.mxu0
        %v4277 = vadd.f32 %v4148, %v4276
        %v4278 = vpop.f32.mrf.mxu0
        %4279 = vmatprep.mubr.f32.mxu0 0.0
        %4280 = vmatmul.mubr.f32.gmra.mxu0 %v4190
        %v4281 = vpop.f32.mrf.mxu0
        %v4282 = vadd.f32 %v4153, %v4281
        %v4283 = vpop.f32.mrf.mxu0
        %4284 = vmatprep.mubr.f32.mxu0 0.0
        %4285 = vmatmul.mubr.f32.gmra.mxu0 %v4193
        %v4286 = vpop.f32.mrf.mxu0
        %v4287 = vadd.f32 %v4158, %v4286
        %v4288 = vpop.f32.mrf.mxu0
        %4289 = vmatprep.mubr.f32.mxu0 0.0
        %4290 = vmatmul.mubr.f32.gmra.mxu0 %v4196
        %v4291 = vpop.f32.mrf.mxu0
        %v4292 = vadd.f32 %v4163, %v4291
        %v4293 = vpop.f32.mrf.mxu0
        %4294 = vmatprep.mubr.f32.mxu0 0.0
        %4295 = vmatmul.mubr.f32.gmra.mxu0 %v4199
        %v4296 = vpop.f32.mrf.mxu0
        %v4297 = vadd.f32 %v4168, %v4296
        %v4298 = vpop.f32.mrf.mxu0
        %4299 = vmatprep.mubr.f32.mxu0 0.0
        %4300 = vmatmul.mubr.f32.gmra.mxu0 %v4202
        %v4301 = vpop.f32.mrf.mxu0
        %v4302 = vadd.f32 %v4173, %v4301
        %v4303 = vpop.f32.mrf.mxu0
        %4304 = vmatprep.mubr.f32.mxu0 0.0
        %4305 = vmatmul.mubr.f32.gmra.mxu0 %v4205
        %v4306 = vpop.f32.mrf.mxu0
        %v4307 = vadd.f32 %v4178, %v4306
        %v4308 = vpop.f32.mrf.mxu0
        %4309 = vmatprep.mubr.f32.mxu0 0.0
        %4310 = vmatmul.mubr.f32.gmra.mxu0 %v4208
        %v4311 = vpop.f32.mrf.mxu0
        %v4312 = vadd.f32 %v4183, %v4311
        %v4313 = vpop.f32.mrf.mxu0
        %4314 = vdwg.mxu0
        %v4315 = vld [vmem:[%s10] sm:$0x1]
        %v4317 = vlaneseq
        %v4318 = vshrl.u32 %v4317, 7
        %v4319 = vsub.s32 0, %v4318
        %v4320 = vrot.slane %v4315, %v4319
        %v4322 = vadd.f32 %v4277, %v4320
        %v4323 = vadd.f32 %v4282, %v4320
        %v4324 = vadd.f32 %v4287, %v4320
        %v4325 = vadd.f32 %v4292, %v4320
        %v4326 = vadd.f32 %v4297, %v4320
        %v4327 = vadd.f32 %v4302, %v4320
        %v4328 = vadd.f32 %v4307, %v4320
        %v4329 = vadd.f32 %v4312, %v4320
        %4330 = vst.msk [vmem:[%s379] sm:$0xff] %vm441, %v4322
        %4331 = vst.msk [vmem:[%s379 + $0x8] sm:$0xff] %vm441, %v4323
        %4332 = vst.msk [vmem:[%s379 + $0x10] sm:$0xff] %vm441, %v4324
        %4333 = vst.msk [vmem:[%s379 + $0x18] sm:$0xff] %vm441, %v4325
        %4334 = vst.msk [vmem:[%s379 + $0x20] sm:$0xff] %vm441, %v4326
        %4335 = vst.msk [vmem:[%s379 + $0x28] sm:$0xff] %vm441, %v4327
        %4336 = vst.msk [vmem:[%s379 + $0x30] sm:$0xff] %vm441, %v4328
        %4337 = vst.msk [vmem:[%s379 + $0x38] sm:$0xff] %vm441, %v4329
        %s4338 = sand.u32 %s269, 1
        %s4339 = scalar_lea.sflag [#allocation5], %s4338
        %s4340 = sand.u32 %s269, 1
        %s4341 = smul.addr %s4340, 64
        %s4342 = scalar_lea.vmem [#allocation4], %s4341
        // Predicated region
        $region65: #{block3_forward.1} parent=63 // pred_check
          %p4343 = pneg %p279
        $region66: #{block3_forward.1} parent=63 // pred_check_branch
          %4345 = sbr.rel (%p4343) target = $region68
        $region67: #{block3_forward.1} parent=63 // pred_region
          %s4347 = ssub.s32 1024, 1024
          %4348 = vsyncadd %s4339, %s4347
          %s4349 = smul.addr %s25, 8
          %s4350 = smul.addr %s4349, 128
          %s4351 = scalar_lea.hbm %s11, %s4350
          %s4352 = sshll.u32 %s4342, 4
          %s4353 = int_to_ptr.vmem [resolvable:$true] %s4352
          %4358 = dma.vmem_to_hbm [thread:$0]  %s4353, 1024, %s4351, %s4339, 128, 128, 8
        $region68: #{block3_forward.1} parent=63 // pred_fallthru
          _
      $region64: #{block3_forward.1} parent=5 // pred_fallthru
        _
      %p4359 = scmp.le.s32.totalorder 2, %s20
      // Predicated region
      $region69: #{block3_forward.1} parent=5 // pred_check
        %p4360 = pneg %p4359
      $region70: #{block3_forward.1} parent=5 // pred_check_branch
        %4362 = sbr.rel (%p4360) target = $region72
      $region71: #{block3_forward.1} parent=5 // pred_region
        %s4363 = ssub.s32 %s20, 2
        // Predicated region
        $region73: #{block3_forward.1} parent=71 // pred_check
          %p4364 = pneg %p285
        $region74: #{block3_forward.1} parent=71 // pred_check_branch
          %4366 = sbr.rel (%p4364) target = $region76
        $region75: #{block3_forward.1} parent=71 // pred_region
          %s4367 = sand.u32 %s270, 1
          %s4368 = scalar_lea.sflag [#allocation5], %s4367
          %s4369 = sand.u32 %s270, 1
          %s4370 = smul.addr %s4369, 64
          %s4371 = scalar_lea.vmem [#allocation4], %s4370
          %4372 = dma.done %s4368, 1024
        $region76: #{block3_forward.1} parent=71 // pred_fallthru
          _
      $region72: #{block3_forward.1} parent=5 // pred_fallthru
        _
    $region6: #{block3_forward.1} parent=1 // loop_footer
      %s24 = sadd.s32 1, %s20
    $region7: #{block3_forward.1} parent=1 // loop_footer_branch
      %19 = sbr.rel target = $region3
    $region8: #{block3_forward.1} parent=1 // loop_exit
      _
    %4373 = vsyncpa [#allocation5], 1
    %s4374 = scalar_lea.sflag [#allocation5], 1
    %4375 = vsyncpa %s4374, 1

</llo_original>
